<compile_context>
chip_gen: v5e
topology: v5e:2x2
jax: 0.10.0
libtpu: 0.0.40
codegen_flags: <defaults>
</compile_context>

<pallas_src>
import functools
import math

import jax
import jax.numpy as jnp
from jax import lax
from jax.experimental import pallas as pl
from jax.experimental.pallas import tpu as pltpu

# ----------------------------- tiling constants ------------------------------
LANE = 128                        # TPU lane width; all kernel last dims pad to it
ROW_ALIGN = 256                   # node-count padding quantum (keeps toy-N pad small)
TM_TARGET = 512                   # output-row tile target
TK_TARGET = 2048                  # adj reduction tile target (2 MB bf16 tiles)
XW_RESIDENT_BYTES = 8 * 1024 * 1024   # budget (incl. 2x buffering) for resident XW
VMEM_LIMIT = 48 * 1024 * 1024     # scoped VMEM cap: < v7x 64 MiB physical, roomy on v5e/v6e


def _round_up(a, b):
    return (a + b - 1) // b * b


def _pick_tiles(n_pad):
    """Pick (TM, TK_ADJ) such that TM | TK_ADJ and TK_ADJ | n_pad (no masking)."""
    tm = TM_TARGET if n_pad % TM_TARGET == 0 else ROW_ALIGN
    tk = tm
    for cand in (TK_TARGET, 1024, 512, 256):
        if cand % tm == 0 and n_pad % cand == 0:
            tk = cand
            break
    return tm, tk


# ----------------------------- stage 1:  X @ W --------------------------------
def _xw_kernel(x_ref, w_ref, o_ref):
    """One row tile of XW = feat[:, :fin_pad] @ W (weight fully VMEM-resident)."""
    o_ref[...] = jnp.dot(x_ref[...], w_ref[...],
                         preferred_element_type=jnp.float32).astype(o_ref.dtype)


def _xw_matmul(feat, w_pad, tm):
    """XW = feat[:, :fin_pad] @ w_pad   (bf16 in, f32 MXU accumulate, bf16 out)."""
    n_pad = feat.shape[0]
    fin_pad, fp = w_pad.shape
    grid = (n_pad // tm,)
    return pl.pallas_call(
        _xw_kernel,
        out_shape=jax.ShapeDtypeStruct((n_pad, fp), jnp.bfloat16),
        grid_spec=pltpu.PrefetchScalarGridSpec(
            num_scalar_prefetch=0,
            grid=grid,
            in_specs=[
                # first fin_pad feature columns of the persistent feat buffer
                pl.BlockSpec((tm, fin_pad), lambda i: (i, 0)),
                # whole weight, resident in VMEM (fetched once, index constant)
                pl.BlockSpec((fin_pad, fp), lambda i: (0, 0)),
            ],
            out_specs=pl.BlockSpec((tm, fp), lambda i: (i, 0)),
        ),
        compiler_params=pltpu.CompilerParams(
            dimension_semantics=("parallel",),
            vmem_limit_bytes=VMEM_LIMIT),
        cost_estimate=pl.CostEstimate(
            flops=2 * n_pad * fin_pad * fp,
            transcendentals=0,
            bytes_accessed=int(2 * (n_pad * fin_pad + fin_pad * fp + n_pad * fp))),
    )(feat, w_pad)


# --------------------- stage 2:  adj @ XW + b  (+ log_softmax) -----------------
def _agg_kernel(*refs, tk, xw_resident, n_valid, log_softmax, has_alias):
    """One K tile of out = adj @ XW; bias / masked log_softmax in the epilogue."""
    if has_alias:
        adj_ref, xw_ref, b_ref, _feat_hbm, o_ref, acc_ref = refs  # feat aliased, unused
    else:
        adj_ref, xw_ref, b_ref, o_ref, acc_ref = refs
    k = pl.program_id(1)

    @pl.when(k == 0)
    def _init():
        acc_ref[...] = jnp.zeros_like(acc_ref)

    if xw_resident:
        # XW lives fully in VMEM; slice the K window in-register (no HBM re-read).
        xw = xw_ref[pl.ds(pl.multiple_of(k * tk, tk), tk), :]
    else:
        xw = xw_ref[...]
    acc_ref[...] += jnp.dot(adj_ref[...], xw, preferred_element_type=jnp.float32)

    @pl.when(k == pl.num_programs(1) - 1)
    def _epilogue():
        out = acc_ref[...] + b_ref[...]
        if log_softmax:
            # Mask the lane padding beyond the true class count.
            col = lax.broadcasted_iota(jnp.int32, out.shape, 1)
            valid = col < n_valid
            masked = jnp.where(valid, out, -jnp.inf)
            m = jnp.max(masked, axis=-1, keepdims=True)
            s = masked - m
            lse = jnp.log(jnp.sum(jnp.exp(s), axis=-1, keepdims=True))
            out = jnp.where(valid, s - lse, 0.0)
        o_ref[...] = out.astype(o_ref.dtype)


def _adj_aggregate_hidden(adj_pad, xw, b_pad, feat, *, tm, tk, slot, col_blk):
    """out = adj @ XW + b, written directly into feat's column block `col_blk`
    (feat is aliased to the output -> no whole-buffer copy per layer)."""
    n_pad = adj_pad.shape[0]
    f_total = feat.shape[1]
    xw_resident = (2 * xw.size * 2) <= XW_RESIDENT_BYTES   # 2 buffers x bf16
    xw_spec = (pl.BlockSpec((n_pad, slot), lambda i, k: (0, 0)) if xw_resident
               else pl.BlockSpec((tk, slot), lambda i, k: (k, 0)))

    def out_index(i, k):
        return (i, col_blk)

    kernel = functools.partial(_agg_kernel, tk=tk, xw_resident=xw_resident,
                               n_valid=0, log_softmax=False, has_alias=True)
    return pl.pallas_call(
        kernel,
        out_shape=jax.ShapeDtypeStruct((n_pad, f_total), jnp.bfloat16),
        grid_spec=pltpu.PrefetchScalarGridSpec(
            num_scalar_prefetch=0,
            grid=(n_pad // tm, n_pad // tk),
            in_specs=[
                pl.BlockSpec((tm, tk), lambda i, k: (i, k)),       # adj tile
                xw_spec,                                           # XW (resident)
                pl.BlockSpec((1, slot), lambda i, k: (0, 0)),      # bias (f32)
                pl.BlockSpec(memory_space=pl.ANY),                 # feat (aliased)
            ],
            out_specs=pl.BlockSpec((tm, slot), out_index),
            scratch_shapes=[pltpu.VMEM((tm, slot), jnp.float32)],
        ),
        compiler_params=pltpu.CompilerParams(
            dimension_semantics=("parallel", "arbitrary"),
            vmem_limit_bytes=VMEM_LIMIT),
        input_output_aliases={3: 0},
        cost_estimate=pl.CostEstimate(
            flops=2 * n_pad * n_pad * slot,
            transcendentals=0,
            bytes_accessed=int(2 * n_pad * n_pad + 4 * n_pad * slot)),
    )(adj_pad, xw, b_pad, feat)


def _adj_aggregate_out(adj_pad, xw, b_pad, *, tm, tk, n_valid):
    """Final layer: adj @ XW + b with fused masked log_softmax, f32 output."""
    n_pad = adj_pad.shape[0]
    fp = xw.shape[1]
    xw_resident = (2 * xw.size * 2) <= XW_RESIDENT_BYTES
    xw_spec = (pl.BlockSpec((n_pad, fp), lambda i, k: (0, 0)) if xw_resident
               else pl.BlockSpec((tk, fp), lambda i, k: (k, 0)))
    kernel = functools.partial(_agg_kernel, tk=tk, xw_resident=xw_resident,
                               n_valid=n_valid, log_softmax=True,
                               has_alias=False)
    return pl.pallas_call(
        kernel,
        out_shape=jax.ShapeDtypeStruct((n_pad, fp), jnp.float32),
        grid_spec=pltpu.PrefetchScalarGridSpec(
            num_scalar_prefetch=0,
            grid=(n_pad // tm, n_pad // tk),
            in_specs=[
                pl.BlockSpec((tm, tk), lambda i, k: (i, k)),       # adj tile
                xw_spec,                                           # XW (resident)
                pl.BlockSpec((1, fp), lambda i, k: (0, 0)),        # bias (f32)
            ],
            out_specs=pl.BlockSpec((tm, fp), lambda i, k: (i, 0)),
            scratch_shapes=[pltpu.VMEM((tm, fp), jnp.float32)],
        ),
        compiler_params=pltpu.CompilerParams(
            dimension_semantics=("parallel", "arbitrary"),
            vmem_limit_bytes=VMEM_LIMIT),
        cost_estimate=pl.CostEstimate(
            flops=2 * n_pad * n_pad * fp,
            transcendentals=n_pad * fp,
            bytes_accessed=int(2 * n_pad * n_pad + 2 * n_pad * fp + 4 * n_pad * fp)),
    )(adj_pad, xw, b_pad)


# ------------------------------ param utilities -------------------------------
def init_linear_snowball_params(key, nfeat, nlayers, nhid, nclass):
    """Deterministic init matching snowball_layer.reset_parameters
    (uniform(-1/sqrt(out_features), 1/sqrt(out_features)) for W and b)."""
    params = {"hidden": []}
    for k in range(nlayers):
        fin = k * nhid + nfeat
        key, kw, kb = jax.random.split(key, 3)
        stdv = 1.0 / math.sqrt(nhid)
        w = jax.random.uniform(kw, (fin, nhid), jnp.float32, -stdv, stdv)
        b = jax.random.uniform(kb, (nhid,), jnp.float32, -stdv, stdv)
        params["hidden"].append((w, b))
    fin_out = nlayers * nhid + nfeat
    key, kw, kb = jax.random.split(key, 3)
    stdv = 1.0 / math.sqrt(nclass)
    w_out = jax.random.uniform(kw, (fin_out, nclass), jnp.float32, -stdv, stdv)
    b_out = jax.random.uniform(kb, (nclass,), jnp.float32, -stdv, stdv)
    params["out"] = (w_out, b_out)
    return params


def _repack_weight(w, nfeat, nhid, nfeat_pad, slot, fp):
    """Rearrange packed-concat weight rows [x | h_0 | h_1 | ...] into the
    lane-padded feature layout [x_pad | h_0_pad | ...]; zero-pad columns to fp."""
    fin, fout = w.shape
    nblocks = (fin - nfeat) // nhid
    wb = w.astype(jnp.bfloat16)
    wp = jnp.zeros((nfeat_pad + nblocks * slot, fp), jnp.bfloat16)
    wp = wp.at[:nfeat, :fout].set(wb[:nfeat])
    for i in range(nblocks):
        base = nfeat_pad + i * slot
        wp = wp.at[base:base + nhid, :fout].set(
            wb[nfeat + i * nhid:nfeat + (i + 1) * nhid])
    return wp


def _pad_bias(b, fp):
    return jnp.zeros((1, fp), jnp.float32).at[0, :b.shape[0]].set(
        b.astype(jnp.float32))


# ---------------------------------- forward -----------------------------------
def linear_snowball_forward(params, x, adj):
    """Reproduces linear_snowball.forward in eval mode (dropout = identity)."""
    N, nfeat = x.shape
    nlayers = len(params["hidden"])
    nhid = params["hidden"][0][0].shape[1]
    nclass = params["out"][0].shape[1]

    slot = _round_up(nhid, LANE)             # padded width of one hidden block
    nfeat_pad = _round_up(nfeat, slot)       # slot-aligned so column-block indices are exact
    f_total = nfeat_pad + nlayers * slot

    n_pad = _round_up(N, ROW_ALIGN)
    tm, tk = _pick_tiles(n_pad)

    # adj: cast to bf16 once (dominant array), zero-pad to the tiled node count.
    adj_pad = jnp.zeros((n_pad, n_pad), jnp.bfloat16).at[:N, :N].set(
        adj.astype(jnp.bfloat16))

    # Persistent lane-aligned feature buffer (replaces per-layer concatenate).
    feat = jnp.zeros((n_pad, f_total), jnp.bfloat16).at[:N, :nfeat].set(
        x.astype(jnp.bfloat16))

    for k, (w, b) in enumerate(params["hidden"]):
        wp = _repack_weight(w, nfeat, nhid, nfeat_pad, slot, slot)
        bp = _pad_bias(b, slot)
        xw = _xw_matmul(feat, wp, tm)                         # (n_pad, slot) bf16
        col_blk = (nfeat_pad + k * slot) // slot
        feat = _adj_aggregate_hidden(adj_pad, xw, bp, feat,   # h written in-place
                                     tm=tm, tk=tk, slot=slot, col_blk=col_blk)
        # TODO(synk): F.dropout(training=False) -> identity, no-op.

    w_out, b_out = params["out"]
    fp_out = _round_up(nclass, LANE)
    wp = _repack_weight(w_out, nfeat, nhid, nfeat_pad, slot, fp_out)
    bp = _pad_bias(b_out, fp_out)
    xw = _xw_matmul(feat, wp, tm)
    out = _adj_aggregate_out(adj_pad, xw, bp, tm=tm, tk=tk, n_valid=nclass)
    return out[:N, :nclass]


def _reference_forward(params, x, adj):
    """Pure-JAX f32 reference of the eval-mode forward pass."""
    blocks = []
    for (w, b) in params["hidden"]:
        inp = jnp.concatenate([x] + blocks, axis=1)
        blocks.append(adj @ (inp @ w) + b)
    w_out, b_out = params["out"]
    inp = jnp.concatenate([x] + blocks, axis=1)
    return jax.nn.log_softmax(adj @ (inp @ w_out) + b_out, axis=1)


# ------------------------------------ main -------------------------------------
if __name__ == "__main__":
    N_nodes, nfeat, nlayers, nhid, nclass = 8, 16, 2, 32, 4
    dropout = 0.5  # unused at inference

    key = jax.random.PRNGKey(0)
    key, kx, ka = jax.random.split(key, 3)

    x = jax.random.normal(kx, (N_nodes, nfeat), jnp.float32)

    # Symmetric row-normalized dense adjacency (self-loops included).
    a = (jax.random.uniform(ka, (N_nodes, N_nodes)) > 0.5).astype(jnp.float32)
    a = jnp.maximum(a, a.T) + jnp.eye(N_nodes, dtype=jnp.float32)
    deg = jnp.sum(a, axis=1, keepdims=True)
    adj = a / deg

    params = init_linear_snowball_params(key, nfeat, nlayers, nhid, nclass)

    fwd = jax.jit(linear_snowball_forward)
    out = jax.block_until_ready(fwd(params, x, adj))

    assert out.shape == (N_nodes, nclass)
    assert bool(jnp.all(jnp.isfinite(out)))
    # log_softmax rows should sum (in prob space) to ~1
    assert bool(jnp.allclose(jnp.sum(jnp.exp(out), axis=1), 1.0, atol=1e-3))
    # close to the pure-JAX f32 reference (bf16 inputs -> loose tolerance)
    ref = _reference_forward(params, x, adj)
    assert bool(jnp.allclose(out, ref, atol=1e-1)), float(jnp.max(jnp.abs(out - ref)))
    print("KERNEL_OK")
</pallas_src>

<mosaic_0001>
module attributes {stable_mosaic.version = 11 : i64} {
  func.func @_xw_kernel(%arg0: i32, %arg1: memref<256x128xbf16, #tpu.memory_space<vmem>>, %arg2: memref<128x128xbf16, #tpu.memory_space<vmem>>, %arg3: memref<256x128xbf16, #tpu.memory_space<vmem>>) attributes {dimension_semantics = [#tpu.dimension_semantics<parallel>], iteration_bounds = array<i64: 1>, scalar_prefetch = 0 : i64, scratch_operands = 0 : i64, tpu.core_type = #tpu.core_type<tc>, window_params = [{transform_indices = @transform_0, window_bounds = array<i64: 256, 128>}, {pipeline_mode = #tpu.pipeline_mode<synchronous>, transform_indices = @transform_1, window_bounds = array<i64: 128, 128>}, {transform_indices = @transform_2, window_bounds = array<i64: 256, 128>}]} {
    %c0 = arith.constant 0 : index
    %c0_0 = arith.constant 0 : index
    %0 = vector.load %arg1[%c0, %c0_0] : memref<256x128xbf16, #tpu.memory_space<vmem>>, vector<256x128xbf16>
    %c0_1 = arith.constant 0 : index
    %c0_2 = arith.constant 0 : index
    %1 = vector.load %arg2[%c0_1, %c0_2] : memref<128x128xbf16, #tpu.memory_space<vmem>>, vector<128x128xbf16>
    %cst = arith.constant dense<0.000000e+00> : vector<256x128xf32>
    %2 = tpu.matmul %0, %1, %cst {dimension_numbers = #tpu.dot_dimension_numbers<[1], [0], [0], [1], [0, 0, 1, 1], [], []>} : vector<256x128xbf16>, vector<128x128xbf16>, vector<256x128xf32> -> vector<256x128xf32>
    %3 = arith.truncf %2 : vector<256x128xf32> to vector<256x128xbf16>
    %c0_3 = arith.constant 0 : index
    %c0_4 = arith.constant 0 : index
    %4 = vector.load %arg3[%c0_3, %c0_4] : memref<256x128xbf16, #tpu.memory_space<vmem>>, vector<256x128xbf16>
    tpu.vector_store %arg3[%c0_3, %c0_4], %3 {strides = array<i32>} : memref<256x128xbf16, #tpu.memory_space<vmem>>, vector<256x128xbf16>,
    return
  }
  func.func @transform_0(%arg0: i32) -> (i32, i32) {
    %c0_i32 = arith.constant 0 : i32
    %c0_i32_0 = arith.constant 0 : i32
    return %arg0, %c0_i32 : i32, i32
  }
  func.func @transform_1(%arg0: i32) -> (i32, i32) {
    %c0_i32 = arith.constant 0 : i32
    %c0_i32_0 = arith.constant 0 : i32
    %c0_i32_1 = arith.constant 0 : i32
    return %c0_i32, %c0_i32_0 : i32, i32
  }
  func.func @transform_2(%arg0: i32) -> (i32, i32) {
    %c0_i32 = arith.constant 0 : i32
    %c0_i32_0 = arith.constant 0 : i32
    return %arg0, %c0_i32 : i32, i32
  }
}

module attributes {stable_mosaic.version = 11 : i64} {
  func.func @_xw_kernel(%arg0: i32, %arg1: memref<256x256xbf16, #tpu.memory_space<vmem>>, %arg2: memref<256x128xbf16, #tpu.memory_space<vmem>>, %arg3: memref<256x128xbf16, #tpu.memory_space<vmem>>) attributes {dimension_semantics = [#tpu.dimension_semantics<parallel>], iteration_bounds = array<i64: 1>, scalar_prefetch = 0 : i64, scratch_operands = 0 : i64, tpu.core_type = #tpu.core_type<tc>, window_params = [{transform_indices = @transform_0, window_bounds = array<i64: 256, 256>}, {pipeline_mode = #tpu.pipeline_mode<synchronous>, transform_indices = @transform_1, window_bounds = array<i64: 256, 128>}, {transform_indices = @transform_2, window_bounds = array<i64: 256, 128>}]} {
    %c0 = arith.constant 0 : index
    %c0_0 = arith.constant 0 : index
    %0 = vector.load %arg1[%c0, %c0_0] : memref<256x256xbf16, #tpu.memory_space<vmem>>, vector<256x256xbf16>
    %c0_1 = arith.constant 0 : index
    %c0_2 = arith.constant 0 : index
    %1 = vector.load %arg2[%c0_1, %c0_2] : memref<256x128xbf16, #tpu.memory_space<vmem>>, vector<256x128xbf16>
    %cst = arith.constant dense<0.000000e+00> : vector<256x128xf32>
    %2 = tpu.matmul %0, %1, %cst {dimension_numbers = #tpu.dot_dimension_numbers<[1], [0], [0], [1], [0, 0, 1, 1], [], []>} : vector<256x256xbf16>, vector<256x128xbf16>, vector<256x128xf32> -> vector<256x128xf32>
    %3 = arith.truncf %2 : vector<256x128xf32> to vector<256x128xbf16>
    %c0_3 = arith.constant 0 : index
    %c0_4 = arith.constant 0 : index
    %4 = vector.load %arg3[%c0_3, %c0_4] : memref<256x128xbf16, #tpu.memory_space<vmem>>, vector<256x128xbf16>
    tpu.vector_store %arg3[%c0_3, %c0_4], %3 {strides = array<i32>} : memref<256x128xbf16, #tpu.memory_space<vmem>>, vector<256x128xbf16>,
    return
  }
  func.func @transform_0(%arg0: i32) -> (i32, i32) {
    %c0_i32 = arith.constant 0 : i32
    %c0_i32_0 = arith.constant 0 : i32
    return %arg0, %c0_i32 : i32, i32
  }
  func.func @transform_1(%arg0: i32) -> (i32, i32) {
    %c0_i32 = arith.constant 0 : i32
    %c0_i32_0 = arith.constant 0 : i32
    %c0_i32_1 = arith.constant 0 : i32
    return %c0_i32, %c0_i32_0 : i32, i32
  }
  func.func @transform_2(%arg0: i32) -> (i32, i32) {
    %c0_i32 = arith.constant 0 : i32
    %c0_i32_0 = arith.constant 0 : i32
    return %arg0, %c0_i32 : i32, i32
  }
}

module attributes {stable_mosaic.version = 11 : i64} {
  func.func @_agg_kernel(%arg0: i32, %arg1: i32, %arg2: memref<256x256xbf16, #tpu.memory_space<vmem>>, %arg3: memref<256x128xbf16, #tpu.memory_space<vmem>>, %arg4: memref<1x128xf32, #tpu.memory_space<vmem>>, %arg5: memref<256x384xbf16, #tpu.memory_space<any>>, %arg6: memref<256x128xbf16, #tpu.memory_space<vmem>>, %arg7: memref<256x128xf32, #tpu.memory_space<vmem>>) attributes {dimension_semantics = [#tpu.dimension_semantics<parallel>, #tpu.dimension_semantics<arbitrary>], iteration_bounds = array<i64: 1, 1>, scalar_prefetch = 0 : i64, scratch_operands = 1 : i64, tpu.core_type = #tpu.core_type<tc>, window_params = [{transform_indices = @transform_0, window_bounds = array<i64: 256, 256>}, {pipeline_mode = #tpu.pipeline_mode<synchronous>, transform_indices = @transform_1, window_bounds = array<i64: 256, 128>}, {pipeline_mode = #tpu.pipeline_mode<synchronous>, transform_indices = @transform_2, window_bounds = array<i64: 1, 128>}, {}, {transform_indices = @transform_4, window_bounds = array<i64: 256, 128>}]} {
    %c0_i32 = arith.constant 0 : i32
    %0 = arith.cmpi eq, %arg1, %c0_i32 : i32
    %1 = arith.extui %0 : i1 to i32
    %c0_i32_0 = arith.constant 0 : i32
    %2 = arith.cmpi ne, %1, %c0_i32_0 : i32
    scf.if %2 {
      %cst_9 = arith.constant 0.000000e+00 : f32
      %15 = vector.broadcast %cst_9 : f32 to vector<256x128xf32>
      %c0_10 = arith.constant 0 : index
      %c0_11 = arith.constant 0 : index
      %16 = vector.load %arg7[%c0_10, %c0_11] : memref<256x128xf32, #tpu.memory_space<vmem>>, vector<256x128xf32>
      tpu.vector_store %arg7[%c0_10, %c0_11], %15 {strides = array<i32>} : memref<256x128xf32, #tpu.memory_space<vmem>>, vector<256x128xf32>,
    } else {
    }
    %c256_i32 = arith.constant 256 : i32
    %3 = arith.muli %arg1, %c256_i32 : i32
    %4 = tpu.assume_multiple %3, 256 : i32
    %5 = arith.index_cast %4 : i32 to index
    %c0 = arith.constant 0 : index
    %6 = vector.load %arg3[%5, %c0] : memref<256x128xbf16, #tpu.memory_space<vmem>>, vector<256x128xbf16>
    %c0_1 = arith.constant 0 : index
    %c0_2 = arith.constant 0 : index
    %7 = vector.load %arg7[%c0_1, %c0_2] : memref<256x128xf32, #tpu.memory_space<vmem>>, vector<256x128xf32>
    %c0_3 = arith.constant 0 : index
    %c0_4 = arith.constant 0 : index
    %8 = vector.load %arg2[%c0_3, %c0_4] : memref<256x256xbf16, #tpu.memory_space<vmem>>, vector<256x256xbf16>
    %cst = arith.constant dense<0.000000e+00> : vector<256x128xf32>
    %9 = tpu.matmul %8, %6, %cst {dimension_numbers = #tpu.dot_dimension_numbers<[1], [0], [0], [1], [0, 0, 1, 1], [], []>} : vector<256x256xbf16>, vector<256x128xbf16>, vector<256x128xf32> -> vector<256x128xf32>
    %10 = arith.addf %7, %9 : vector<256x128xf32>
    %c0_5 = arith.constant 0 : index
    %c0_6 = arith.constant 0 : index
    %11 = vector.load %arg7[%c0_5, %c0_6] : memref<256x128xf32, #tpu.memory_space<vmem>>, vector<256x128xf32>
    tpu.vector_store %arg7[%c0_5, %c0_6], %10 {strides = array<i32>} : memref<256x128xf32, #tpu.memory_space<vmem>>, vector<256x128xf32>,
    %c0_i32_7 = arith.constant 0 : i32
    %12 = arith.cmpi eq, %arg1, %c0_i32_7 : i32
    %13 = arith.extui %12 : i1 to i32
    %c0_i32_8 = arith.constant 0 : i32
    %14 = arith.cmpi ne, %13, %c0_i32_8 : i32
    scf.if %14 {
      %c0_9 = arith.constant 0 : index
      %c0_10 = arith.constant 0 : index
      %15 = vector.load %arg7[%c0_9, %c0_10] : memref<256x128xf32, #tpu.memory_space<vmem>>, vector<256x128xf32>
      %c0_11 = arith.constant 0 : index
      %c0_12 = arith.constant 0 : index
      %16 = vector.load %arg4[%c0_11, %c0_12] : memref<1x128xf32, #tpu.memory_space<vmem>>, vector<1x128xf32>
      %17 = vector.broadcast %16 : vector<1x128xf32> to vector<256x128xf32>
      %18 = arith.addf %15, %17 : vector<256x128xf32>
      %19 = arith.truncf %18 : vector<256x128xf32> to vector<256x128xbf16>
      %c0_13 = arith.constant 0 : index
      %c0_14 = arith.constant 0 : index
      %20 = vector.load %arg6[%c0_13, %c0_14] : memref<256x128xbf16, #tpu.memory_space<vmem>>, vector<256x128xbf16>
      tpu.vector_store %arg6[%c0_13, %c0_14], %19 {strides = array<i32>} : memref<256x128xbf16, #tpu.memory_space<vmem>>, vector<256x128xbf16>,
    } else {
    }
    return
  }
  func.func @transform_0(%arg0: i32, %arg1: i32) -> (i32, i32) {
    %c0_i32 = arith.constant 0 : i32
    return %arg0, %arg1 : i32, i32
  }
  func.func @transform_1(%arg0: i32, %arg1: i32) -> (i32, i32) {
    %c0_i32 = arith.constant 0 : i32
    %c0_i32_0 = arith.constant 0 : i32
    %c0_i32_1 = arith.constant 0 : i32
    return %c0_i32, %c0_i32_0 : i32, i32
  }
  func.func @transform_2(%arg0: i32, %arg1: i32) -> (i32, i32) {
    %c0_i32 = arith.constant 0 : i32
    %c0_i32_0 = arith.constant 0 : i32
    %c0_i32_1 = arith.constant 0 : i32
    return %c0_i32, %c0_i32_0 : i32, i32
  }
  func.func @transform_4(%arg0: i32, %arg1: i32) -> (i32, i32) {
    %c1_i32 = arith.constant 1 : i32
    %c0_i32 = arith.constant 0 : i32
    return %arg0, %c1_i32 : i32, i32
  }
}

module attributes {stable_mosaic.version = 11 : i64} {
  func.func @_agg_kernel(%arg0: i32, %arg1: i32, %arg2: memref<256x256xbf16, #tpu.memory_space<vmem>>, %arg3: memref<256x128xbf16, #tpu.memory_space<vmem>>, %arg4: memref<1x128xf32, #tpu.memory_space<vmem>>, %arg5: memref<256x384xbf16, #tpu.memory_space<any>>, %arg6: memref<256x128xbf16, #tpu.memory_space<vmem>>, %arg7: memref<256x128xf32, #tpu.memory_space<vmem>>) attributes {dimension_semantics = [#tpu.dimension_semantics<parallel>, #tpu.dimension_semantics<arbitrary>], iteration_bounds = array<i64: 1, 1>, scalar_prefetch = 0 : i64, scratch_operands = 1 : i64, tpu.core_type = #tpu.core_type<tc>, window_params = [{transform_indices = @transform_0, window_bounds = array<i64: 256, 256>}, {pipeline_mode = #tpu.pipeline_mode<synchronous>, transform_indices = @transform_1, window_bounds = array<i64: 256, 128>}, {pipeline_mode = #tpu.pipeline_mode<synchronous>, transform_indices = @transform_2, window_bounds = array<i64: 1, 128>}, {}, {transform_indices = @transform_4, window_bounds = array<i64: 256, 128>}]} {
    %c0_i32 = arith.constant 0 : i32
    %0 = arith.cmpi eq, %arg1, %c0_i32 : i32
    %1 = arith.extui %0 : i1 to i32
    %c0_i32_0 = arith.constant 0 : i32
    %2 = arith.cmpi ne, %1, %c0_i32_0 : i32
    scf.if %2 {
      %cst_9 = arith.constant 0.000000e+00 : f32
      %15 = vector.broadcast %cst_9 : f32 to vector<256x128xf32>
      %c0_10 = arith.constant 0 : index
      %c0_11 = arith.constant 0 : index
      %16 = vector.load %arg7[%c0_10, %c0_11] : memref<256x128xf32, #tpu.memory_space<vmem>>, vector<256x128xf32>
      tpu.vector_store %arg7[%c0_10, %c0_11], %15 {strides = array<i32>} : memref<256x128xf32, #tpu.memory_space<vmem>>, vector<256x128xf32>,
    } else {
    }
    %c256_i32 = arith.constant 256 : i32
    %3 = arith.muli %arg1, %c256_i32 : i32
    %4 = tpu.assume_multiple %3, 256 : i32
    %5 = arith.index_cast %4 : i32 to index
    %c0 = arith.constant 0 : index
    %6 = vector.load %arg3[%5, %c0] : memref<256x128xbf16, #tpu.memory_space<vmem>>, vector<256x128xbf16>
    %c0_1 = arith.constant 0 : index
    %c0_2 = arith.constant 0 : index
    %7 = vector.load %arg7[%c0_1, %c0_2] : memref<256x128xf32, #tpu.memory_space<vmem>>, vector<256x128xf32>
    %c0_3 = arith.constant 0 : index
    %c0_4 = arith.constant 0 : index
    %8 = vector.load %arg2[%c0_3, %c0_4] : memref<256x256xbf16, #tpu.memory_space<vmem>>, vector<256x256xbf16>
    %cst = arith.constant dense<0.000000e+00> : vector<256x128xf32>
    %9 = tpu.matmul %8, %6, %cst {dimension_numbers = #tpu.dot_dimension_numbers<[1], [0], [0], [1], [0, 0, 1, 1], [], []>} : vector<256x256xbf16>, vector<256x128xbf16>, vector<256x128xf32> -> vector<256x128xf32>
    %10 = arith.addf %7, %9 : vector<256x128xf32>
    %c0_5 = arith.constant 0 : index
    %c0_6 = arith.constant 0 : index
    %11 = vector.load %arg7[%c0_5, %c0_6] : memref<256x128xf32, #tpu.memory_space<vmem>>, vector<256x128xf32>
    tpu.vector_store %arg7[%c0_5, %c0_6], %10 {strides = array<i32>} : memref<256x128xf32, #tpu.memory_space<vmem>>, vector<256x128xf32>,
    %c0_i32_7 = arith.constant 0 : i32
    %12 = arith.cmpi eq, %arg1, %c0_i32_7 : i32
    %13 = arith.extui %12 : i1 to i32
    %c0_i32_8 = arith.constant 0 : i32
    %14 = arith.cmpi ne, %13, %c0_i32_8 : i32
    scf.if %14 {
      %c0_9 = arith.constant 0 : index
      %c0_10 = arith.constant 0 : index
      %15 = vector.load %arg7[%c0_9, %c0_10] : memref<256x128xf32, #tpu.memory_space<vmem>>, vector<256x128xf32>
      %c0_11 = arith.constant 0 : index
      %c0_12 = arith.constant 0 : index
      %16 = vector.load %arg4[%c0_11, %c0_12] : memref<1x128xf32, #tpu.memory_space<vmem>>, vector<1x128xf32>
      %17 = vector.broadcast %16 : vector<1x128xf32> to vector<256x128xf32>
      %18 = arith.addf %15, %17 : vector<256x128xf32>
      %19 = arith.truncf %18 : vector<256x128xf32> to vector<256x128xbf16>
      %c0_13 = arith.constant 0 : index
      %c0_14 = arith.constant 0 : index
      %20 = vector.load %arg6[%c0_13, %c0_14] : memref<256x128xbf16, #tpu.memory_space<vmem>>, vector<256x128xbf16>
      tpu.vector_store %arg6[%c0_13, %c0_14], %19 {strides = array<i32>} : memref<256x128xbf16, #tpu.memory_space<vmem>>, vector<256x128xbf16>,
    } else {
    }
    return
  }
  func.func @transform_0(%arg0: i32, %arg1: i32) -> (i32, i32) {
    %c0_i32 = arith.constant 0 : i32
    return %arg0, %arg1 : i32, i32
  }
  func.func @transform_1(%arg0: i32, %arg1: i32) -> (i32, i32) {
    %c0_i32 = arith.constant 0 : i32
    %c0_i32_0 = arith.constant 0 : i32
    %c0_i32_1 = arith.constant 0 : i32
    return %c0_i32, %c0_i32_0 : i32, i32
  }
  func.func @transform_2(%arg0: i32, %arg1: i32) -> (i32, i32) {
    %c0_i32 = arith.constant 0 : i32
    %c0_i32_0 = arith.constant 0 : i32
    %c0_i32_1 = arith.constant 0 : i32
    return %c0_i32, %c0_i32_0 : i32, i32
  }
  func.func @transform_4(%arg0: i32, %arg1: i32) -> (i32, i32) {
    %c2_i32 = arith.constant 2 : i32
    %c0_i32 = arith.constant 0 : i32
    return %arg0, %c2_i32 : i32, i32
  }
}

module attributes {stable_mosaic.version = 11 : i64} {
  func.func @_xw_kernel(%arg0: i32, %arg1: memref<256x384xbf16, #tpu.memory_space<vmem>>, %arg2: memref<384x128xbf16, #tpu.memory_space<vmem>>, %arg3: memref<256x128xbf16, #tpu.memory_space<vmem>>) attributes {dimension_semantics = [#tpu.dimension_semantics<parallel>], iteration_bounds = array<i64: 1>, scalar_prefetch = 0 : i64, scratch_operands = 0 : i64, tpu.core_type = #tpu.core_type<tc>, window_params = [{transform_indices = @transform_0, window_bounds = array<i64: 256, 384>}, {pipeline_mode = #tpu.pipeline_mode<synchronous>, transform_indices = @transform_1, window_bounds = array<i64: 384, 128>}, {transform_indices = @transform_2, window_bounds = array<i64: 256, 128>}]} {
    %c0 = arith.constant 0 : index
    %c0_0 = arith.constant 0 : index
    %0 = vector.load %arg1[%c0, %c0_0] : memref<256x384xbf16, #tpu.memory_space<vmem>>, vector<256x384xbf16>
    %c0_1 = arith.constant 0 : index
    %c0_2 = arith.constant 0 : index
    %1 = vector.load %arg2[%c0_1, %c0_2] : memref<384x128xbf16, #tpu.memory_space<vmem>>, vector<384x128xbf16>
    %cst = arith.constant dense<0.000000e+00> : vector<256x128xf32>
    %2 = tpu.matmul %0, %1, %cst {dimension_numbers = #tpu.dot_dimension_numbers<[1], [0], [0], [1], [0, 0, 1, 1], [], []>} : vector<256x384xbf16>, vector<384x128xbf16>, vector<256x128xf32> -> vector<256x128xf32>
    %3 = arith.truncf %2 : vector<256x128xf32> to vector<256x128xbf16>
    %c0_3 = arith.constant 0 : index
    %c0_4 = arith.constant 0 : index
    %4 = vector.load %arg3[%c0_3, %c0_4] : memref<256x128xbf16, #tpu.memory_space<vmem>>, vector<256x128xbf16>
    tpu.vector_store %arg3[%c0_3, %c0_4], %3 {strides = array<i32>} : memref<256x128xbf16, #tpu.memory_space<vmem>>, vector<256x128xbf16>,
    return
  }
  func.func @transform_0(%arg0: i32) -> (i32, i32) {
    %c0_i32 = arith.constant 0 : i32
    %c0_i32_0 = arith.constant 0 : i32
    return %arg0, %c0_i32 : i32, i32
  }
  func.func @transform_1(%arg0: i32) -> (i32, i32) {
    %c0_i32 = arith.constant 0 : i32
    %c0_i32_0 = arith.constant 0 : i32
    %c0_i32_1 = arith.constant 0 : i32
    return %c0_i32, %c0_i32_0 : i32, i32
  }
  func.func @transform_2(%arg0: i32) -> (i32, i32) {
    %c0_i32 = arith.constant 0 : i32
    %c0_i32_0 = arith.constant 0 : i32
    return %arg0, %c0_i32 : i32, i32
  }
}

module attributes {stable_mosaic.version = 11 : i64} {
  func.func @_agg_kernel(%arg0: i32, %arg1: i32, %arg2: memref<256x256xbf16, #tpu.memory_space<vmem>>, %arg3: memref<256x128xbf16, #tpu.memory_space<vmem>>, %arg4: memref<1x128xf32, #tpu.memory_space<vmem>>, %arg5: memref<256x128xf32, #tpu.memory_space<vmem>>, %arg6: memref<256x128xf32, #tpu.memory_space<vmem>>) attributes {dimension_semantics = [#tpu.dimension_semantics<parallel>, #tpu.dimension_semantics<arbitrary>], iteration_bounds = array<i64: 1, 1>, scalar_prefetch = 0 : i64, scratch_operands = 1 : i64, tpu.core_type = #tpu.core_type<tc>, window_params = [{transform_indices = @transform_0, window_bounds = array<i64: 256, 256>}, {pipeline_mode = #tpu.pipeline_mode<synchronous>, transform_indices = @transform_1, window_bounds = array<i64: 256, 128>}, {pipeline_mode = #tpu.pipeline_mode<synchronous>, transform_indices = @transform_2, window_bounds = array<i64: 1, 128>}, {transform_indices = @transform_3, window_bounds = array<i64: 256, 128>}]} {
    %c0_i32 = arith.constant 0 : i32
    %0 = arith.cmpi eq, %arg1, %c0_i32 : i32
    %1 = arith.extui %0 : i1 to i32
    %c0_i32_0 = arith.constant 0 : i32
    %2 = arith.cmpi ne, %1, %c0_i32_0 : i32
    scf.if %2 {
      %cst_9 = arith.constant 0.000000e+00 : f32
      %15 = vector.broadcast %cst_9 : f32 to vector<256x128xf32>
      %c0_10 = arith.constant 0 : index
      %c0_11 = arith.constant 0 : index
      %16 = vector.load %arg6[%c0_10, %c0_11] : memref<256x128xf32, #tpu.memory_space<vmem>>, vector<256x128xf32>
      tpu.vector_store %arg6[%c0_10, %c0_11], %15 {strides = array<i32>} : memref<256x128xf32, #tpu.memory_space<vmem>>, vector<256x128xf32>,
    } else {
    }
    %c256_i32 = arith.constant 256 : i32
    %3 = arith.muli %arg1, %c256_i32 : i32
    %4 = tpu.assume_multiple %3, 256 : i32
    %5 = arith.index_cast %4 : i32 to index
    %c0 = arith.constant 0 : index
    %6 = vector.load %arg3[%5, %c0] : memref<256x128xbf16, #tpu.memory_space<vmem>>, vector<256x128xbf16>
    %c0_1 = arith.constant 0 : index
    %c0_2 = arith.constant 0 : index
    %7 = vector.load %arg6[%c0_1, %c0_2] : memref<256x128xf32, #tpu.memory_space<vmem>>, vector<256x128xf32>
    %c0_3 = arith.constant 0 : index
    %c0_4 = arith.constant 0 : index
    %8 = vector.load %arg2[%c0_3, %c0_4] : memref<256x256xbf16, #tpu.memory_space<vmem>>, vector<256x256xbf16>
    %cst = arith.constant dense<0.000000e+00> : vector<256x128xf32>
    %9 = tpu.matmul %8, %6, %cst {dimension_numbers = #tpu.dot_dimension_numbers<[1], [0], [0], [1], [0, 0, 1, 1], [], []>} : vector<256x256xbf16>, vector<256x128xbf16>, vector<256x128xf32> -> vector<256x128xf32>
    %10 = arith.addf %7, %9 : vector<256x128xf32>
    %c0_5 = arith.constant 0 : index
    %c0_6 = arith.constant 0 : index
    %11 = vector.load %arg6[%c0_5, %c0_6] : memref<256x128xf32, #tpu.memory_space<vmem>>, vector<256x128xf32>
    tpu.vector_store %arg6[%c0_5, %c0_6], %10 {strides = array<i32>} : memref<256x128xf32, #tpu.memory_space<vmem>>, vector<256x128xf32>,
    %c0_i32_7 = arith.constant 0 : i32
    %12 = arith.cmpi eq, %arg1, %c0_i32_7 : i32
    %13 = arith.extui %12 : i1 to i32
    %c0_i32_8 = arith.constant 0 : i32
    %14 = arith.cmpi ne, %13, %c0_i32_8 : i32
    scf.if %14 {
      %c0_9 = arith.constant 0 : index
      %c0_10 = arith.constant 0 : index
      %15 = vector.load %arg6[%c0_9, %c0_10] : memref<256x128xf32, #tpu.memory_space<vmem>>, vector<256x128xf32>
      %c0_11 = arith.constant 0 : index
      %c0_12 = arith.constant 0 : index
      %16 = vector.load %arg4[%c0_11, %c0_12] : memref<1x128xf32, #tpu.memory_space<vmem>>, vector<1x128xf32>
      %17 = vector.broadcast %16 : vector<1x128xf32> to vector<256x128xf32>
      %18 = arith.addf %15, %17 : vector<256x128xf32>
      %19 = tpu.iota {dimensions = array<i32: 1>} : vector<256x128xi32>
      %c4_i32 = arith.constant 4 : i32
      %20 = vector.broadcast %c4_i32 : i32 to vector<256x128xi32>
      %21 = arith.cmpi slt, %19, %20 : vector<256x128xi32>
      %cst_13 = arith.constant 0xFF800000 : f32
      %22 = vector.broadcast %cst_13 : f32 to vector<256x128xf32>
      %23 = arith.select %21, %18, %22 : vector<256x128xi1>, vector<256x128xf32>
      %cst_14 = arith.constant dense<0xFF800000> : vector<256xf32>
      %24 = vector.multi_reduction <maximumf>, %23, %cst_14 [1] : vector<256x128xf32> to vector<256xf32>
      %25 = vector.shape_cast %24 : vector<256xf32> to vector<256x1xf32>
      %26 = vector.broadcast %25 : vector<256x1xf32> to vector<256x128xf32>
      %27 = arith.subf %23, %26 : vector<256x128xf32>
      %28 = math.exp %27 : vector<256x128xf32>
      %cst_15 = arith.constant dense<0.000000e+00> : vector<256xf32>
      %29 = vector.multi_reduction <add>, %28, %cst_15 [1] : vector<256x128xf32> to vector<256xf32>
      %30 = vector.shape_cast %29 : vector<256xf32> to vector<256x1xf32>
      %31 = math.log %30 : vector<256x1xf32>
      %32 = vector.broadcast %31 : vector<256x1xf32> to vector<256x128xf32>
      %33 = arith.subf %27, %32 : vector<256x128xf32>
      %cst_16 = arith.constant 0.000000e+00 : f32
      %34 = vector.broadcast %cst_16 : f32 to vector<256x128xf32>
      %35 = arith.select %21, %33, %34 : vector<256x128xi1>, vector<256x128xf32>
      %c0_17 = arith.constant 0 : index
      %c0_18 = arith.constant 0 : index
      %36 = vector.load %arg5[%c0_17, %c0_18] : memref<256x128xf32, #tpu.memory_space<vmem>>, vector<256x128xf32>
      tpu.vector_store %arg5[%c0_17, %c0_18], %35 {strides = array<i32>} : memref<256x128xf32, #tpu.memory_space<vmem>>, vector<256x128xf32>,
    } else {
    }
    return
  }
  func.func @transform_0(%arg0: i32, %arg1: i32) -> (i32, i32) {
    %c0_i32 = arith.constant 0 : i32
    return %arg0, %arg1 : i32, i32
  }
  func.func @transform_1(%arg0: i32, %arg1: i32) -> (i32, i32) {
    %c0_i32 = arith.constant 0 : i32
    %c0_i32_0 = arith.constant 0 : i32
    %c0_i32_1 = arith.constant 0 : i32
    return %c0_i32, %c0_i32_0 : i32, i32
  }
  func.func @transform_2(%arg0: i32, %arg1: i32) -> (i32, i32) {
    %c0_i32 = arith.constant 0 : i32
    %c0_i32_0 = arith.constant 0 : i32
    %c0_i32_1 = arith.constant 0 : i32
    return %c0_i32, %c0_i32_0 : i32, i32
  }
  func.func @transform_3(%arg0: i32, %arg1: i32) -> (i32, i32) {
    %c0_i32 = arith.constant 0 : i32
    %c0_i32_0 = arith.constant 0 : i32
    return %arg0, %c0_i32 : i32, i32
  }
}

</mosaic_0001>

<llo_original>
// kernel: linear_snowball_forward.8
$region0: #{linear_snowball_forward.8}
  #allocation0 [shape = 'u32[]', space=smem, size = 0x4, offset = 0x4, fixed_abs, tag = 'smem constant byte address 0x4 - core index']
  #allocation1 [shape = 'u32[72,128]{1,0:T(1,128)}', space=vmem, size = 0x9000, scoped, tag = 'internal scratch']
  %s0 = inlined_call_operand.vmem [shape: bf16[256,384], index: 0, kind: input, shape index: {}]
  %s1 = inlined_call_operand.vmem [shape: bf16[256,128], index: 1, kind: input, shape index: {}]
  %s2 = inlined_call_operand.vmem [shape: bf16[256,128], index: 2, kind: output, shape index: {}]
  %s3 = sld [smem:[#allocation0]]
  $region56: #{linear_snowball_forward.8} parent=0
    _
  %s5 = ssub.s32 1, %s3
  %s6 = scalar_select 0, %s5, %s3
  $region1: #{linear_snowball_forward.8} parent=0
    #allocation2 [shape = 'u8[131072]{0}', space=vmem, size = 0x20000, scoped, tag = 'input window, operand 0, single buffered']
    // Predicated region
    $region2: #{linear_snowball_forward.8} parent=1 // pred_check
      _
    $region3: #{linear_snowball_forward.8} parent=1 // pred_check_branch
      %8 = sbr.rel (0) target = $region5
    $region4: #{linear_snowball_forward.8} parent=1 // pred_region
      // Predicated region
      $region6: #{linear_snowball_forward.8} parent=4 // pred_check
        _
      $region7: #{linear_snowball_forward.8} parent=4 // pred_check_branch
        %10 = sbr.rel (0) target = $region9
      $region8: #{linear_snowball_forward.8} parent=4 // pred_region
        // Predicated region
        $region10: #{linear_snowball_forward.8} parent=8 // pred_check
          _
        $region11: #{linear_snowball_forward.8} parent=8 // pred_check_branch
          %12 = sbr.rel (0) target = $region13
        $region12: #{linear_snowball_forward.8} parent=8 // pred_region
          // Predicated region
          $region25: #{linear_snowball_forward.8} parent=12 // pred_check
            _
          $region26: #{linear_snowball_forward.8} parent=12 // pred_check_branch
            %90 = sbr.rel (0) target = $region28
          $region27: #{linear_snowball_forward.8} parent=12 // pred_region
            loop: start=0, step=1, limit=1
            $region29: #{linear_snowball_forward.8} parent=27 // loop_pre_header
              _
            $region30: #{linear_snowball_forward.8} parent=27 // loop_header
              %s92 = sphi 0, %s96
              %p93 = scmp.ge.s32.totalorder %s92, 1
              %s97 = sphi %s0, %s0
              %s98 = sphi [#allocation2], [#allocation2]
            $region31: #{linear_snowball_forward.8} parent=27 // loop_header_branch
              %95 = sbr.rel (%p93) target = $region35
            $region32: #{linear_snowball_forward.8} parent=27 // loop_body
              %v99 = vld [vmem:[%s97] sm:$0xff]
              %100 = vst [vmem:[%s98] sm:$0xff] %v99
              %v101 = vld [vmem:[%s97 + $0xc] sm:$0xff]
              %102 = vst [vmem:[%s98 + $0x8] sm:$0xff] %v101
              %v103 = vld [vmem:[%s97 + $0x18] sm:$0xff]
              %104 = vst [vmem:[%s98 + $0x10] sm:$0xff] %v103
              %v105 = vld [vmem:[%s97 + $0x24] sm:$0xff]
              %106 = vst [vmem:[%s98 + $0x18] sm:$0xff] %v105
              %v107 = vld [vmem:[%s97 + $0x30] sm:$0xff]
              %108 = vst [vmem:[%s98 + $0x20] sm:$0xff] %v107
              %v109 = vld [vmem:[%s97 + $0x3c] sm:$0xff]
              %110 = vst [vmem:[%s98 + $0x28] sm:$0xff] %v109
              %v111 = vld [vmem:[%s97 + $0x48] sm:$0xff]
              %112 = vst [vmem:[%s98 + $0x30] sm:$0xff] %v111
              %v113 = vld [vmem:[%s97 + $0x54] sm:$0xff]
              %114 = vst [vmem:[%s98 + $0x38] sm:$0xff] %v113
              %v115 = vld [vmem:[%s97 + $0x60] sm:$0xff]
              %116 = vst [vmem:[%s98 + $0x40] sm:$0xff] %v115
              %v117 = vld [vmem:[%s97 + $0x6c] sm:$0xff]
              %118 = vst [vmem:[%s98 + $0x48] sm:$0xff] %v117
              %v119 = vld [vmem:[%s97 + $0x78] sm:$0xff]
              %120 = vst [vmem:[%s98 + $0x50] sm:$0xff] %v119
              %v121 = vld [vmem:[%s97 + $0x84] sm:$0xff]
              %122 = vst [vmem:[%s98 + $0x58] sm:$0xff] %v121
              %v123 = vld [vmem:[%s97 + $0x90] sm:$0xff]
              %124 = vst [vmem:[%s98 + $0x60] sm:$0xff] %v123
              %v125 = vld [vmem:[%s97 + $0x9c] sm:$0xff]
              %126 = vst [vmem:[%s98 + $0x68] sm:$0xff] %v125
              %v127 = vld [vmem:[%s97 + $0xa8] sm:$0xff]
              %128 = vst [vmem:[%s98 + $0x70] sm:$0xff] %v127
              %v129 = vld [vmem:[%s97 + $0xb4] sm:$0xff]
              %130 = vst [vmem:[%s98 + $0x78] sm:$0xff] %v129
              %v131 = vld [vmem:[%s97 + $0xc0] sm:$0xff]
              %132 = vst [vmem:[%s98 + $0x80] sm:$0xff] %v131
              %v133 = vld [vmem:[%s97 + $0xcc] sm:$0xff]
              %134 = vst [vmem:[%s98 + $0x88] sm:$0xff] %v133
              %v135 = vld [vmem:[%s97 + $0xd8] sm:$0xff]
              %136 = vst [vmem:[%s98 + $0x90] sm:$0xff] %v135
              %v137 = vld [vmem:[%s97 + $0xe4] sm:$0xff]
              %138 = vst [vmem:[%s98 + $0x98] sm:$0xff] %v137
              %v139 = vld [vmem:[%s97 + $0xf0] sm:$0xff]
              %140 = vst [vmem:[%s98 + $0xa0] sm:$0xff] %v139
              %v141 = vld [vmem:[%s97 + $0xfc] sm:$0xff]
              %142 = vst [vmem:[%s98 + $0xa8] sm:$0xff] %v141
              %v143 = vld [vmem:[%s97 + $0x108] sm:$0xff]
              %144 = vst [vmem:[%s98 + $0xb0] sm:$0xff] %v143
              %v145 = vld [vmem:[%s97 + $0x114] sm:$0xff]
              %146 = vst [vmem:[%s98 + $0xb8] sm:$0xff] %v145
              %v147 = vld [vmem:[%s97 + $0x120] sm:$0xff]
              %148 = vst [vmem:[%s98 + $0xc0] sm:$0xff] %v147
              %v149 = vld [vmem:[%s97 + $0x12c] sm:$0xff]
              %150 = vst [vmem:[%s98 + $0xc8] sm:$0xff] %v149
              %v151 = vld [vmem:[%s97 + $0x138] sm:$0xff]
              %152 = vst [vmem:[%s98 + $0xd0] sm:$0xff] %v151
              %v153 = vld [vmem:[%s97 + $0x144] sm:$0xff]
              %154 = vst [vmem:[%s98 + $0xd8] sm:$0xff] %v153
              %v155 = vld [vmem:[%s97 + $0x150] sm:$0xff]
              %156 = vst [vmem:[%s98 + $0xe0] sm:$0xff] %v155
              %v157 = vld [vmem:[%s97 + $0x15c] sm:$0xff]
              %158 = vst [vmem:[%s98 + $0xe8] sm:$0xff] %v157
              %v159 = vld [vmem:[%s97 + $0x168] sm:$0xff]
              %160 = vst [vmem:[%s98 + $0xf0] sm:$0xff] %v159
              %v161 = vld [vmem:[%s97 + $0x174] sm:$0xff]
              %162 = vst [vmem:[%s98 + $0xf8] sm:$0xff] %v161
            $region33: #{linear_snowball_forward.8} parent=27 // loop_footer
              %s96 = sadd.s32 1, %s92
            $region34: #{linear_snowball_forward.8} parent=27 // loop_footer_branch
              %91 = sbr.rel target = $region30
            $region35: #{linear_snowball_forward.8} parent=27 // loop_exit
              _
          $region28: #{linear_snowball_forward.8} parent=12 // pred_fallthru
            _
          // Predicated region
          $region36: #{linear_snowball_forward.8} parent=12 // pred_check
            _
          $region37: #{linear_snowball_forward.8} parent=12 // pred_check_branch
            %164 = sbr.rel target = $region39
          $region38: #{linear_snowball_forward.8} parent=12 // pred_region
            _
          $region39: #{linear_snowball_forward.8} parent=12 // pred_fallthru
            _
        $region13: #{linear_snowball_forward.8} parent=8 // pred_fallthru
          _
        // Predicated region
        $region14: #{linear_snowball_forward.8} parent=8 // pred_check
          _
        $region15: #{linear_snowball_forward.8} parent=8 // pred_check_branch
          %14 = sbr.rel target = $region17
        $region16: #{linear_snowball_forward.8} parent=8 // pred_region
          %s16 = ssub.s32 256, 1
          loop: start=0, step=1, limit=1
          $region18: #{linear_snowball_forward.8} parent=16 // loop_pre_header
            _
          $region19: #{linear_snowball_forward.8} parent=16 // loop_header
            %s18 = sphi 0, %s22
            %p19 = scmp.ge.s32.totalorder %s18, 1
            %s23 = sphi %s0, %s0
            %s24 = sphi [#allocation2], [#allocation2]
          $region20: #{linear_snowball_forward.8} parent=16 // loop_header_branch
            %21 = sbr.rel (%p19) target = $region24
          $region21: #{linear_snowball_forward.8} parent=16 // loop_body
            %v25 = vld [vmem:[%s23] sm:%s16]
            %26 = vst [vmem:[%s24] sm:%s16] %v25
            %v27 = vld [vmem:[%s23 + $0xc] sm:%s16]
            %28 = vst [vmem:[%s24 + $0x8] sm:%s16] %v27
            %v29 = vld [vmem:[%s23 + $0x18] sm:%s16]
            %30 = vst [vmem:[%s24 + $0x10] sm:%s16] %v29
            %v31 = vld [vmem:[%s23 + $0x24] sm:%s16]
            %32 = vst [vmem:[%s24 + $0x18] sm:%s16] %v31
            %v33 = vld [vmem:[%s23 + $0x30] sm:%s16]
            %34 = vst [vmem:[%s24 + $0x20] sm:%s16] %v33
            %v35 = vld [vmem:[%s23 + $0x3c] sm:%s16]
            %36 = vst [vmem:[%s24 + $0x28] sm:%s16] %v35
            %v37 = vld [vmem:[%s23 + $0x48] sm:%s16]
            %38 = vst [vmem:[%s24 + $0x30] sm:%s16] %v37
            %v39 = vld [vmem:[%s23 + $0x54] sm:%s16]
            %40 = vst [vmem:[%s24 + $0x38] sm:%s16] %v39
            %v41 = vld [vmem:[%s23 + $0x60] sm:%s16]
            %42 = vst [vmem:[%s24 + $0x40] sm:%s16] %v41
            %v43 = vld [vmem:[%s23 + $0x6c] sm:%s16]
            %44 = vst [vmem:[%s24 + $0x48] sm:%s16] %v43
            %v45 = vld [vmem:[%s23 + $0x78] sm:%s16]
            %46 = vst [vmem:[%s24 + $0x50] sm:%s16] %v45
            %v47 = vld [vmem:[%s23 + $0x84] sm:%s16]
            %48 = vst [vmem:[%s24 + $0x58] sm:%s16] %v47
            %v49 = vld [vmem:[%s23 + $0x90] sm:%s16]
            %50 = vst [vmem:[%s24 + $0x60] sm:%s16] %v49
            %v51 = vld [vmem:[%s23 + $0x9c] sm:%s16]
            %52 = vst [vmem:[%s24 + $0x68] sm:%s16] %v51
            %v53 = vld [vmem:[%s23 + $0xa8] sm:%s16]
            %54 = vst [vmem:[%s24 + $0x70] sm:%s16] %v53
            %v55 = vld [vmem:[%s23 + $0xb4] sm:%s16]
            %56 = vst [vmem:[%s24 + $0x78] sm:%s16] %v55
            %v57 = vld [vmem:[%s23 + $0xc0] sm:%s16]
            %58 = vst [vmem:[%s24 + $0x80] sm:%s16] %v57
            %v59 = vld [vmem:[%s23 + $0xcc] sm:%s16]
            %60 = vst [vmem:[%s24 + $0x88] sm:%s16] %v59
            %v61 = vld [vmem:[%s23 + $0xd8] sm:%s16]
            %62 = vst [vmem:[%s24 + $0x90] sm:%s16] %v61
            %v63 = vld [vmem:[%s23 + $0xe4] sm:%s16]
            %64 = vst [vmem:[%s24 + $0x98] sm:%s16] %v63
            %v65 = vld [vmem:[%s23 + $0xf0] sm:%s16]
            %66 = vst [vmem:[%s24 + $0xa0] sm:%s16] %v65
            %v67 = vld [vmem:[%s23 + $0xfc] sm:%s16]
            %68 = vst [vmem:[%s24 + $0xa8] sm:%s16] %v67
            %v69 = vld [vmem:[%s23 + $0x108] sm:%s16]
            %70 = vst [vmem:[%s24 + $0xb0] sm:%s16] %v69
            %v71 = vld [vmem:[%s23 + $0x114] sm:%s16]
            %72 = vst [vmem:[%s24 + $0xb8] sm:%s16] %v71
            %v73 = vld [vmem:[%s23 + $0x120] sm:%s16]
            %74 = vst [vmem:[%s24 + $0xc0] sm:%s16] %v73
            %v75 = vld [vmem:[%s23 + $0x12c] sm:%s16]
            %76 = vst [vmem:[%s24 + $0xc8] sm:%s16] %v75
            %v77 = vld [vmem:[%s23 + $0x138] sm:%s16]
            %78 = vst [vmem:[%s24 + $0xd0] sm:%s16] %v77
            %v79 = vld [vmem:[%s23 + $0x144] sm:%s16]
            %80 = vst [vmem:[%s24 + $0xd8] sm:%s16] %v79
            %v81 = vld [vmem:[%s23 + $0x150] sm:%s16]
            %82 = vst [vmem:[%s24 + $0xe0] sm:%s16] %v81
            %v83 = vld [vmem:[%s23 + $0x15c] sm:%s16]
            %84 = vst [vmem:[%s24 + $0xe8] sm:%s16] %v83
            %v85 = vld [vmem:[%s23 + $0x168] sm:%s16]
            %86 = vst [vmem:[%s24 + $0xf0] sm:%s16] %v85
            %v87 = vld [vmem:[%s23 + $0x174] sm:%s16]
            %88 = vst [vmem:[%s24 + $0xf8] sm:%s16] %v87
          $region22: #{linear_snowball_forward.8} parent=16 // loop_footer
            %s22 = sadd.s32 1, %s18
          $region23: #{linear_snowball_forward.8} parent=16 // loop_footer_branch
            %17 = sbr.rel target = $region19
          $region24: #{linear_snowball_forward.8} parent=16 // loop_exit
            _
        $region17: #{linear_snowball_forward.8} parent=8 // pred_fallthru
          _
      $region9: #{linear_snowball_forward.8} parent=4 // pred_fallthru
        _
      %165 = vnop
    $region5: #{linear_snowball_forward.8} parent=1 // pred_fallthru
      _
    // Predicated region
    $region40: #{linear_snowball_forward.8} parent=1 // pred_check
      _
    $region41: #{linear_snowball_forward.8} parent=1 // pred_check_branch
      %167 = sbr.rel (0) target = $region43
    $region42: #{linear_snowball_forward.8} parent=1 // pred_region
      _
    $region43: #{linear_snowball_forward.8} parent=1 // pred_fallthru
      _
    // Predicated region
    $region44: #{linear_snowball_forward.8} parent=1 // pred_check
      _
    $region45: #{linear_snowball_forward.8} parent=1 // pred_check_branch
      %169 = sbr.rel (0) target = $region47
    $region46: #{linear_snowball_forward.8} parent=1 // pred_region
      _
    $region47: #{linear_snowball_forward.8} parent=1 // pred_fallthru
      _
    %v170 = vld [vmem:[#allocation2] sm:$0xff]
    %v171 = vld [vmem:[#allocation2 + $0x8] sm:$0xff]
    %v172 = vld [vmem:[#allocation2 + $0x10] sm:$0xff]
    %v173 = vld [vmem:[#allocation2 + $0x18] sm:$0xff]
    %v174 = vld [vmem:[#allocation2 + $0x20] sm:$0xff]
    %v175 = vld [vmem:[#allocation2 + $0x28] sm:$0xff]
    %v176 = vld [vmem:[#allocation2 + $0x30] sm:$0xff]
    %v177 = vld [vmem:[#allocation2 + $0x38] sm:$0xff]
    %v178 = vld [vmem:[#allocation2 + $0x40] sm:$0xff]
    %v179 = vld [vmem:[#allocation2 + $0x48] sm:$0xff]
    %v180 = vld [vmem:[#allocation2 + $0x50] sm:$0xff]
    %v181 = vld [vmem:[#allocation2 + $0x58] sm:$0xff]
    %v182 = vld [vmem:[#allocation2 + $0x60] sm:$0xff]
    %v183 = vld [vmem:[#allocation2 + $0x68] sm:$0xff]
    %v184 = vld [vmem:[#allocation2 + $0x70] sm:$0xff]
    %v185 = vld [vmem:[#allocation2 + $0x78] sm:$0xff]
    %v186 = vld [vmem:[#allocation2 + $0x80] sm:$0xff]
    %v187 = vld [vmem:[#allocation2 + $0x88] sm:$0xff]
    %v188 = vld [vmem:[#allocation2 + $0x90] sm:$0xff]
    %v189 = vld [vmem:[#allocation2 + $0x98] sm:$0xff]
    %v190 = vld [vmem:[#allocation2 + $0xa0] sm:$0xff]
    %v191 = vld [vmem:[#allocation2 + $0xa8] sm:$0xff]
    %v192 = vld [vmem:[#allocation2 + $0xb0] sm:$0xff]
    %v193 = vld [vmem:[#allocation2 + $0xb8] sm:$0xff]
    %v194 = vld [vmem:[#allocation2 + $0xc0] sm:$0xff]
    %v195 = vld [vmem:[#allocation2 + $0xc8] sm:$0xff]
    %v196 = vld [vmem:[#allocation2 + $0xd0] sm:$0xff]
    %v197 = vld [vmem:[#allocation2 + $0xd8] sm:$0xff]
    %v198 = vld [vmem:[#allocation2 + $0xe0] sm:$0xff]
    %v199 = vld [vmem:[#allocation2 + $0xe8] sm:$0xff]
    %v200 = vld [vmem:[#allocation2 + $0xf0] sm:$0xff]
    %v201 = vld [vmem:[#allocation2 + $0xf8] sm:$0xff]
    %v202 = vld [vmem:[%s1] sm:$0xf]
    %v203 = vld [vmem:[%s1 + $0x4] sm:$0xf]
    %v204 = vld [vmem:[%s1 + $0x8] sm:$0xf]
    %v205 = vld [vmem:[%s1 + $0xc] sm:$0xf]
    %v206 = vld [vmem:[%s1 + $0x10] sm:$0xf]
    %v207 = vld [vmem:[%s1 + $0x14] sm:$0xf]
    %v208 = vld [vmem:[%s1 + $0x18] sm:$0xf]
    %v209 = vld [vmem:[%s1 + $0x1c] sm:$0xf]
    %v210 = vld [vmem:[%s1 + $0x20] sm:$0xf]
    %v211 = vld [vmem:[%s1 + $0x24] sm:$0xf]
    %v212 = vld [vmem:[%s1 + $0x28] sm:$0xf]
    %v213 = vld [vmem:[%s1 + $0x2c] sm:$0xf]
    %v214 = vld [vmem:[%s1 + $0x30] sm:$0xf]
    %v215 = vld [vmem:[%s1 + $0x34] sm:$0xf]
    %v216 = vld [vmem:[%s1 + $0x38] sm:$0xf]
    %v217 = vld [vmem:[%s1 + $0x3c] sm:$0xf]
    %v218 = vld [vmem:[%s1 + $0x40] sm:$0xf]
    %v219 = vld [vmem:[%s1 + $0x44] sm:$0xf]
    %v220 = vld [vmem:[%s1 + $0x48] sm:$0xf]
    %v221 = vld [vmem:[%s1 + $0x4c] sm:$0xf]
    %v222 = vld [vmem:[%s1 + $0x50] sm:$0xf]
    %v223 = vld [vmem:[%s1 + $0x54] sm:$0xf]
    %v224 = vld [vmem:[%s1 + $0x58] sm:$0xf]
    %v225 = vld [vmem:[%s1 + $0x5c] sm:$0xf]
    %v226 = vld [vmem:[%s1 + $0x60] sm:$0xf]
    %v227 = vld [vmem:[%s1 + $0x64] sm:$0xf]
    %v228 = vld [vmem:[%s1 + $0x68] sm:$0xf]
    %v229 = vld [vmem:[%s1 + $0x6c] sm:$0xf]
    %v230 = vld [vmem:[%s1 + $0x70] sm:$0xf]
    %v231 = vld [vmem:[%s1 + $0x74] sm:$0xf]
    %v232 = vld [vmem:[%s1 + $0x78] sm:$0xf]
    %v233 = vld [vmem:[%s1 + $0x7c] sm:$0xf]
    %v266 = vunpack.c.l.b16 %v170
    %v267 = vunpack.c.h.b16 %v170
    %v268 = vunpack.c.l.b16 %v171
    %v269 = vunpack.c.h.b16 %v171
    %v270 = vunpack.c.l.b16 %v172
    %v271 = vunpack.c.h.b16 %v172
    %v272 = vunpack.c.l.b16 %v173
    %v273 = vunpack.c.h.b16 %v173
    %v274 = vunpack.c.l.b16 %v174
    %v275 = vunpack.c.h.b16 %v174
    %v276 = vunpack.c.l.b16 %v175
    %v277 = vunpack.c.h.b16 %v175
    %v278 = vunpack.c.l.b16 %v176
    %v279 = vunpack.c.h.b16 %v176
    %v280 = vunpack.c.l.b16 %v177
    %v281 = vunpack.c.h.b16 %v177
    %v282 = vunpack.c.l.b16 %v178
    %v283 = vunpack.c.h.b16 %v178
    %v284 = vunpack.c.l.b16 %v179
    %v285 = vunpack.c.h.b16 %v179
    %v286 = vunpack.c.l.b16 %v180
    %v287 = vunpack.c.h.b16 %v180
    %v288 = vunpack.c.l.b16 %v181
    %v289 = vunpack.c.h.b16 %v181
    %v290 = vunpack.c.l.b16 %v182
    %v291 = vunpack.c.h.b16 %v182
    %v292 = vunpack.c.l.b16 %v183
    %v293 = vunpack.c.h.b16 %v183
    %v294 = vunpack.c.l.b16 %v184
    %v295 = vunpack.c.h.b16 %v184
    %v296 = vunpack.c.l.b16 %v185
    %v297 = vunpack.c.h.b16 %v185
    %v298 = vunpack.c.l.b16 %v186
    %v299 = vunpack.c.h.b16 %v186
    %v300 = vunpack.c.l.b16 %v187
    %v301 = vunpack.c.h.b16 %v187
    %v302 = vunpack.c.l.b16 %v188
    %v303 = vunpack.c.h.b16 %v188
    %v304 = vunpack.c.l.b16 %v189
    %v305 = vunpack.c.h.b16 %v189
    %v306 = vunpack.c.l.b16 %v190
    %v307 = vunpack.c.h.b16 %v190
    %v308 = vunpack.c.l.b16 %v191
    %v309 = vunpack.c.h.b16 %v191
    %v310 = vunpack.c.l.b16 %v192
    %v311 = vunpack.c.h.b16 %v192
    %v312 = vunpack.c.l.b16 %v193
    %v313 = vunpack.c.h.b16 %v193
    %v314 = vunpack.c.l.b16 %v194
    %v315 = vunpack.c.h.b16 %v194
    %v316 = vunpack.c.l.b16 %v195
    %v317 = vunpack.c.h.b16 %v195
    %v318 = vunpack.c.l.b16 %v196
    %v319 = vunpack.c.h.b16 %v196
    %v320 = vunpack.c.l.b16 %v197
    %v321 = vunpack.c.h.b16 %v197
    %v322 = vunpack.c.l.b16 %v198
    %v323 = vunpack.c.h.b16 %v198
    %v324 = vunpack.c.l.b16 %v199
    %v325 = vunpack.c.h.b16 %v199
    %v326 = vunpack.c.l.b16 %v200
    %v327 = vunpack.c.h.b16 %v200
    %v328 = vunpack.c.l.b16 %v201
    %v329 = vunpack.c.h.b16 %v201
    %v330 = vpack.c.b16 %v268, %v266
    %v331 = vpack.c.b16 %v269, %v267
    %v332 = vpack.c.b16 %v272, %v270
    %v333 = vpack.c.b16 %v273, %v271
    %v334 = vpack.c.b16 %v276, %v274
    %v335 = vpack.c.b16 %v277, %v275
    %v336 = vpack.c.b16 %v280, %v278
    %v337 = vpack.c.b16 %v281, %v279
    %v338 = vpack.c.b16 %v284, %v282
    %v339 = vpack.c.b16 %v285, %v283
    %v340 = vpack.c.b16 %v288, %v286
    %v341 = vpack.c.b16 %v289, %v287
    %v342 = vpack.c.b16 %v292, %v290
    %v343 = vpack.c.b16 %v293, %v291
    %v344 = vpack.c.b16 %v296, %v294
    %v345 = vpack.c.b16 %v297, %v295
    %v346 = vpack.c.b16 %v300, %v298
    %v347 = vpack.c.b16 %v301, %v299
    %v348 = vpack.c.b16 %v304, %v302
    %v349 = vpack.c.b16 %v305, %v303
    %v350 = vpack.c.b16 %v308, %v306
    %v351 = vpack.c.b16 %v309, %v307
    %v352 = vpack.c.b16 %v312, %v310
    %v353 = vpack.c.b16 %v313, %v311
    %v354 = vpack.c.b16 %v316, %v314
    %v355 = vpack.c.b16 %v317, %v315
    %v356 = vpack.c.b16 %v320, %v318
    %v357 = vpack.c.b16 %v321, %v319
    %v358 = vpack.c.b16 %v324, %v322
    %v359 = vpack.c.b16 %v325, %v323
    %v360 = vpack.c.b16 %v328, %v326
    %v361 = vpack.c.b16 %v329, %v327
    %v426 = vunpack.c.l.b16 %v202
    %v427 = vunpack.c.l.b16 %v203
    %v428 = vunpack.c.l.b16 %v204
    %v429 = vunpack.c.l.b16 %v205
    %v430 = vunpack.c.l.b16 %v206
    %v431 = vunpack.c.l.b16 %v207
    %v432 = vunpack.c.l.b16 %v208
    %v433 = vunpack.c.l.b16 %v209
    %v434 = vunpack.c.l.b16 %v210
    %v435 = vunpack.c.l.b16 %v211
    %v436 = vunpack.c.l.b16 %v212
    %v437 = vunpack.c.l.b16 %v213
    %v438 = vunpack.c.l.b16 %v214
    %v439 = vunpack.c.l.b16 %v215
    %v440 = vunpack.c.l.b16 %v216
    %v441 = vunpack.c.l.b16 %v217
    %v442 = vunpack.c.l.b16 %v218
    %v443 = vunpack.c.l.b16 %v219
    %v444 = vunpack.c.l.b16 %v220
    %v445 = vunpack.c.l.b16 %v221
    %v446 = vunpack.c.l.b16 %v222
    %v447 = vunpack.c.l.b16 %v223
    %v448 = vunpack.c.l.b16 %v224
    %v449 = vunpack.c.l.b16 %v225
    %v450 = vunpack.c.l.b16 %v226
    %v451 = vunpack.c.l.b16 %v227
    %v452 = vunpack.c.l.b16 %v228
    %v453 = vunpack.c.l.b16 %v229
    %v454 = vunpack.c.l.b16 %v230
    %v455 = vunpack.c.l.b16 %v231
    %v456 = vunpack.c.l.b16 %v232
    %v457 = vunpack.c.l.b16 %v233
    %v458 = vpack.c.b16 %v427, %v426
    %v459 = vpack.c.b16 %v429, %v428
    %v460 = vpack.c.b16 %v431, %v430
    %v461 = vpack.c.b16 %v433, %v432
    %v462 = vpack.c.b16 %v435, %v434
    %v463 = vpack.c.b16 %v437, %v436
    %v464 = vpack.c.b16 %v439, %v438
    %v465 = vpack.c.b16 %v441, %v440
    %v466 = vpack.c.b16 %v443, %v442
    %v467 = vpack.c.b16 %v445, %v444
    %v468 = vpack.c.b16 %v447, %v446
    %v469 = vpack.c.b16 %v449, %v448
    %v470 = vpack.c.b16 %v451, %v450
    %v471 = vpack.c.b16 %v453, %v452
    %v472 = vpack.c.b16 %v455, %v454
    %v473 = vpack.c.b16 %v457, %v456
    %490 = vmatpush.bf16.msra.mxu0 %v465
    %491 = vmatpush.bf16.msra.mxu0 %v464
    %492 = vmatpush.bf16.msra.mxu0 %v463
    %493 = vmatpush.bf16.msra.mxu0 %v462
    %494 = vmatpush.bf16.msra.mxu0 %v461
    %495 = vmatpush.bf16.msra.mxu0 %v460
    %496 = vmatpush.bf16.msra.mxu0 %v459
    %497 = vmatpush.bf16.msra.mxu0 %v458
    %498 = vmatmul.bf16.gmra.mxu0 %v330
    %v499 = vpop.f32.mrf.mxu0
    %v500 = vadd.f32 0.0, %v499
    %v501 = vpop.f32.mrf.mxu0
    %v502 = vadd.f32 0.0, %v501
    %503 = vmatmul.bf16.gmra.mxu0 %v332
    %v504 = vpop.f32.mrf.mxu0
    %v505 = vadd.f32 0.0, %v504
    %v506 = vpop.f32.mrf.mxu0
    %v507 = vadd.f32 0.0, %v506
    %508 = vmatmul.bf16.gmra.mxu0 %v334
    %v509 = vpop.f32.mrf.mxu0
    %v510 = vadd.f32 0.0, %v509
    %v511 = vpop.f32.mrf.mxu0
    %v512 = vadd.f32 0.0, %v511
    %513 = vmatmul.bf16.gmra.mxu0 %v336
    %v514 = vpop.f32.mrf.mxu0
    %v515 = vadd.f32 0.0, %v514
    %v516 = vpop.f32.mrf.mxu0
    %v517 = vadd.f32 0.0, %v516
    %518 = vmatmul.bf16.gmra.mxu0 %v338
    %v519 = vpop.f32.mrf.mxu0
    %v520 = vadd.f32 0.0, %v519
    %v521 = vpop.f32.mrf.mxu0
    %v522 = vadd.f32 0.0, %v521
    %523 = vmatmul.bf16.gmra.mxu0 %v340
    %v524 = vpop.f32.mrf.mxu0
    %v525 = vadd.f32 0.0, %v524
    %v526 = vpop.f32.mrf.mxu0
    %v527 = vadd.f32 0.0, %v526
    %528 = vmatmul.bf16.gmra.mxu0 %v342
    %v529 = vpop.f32.mrf.mxu0
    %v530 = vadd.f32 0.0, %v529
    %v531 = vpop.f32.mrf.mxu0
    %v532 = vadd.f32 0.0, %v531
    %533 = vmatmul.bf16.gmra.mxu0 %v344
    %v534 = vpop.f32.mrf.mxu0
    %v535 = vadd.f32 0.0, %v534
    %v536 = vpop.f32.mrf.mxu0
    %v537 = vadd.f32 0.0, %v536
    %538 = vmatmul.bf16.gmra.mxu0 %v346
    %v539 = vpop.f32.mrf.mxu0
    %v540 = vadd.f32 0.0, %v539
    %v541 = vpop.f32.mrf.mxu0
    %v542 = vadd.f32 0.0, %v541
    %543 = vmatmul.bf16.gmra.mxu0 %v348
    %v544 = vpop.f32.mrf.mxu0
    %v545 = vadd.f32 0.0, %v544
    %v546 = vpop.f32.mrf.mxu0
    %v547 = vadd.f32 0.0, %v546
    %548 = vmatmul.bf16.gmra.mxu0 %v350
    %v549 = vpop.f32.mrf.mxu0
    %v550 = vadd.f32 0.0, %v549
    %v551 = vpop.f32.mrf.mxu0
    %v552 = vadd.f32 0.0, %v551
    %553 = vmatmul.bf16.gmra.mxu0 %v352
    %v554 = vpop.f32.mrf.mxu0
    %v555 = vadd.f32 0.0, %v554
    %v556 = vpop.f32.mrf.mxu0
    %v557 = vadd.f32 0.0, %v556
    %558 = vmatmul.bf16.gmra.mxu0 %v354
    %v559 = vpop.f32.mrf.mxu0
    %v560 = vadd.f32 0.0, %v559
    %v561 = vpop.f32.mrf.mxu0
    %v562 = vadd.f32 0.0, %v561
    %563 = vmatmul.bf16.gmra.mxu0 %v356
    %v564 = vpop.f32.mrf.mxu0
    %v565 = vadd.f32 0.0, %v564
    %v566 = vpop.f32.mrf.mxu0
    %v567 = vadd.f32 0.0, %v566
    %568 = vmatmul.bf16.gmra.mxu0 %v358
    %v569 = vpop.f32.mrf.mxu0
    %v570 = vadd.f32 0.0, %v569
    %v571 = vpop.f32.mrf.mxu0
    %v572 = vadd.f32 0.0, %v571
    %573 = vmatmul.bf16.gmra.mxu0 %v360
    %v574 = vpop.f32.mrf.mxu0
    %v575 = vadd.f32 0.0, %v574
    %v576 = vpop.f32.mrf.mxu0
    %v577 = vadd.f32 0.0, %v576
    %578 = vdwg.mxu0
    %579 = vmatpush.bf16.msra.mxu0 %v473
    %580 = vmatpush.bf16.msra.mxu0 %v472
    %581 = vmatpush.bf16.msra.mxu0 %v471
    %582 = vmatpush.bf16.msra.mxu0 %v470
    %583 = vmatpush.bf16.msra.mxu0 %v469
    %584 = vmatpush.bf16.msra.mxu0 %v468
    %585 = vmatpush.bf16.msra.mxu0 %v467
    %586 = vmatpush.bf16.msra.mxu0 %v466
    %587 = vmatmul.bf16.gmra.mxu0 %v331
    %v588 = vpop.f32.mrf.mxu0
    %v589 = vadd.f32 %v500, %v588
    %v590 = vpop.f32.mrf.mxu0
    %v591 = vadd.f32 %v502, %v590
    %592 = vmatmul.bf16.gmra.mxu0 %v333
    %v593 = vpop.f32.mrf.mxu0
    %v594 = vadd.f32 %v505, %v593
    %v595 = vpop.f32.mrf.mxu0
    %v596 = vadd.f32 %v507, %v595
    %597 = vmatmul.bf16.gmra.mxu0 %v335
    %v598 = vpop.f32.mrf.mxu0
    %v599 = vadd.f32 %v510, %v598
    %v600 = vpop.f32.mrf.mxu0
    %v601 = vadd.f32 %v512, %v600
    %602 = vmatmul.bf16.gmra.mxu0 %v337
    %v603 = vpop.f32.mrf.mxu0
    %v604 = vadd.f32 %v515, %v603
    %v605 = vpop.f32.mrf.mxu0
    %v606 = vadd.f32 %v517, %v605
    %607 = vmatmul.bf16.gmra.mxu0 %v339
    %v608 = vpop.f32.mrf.mxu0
    %v609 = vadd.f32 %v520, %v608
    %v610 = vpop.f32.mrf.mxu0
    %v611 = vadd.f32 %v522, %v610
    %612 = vmatmul.bf16.gmra.mxu0 %v341
    %v613 = vpop.f32.mrf.mxu0
    %v614 = vadd.f32 %v525, %v613
    %v615 = vpop.f32.mrf.mxu0
    %v616 = vadd.f32 %v527, %v615
    %617 = vmatmul.bf16.gmra.mxu0 %v343
    %v618 = vpop.f32.mrf.mxu0
    %v619 = vadd.f32 %v530, %v618
    %v620 = vpop.f32.mrf.mxu0
    %v621 = vadd.f32 %v532, %v620
    %622 = vmatmul.bf16.gmra.mxu0 %v345
    %v623 = vpop.f32.mrf.mxu0
    %v624 = vadd.f32 %v535, %v623
    %v625 = vpop.f32.mrf.mxu0
    %v626 = vadd.f32 %v537, %v625
    %627 = vmatmul.bf16.gmra.mxu0 %v347
    %v628 = vpop.f32.mrf.mxu0
    %v629 = vadd.f32 %v540, %v628
    %v630 = vpop.f32.mrf.mxu0
    %v631 = vadd.f32 %v542, %v630
    %632 = vmatmul.bf16.gmra.mxu0 %v349
    %v633 = vpop.f32.mrf.mxu0
    %v634 = vadd.f32 %v545, %v633
    %v635 = vpop.f32.mrf.mxu0
    %v636 = vadd.f32 %v547, %v635
    %637 = vmatmul.bf16.gmra.mxu0 %v351
    %v638 = vpop.f32.mrf.mxu0
    %v639 = vadd.f32 %v550, %v638
    %v640 = vpop.f32.mrf.mxu0
    %v641 = vadd.f32 %v552, %v640
    %642 = vmatmul.bf16.gmra.mxu0 %v353
    %v643 = vpop.f32.mrf.mxu0
    %v644 = vadd.f32 %v555, %v643
    %v645 = vpop.f32.mrf.mxu0
    %v646 = vadd.f32 %v557, %v645
    %647 = vmatmul.bf16.gmra.mxu0 %v355
    %v648 = vpop.f32.mrf.mxu0
    %v649 = vadd.f32 %v560, %v648
    %v650 = vpop.f32.mrf.mxu0
    %v651 = vadd.f32 %v562, %v650
    %652 = vmatmul.bf16.gmra.mxu0 %v357
    %v653 = vpop.f32.mrf.mxu0
    %v654 = vadd.f32 %v565, %v653
    %v655 = vpop.f32.mrf.mxu0
    %v656 = vadd.f32 %v567, %v655
    %657 = vmatmul.bf16.gmra.mxu0 %v359
    %v658 = vpop.f32.mrf.mxu0
    %v659 = vadd.f32 %v570, %v658
    %v660 = vpop.f32.mrf.mxu0
    %v661 = vadd.f32 %v572, %v660
    %662 = vmatmul.bf16.gmra.mxu0 %v361
    %v663 = vpop.f32.mrf.mxu0
    %v664 = vadd.f32 %v575, %v663
    %v665 = vpop.f32.mrf.mxu0
    %v666 = vadd.f32 %v577, %v665
    %667 = vdwg.mxu0
    %v668 = vpack.c.bf16 %v589, %v589
    %v669 = vpack.c.bf16 %v591, %v591
    %v670 = vpack.c.bf16 %v594, %v594
    %v671 = vpack.c.bf16 %v596, %v596
    %v672 = vpack.c.bf16 %v599, %v599
    %v673 = vpack.c.bf16 %v601, %v601
    %v674 = vpack.c.bf16 %v604, %v604
    %v675 = vpack.c.bf16 %v606, %v606
    %v676 = vpack.c.bf16 %v609, %v609
    %v677 = vpack.c.bf16 %v611, %v611
    %v678 = vpack.c.bf16 %v614, %v614
    %v679 = vpack.c.bf16 %v616, %v616
    %v680 = vpack.c.bf16 %v619, %v619
    %v681 = vpack.c.bf16 %v621, %v621
    %v682 = vpack.c.bf16 %v624, %v624
    %v683 = vpack.c.bf16 %v626, %v626
    %v684 = vpack.c.bf16 %v629, %v629
    %v685 = vpack.c.bf16 %v631, %v631
    %v686 = vpack.c.bf16 %v634, %v634
    %v687 = vpack.c.bf16 %v636, %v636
    %v688 = vpack.c.bf16 %v639, %v639
    %v689 = vpack.c.bf16 %v641, %v641
    %v690 = vpack.c.bf16 %v644, %v644
    %v691 = vpack.c.bf16 %v646, %v646
    %v692 = vpack.c.bf16 %v649, %v649
    %v693 = vpack.c.bf16 %v651, %v651
    %v694 = vpack.c.bf16 %v654, %v654
    %v695 = vpack.c.bf16 %v656, %v656
    %v696 = vpack.c.bf16 %v659, %v659
    %v697 = vpack.c.bf16 %v661, %v661
    %v698 = vpack.c.bf16 %v664, %v664
    %v699 = vpack.c.bf16 %v666, %v666
    %700 = vst [vmem:[%s2] sm:$0xf] %v668
    %701 = vst [vmem:[%s2 + $0x4] sm:$0xf] %v669
    %702 = vst [vmem:[%s2 + $0x8] sm:$0xf] %v670
    %703 = vst [vmem:[%s2 + $0xc] sm:$0xf] %v671
    %704 = vst [vmem:[%s2 + $0x10] sm:$0xf] %v672
    %705 = vst [vmem:[%s2 + $0x14] sm:$0xf] %v673
    %706 = vst [vmem:[%s2 + $0x18] sm:$0xf] %v674
    %707 = vst [vmem:[%s2 + $0x1c] sm:$0xf] %v675
    %708 = vst [vmem:[%s2 + $0x20] sm:$0xf] %v676
    %709 = vst [vmem:[%s2 + $0x24] sm:$0xf] %v677
    %710 = vst [vmem:[%s2 + $0x28] sm:$0xf] %v678
    %711 = vst [vmem:[%s2 + $0x2c] sm:$0xf] %v679
    %712 = vst [vmem:[%s2 + $0x30] sm:$0xf] %v680
    %713 = vst [vmem:[%s2 + $0x34] sm:$0xf] %v681
    %714 = vst [vmem:[%s2 + $0x38] sm:$0xf] %v682
    %715 = vst [vmem:[%s2 + $0x3c] sm:$0xf] %v683
    %716 = vst [vmem:[%s2 + $0x40] sm:$0xf] %v684
    %717 = vst [vmem:[%s2 + $0x44] sm:$0xf] %v685
    %718 = vst [vmem:[%s2 + $0x48] sm:$0xf] %v686
    %719 = vst [vmem:[%s2 + $0x4c] sm:$0xf] %v687
    %720 = vst [vmem:[%s2 + $0x50] sm:$0xf] %v688
    %721 = vst [vmem:[%s2 + $0x54] sm:$0xf] %v689
    %722 = vst [vmem:[%s2 + $0x58] sm:$0xf] %v690
    %723 = vst [vmem:[%s2 + $0x5c] sm:$0xf] %v691
    %724 = vst [vmem:[%s2 + $0x60] sm:$0xf] %v692
    %725 = vst [vmem:[%s2 + $0x64] sm:$0xf] %v693
    %726 = vst [vmem:[%s2 + $0x68] sm:$0xf] %v694
    %727 = vst [vmem:[%s2 + $0x6c] sm:$0xf] %v695
    %728 = vst [vmem:[%s2 + $0x70] sm:$0xf] %v696
    %729 = vst [vmem:[%s2 + $0x74] sm:$0xf] %v697
    %730 = vst [vmem:[%s2 + $0x78] sm:$0xf] %v698
    %731 = vst [vmem:[%s2 + $0x7c] sm:$0xf] %v699
    // Predicated region
    $region48: #{linear_snowball_forward.8} parent=1 // pred_check
      _
    $region49: #{linear_snowball_forward.8} parent=1 // pred_check_branch
      %733 = sbr.rel (0) target = $region51
    $region50: #{linear_snowball_forward.8} parent=1 // pred_region
      _
    $region51: #{linear_snowball_forward.8} parent=1 // pred_fallthru
      _
    // Predicated region
    $region52: #{linear_snowball_forward.8} parent=1 // pred_check
      _
    $region53: #{linear_snowball_forward.8} parent=1 // pred_check_branch
      %735 = sbr.rel (0) target = $region55
    $region54: #{linear_snowball_forward.8} parent=1 // pred_region
      _
    $region55: #{linear_snowball_forward.8} parent=1 // pred_fallthru
      _

// kernel: linear_snowball_forward.6
$region0: #{linear_snowball_forward.6}
  #allocation0 [shape = 'u32[]', space=smem, size = 0x4, offset = 0x4, fixed_abs, tag = 'smem constant byte address 0x4 - core index']
  #allocation1 [shape = 'u32[72,128]{1,0:T(1,128)}', space=vmem, size = 0x9000, scoped, tag = 'internal scratch']
  %s0 = inlined_call_operand.vmem [shape: bf16[256,384], index: 0, kind: input, shape index: {}]
  %s1 = inlined_call_operand.vmem [shape: bf16[128,128], index: 1, kind: input, shape index: {}]
  %s2 = inlined_call_operand.vmem [shape: bf16[256,128], index: 2, kind: output, shape index: {}]
  %s3 = sld [smem:[#allocation0]]
  $region59: #{linear_snowball_forward.6} parent=0
    _
  %s5 = ssub.s32 1, %s3
  %s6 = scalar_select 0, %s5, %s3
  $region1: #{linear_snowball_forward.6} parent=0
    #allocation2 [shape = 'u8[65536]{0}', space=vmem, size = 0x10000, scoped, tag = 'input window, operand 0, single buffered']
    // Predicated region
    $region2: #{linear_snowball_forward.6} parent=1 // pred_check
      _
    $region3: #{linear_snowball_forward.6} parent=1 // pred_check_branch
      %8 = sbr.rel (0) target = $region5
    $region4: #{linear_snowball_forward.6} parent=1 // pred_region
      // Predicated region
      $region6: #{linear_snowball_forward.6} parent=4 // pred_check
        _
      $region7: #{linear_snowball_forward.6} parent=4 // pred_check_branch
        %10 = sbr.rel (0) target = $region9
      $region8: #{linear_snowball_forward.6} parent=4 // pred_region
        // Predicated region
        $region10: #{linear_snowball_forward.6} parent=8 // pred_check
          _
        $region11: #{linear_snowball_forward.6} parent=8 // pred_check_branch
          %12 = sbr.rel target = $region13
        $region12: #{linear_snowball_forward.6} parent=8 // pred_region
          // Predicated region
          $region25: #{linear_snowball_forward.6} parent=12 // pred_check
            _
          $region26: #{linear_snowball_forward.6} parent=12 // pred_check_branch
            %90 = sbr.rel (0) target = $region28
          $region27: #{linear_snowball_forward.6} parent=12 // pred_region
            loop: start=0, step=1, limit=1
            $region29: #{linear_snowball_forward.6} parent=27 // loop_pre_header
              _
            $region30: #{linear_snowball_forward.6} parent=27 // loop_header
              %s92 = sphi 0, %s96
              %p93 = scmp.ge.s32.totalorder %s92, 1
              %s97 = sphi %s0, %s0
              %s98 = sphi [#allocation2], [#allocation2]
            $region31: #{linear_snowball_forward.6} parent=27 // loop_header_branch
              %95 = sbr.rel (%p93) target = $region35
            $region32: #{linear_snowball_forward.6} parent=27 // loop_body
              _
            $region33: #{linear_snowball_forward.6} parent=27 // loop_footer
              %s96 = sadd.s32 1, %s92
            $region34: #{linear_snowball_forward.6} parent=27 // loop_footer_branch
              %91 = sbr.rel target = $region30
            $region35: #{linear_snowball_forward.6} parent=27 // loop_exit
              _
            %s100 = ssub.s32 16, 1
            loop: start=0, step=1, limit=1
            $region36: #{linear_snowball_forward.6} parent=27 // loop_pre_header
              _
            $region37: #{linear_snowball_forward.6} parent=27 // loop_header
              %s102 = sphi 0, %s106
              %p103 = scmp.ge.s32.totalorder %s102, 1
              %s107 = sphi %s0, %s0
              %s108 = sphi [#allocation2], [#allocation2]
            $region38: #{linear_snowball_forward.6} parent=27 // loop_header_branch
              %105 = sbr.rel (%p103) target = $region42
            $region39: #{linear_snowball_forward.6} parent=27 // loop_body
              %v109 = vld [vmem:[%s107] sm:%s100]
              %110 = vst [vmem:[%s108] sm:%s100] %v109
              %v111 = vld [vmem:[%s107 + $0xc] sm:%s100]
              %112 = vst [vmem:[%s108 + $0x4] sm:%s100] %v111
              %v113 = vld [vmem:[%s107 + $0x18] sm:%s100]
              %114 = vst [vmem:[%s108 + $0x8] sm:%s100] %v113
              %v115 = vld [vmem:[%s107 + $0x24] sm:%s100]
              %116 = vst [vmem:[%s108 + $0xc] sm:%s100] %v115
              %v117 = vld [vmem:[%s107 + $0x30] sm:%s100]
              %118 = vst [vmem:[%s108 + $0x10] sm:%s100] %v117
              %v119 = vld [vmem:[%s107 + $0x3c] sm:%s100]
              %120 = vst [vmem:[%s108 + $0x14] sm:%s100] %v119
              %v121 = vld [vmem:[%s107 + $0x48] sm:%s100]
              %122 = vst [vmem:[%s108 + $0x18] sm:%s100] %v121
              %v123 = vld [vmem:[%s107 + $0x54] sm:%s100]
              %124 = vst [vmem:[%s108 + $0x1c] sm:%s100] %v123
              %v125 = vld [vmem:[%s107 + $0x60] sm:%s100]
              %126 = vst [vmem:[%s108 + $0x20] sm:%s100] %v125
              %v127 = vld [vmem:[%s107 + $0x6c] sm:%s100]
              %128 = vst [vmem:[%s108 + $0x24] sm:%s100] %v127
              %v129 = vld [vmem:[%s107 + $0x78] sm:%s100]
              %130 = vst [vmem:[%s108 + $0x28] sm:%s100] %v129
              %v131 = vld [vmem:[%s107 + $0x84] sm:%s100]
              %132 = vst [vmem:[%s108 + $0x2c] sm:%s100] %v131
              %v133 = vld [vmem:[%s107 + $0x90] sm:%s100]
              %134 = vst [vmem:[%s108 + $0x30] sm:%s100] %v133
              %v135 = vld [vmem:[%s107 + $0x9c] sm:%s100]
              %136 = vst [vmem:[%s108 + $0x34] sm:%s100] %v135
              %v137 = vld [vmem:[%s107 + $0xa8] sm:%s100]
              %138 = vst [vmem:[%s108 + $0x38] sm:%s100] %v137
              %v139 = vld [vmem:[%s107 + $0xb4] sm:%s100]
              %140 = vst [vmem:[%s108 + $0x3c] sm:%s100] %v139
              %v141 = vld [vmem:[%s107 + $0xc0] sm:%s100]
              %142 = vst [vmem:[%s108 + $0x40] sm:%s100] %v141
              %v143 = vld [vmem:[%s107 + $0xcc] sm:%s100]
              %144 = vst [vmem:[%s108 + $0x44] sm:%s100] %v143
              %v145 = vld [vmem:[%s107 + $0xd8] sm:%s100]
              %146 = vst [vmem:[%s108 + $0x48] sm:%s100] %v145
              %v147 = vld [vmem:[%s107 + $0xe4] sm:%s100]
              %148 = vst [vmem:[%s108 + $0x4c] sm:%s100] %v147
              %v149 = vld [vmem:[%s107 + $0xf0] sm:%s100]
              %150 = vst [vmem:[%s108 + $0x50] sm:%s100] %v149
              %v151 = vld [vmem:[%s107 + $0xfc] sm:%s100]
              %152 = vst [vmem:[%s108 + $0x54] sm:%s100] %v151
              %v153 = vld [vmem:[%s107 + $0x108] sm:%s100]
              %154 = vst [vmem:[%s108 + $0x58] sm:%s100] %v153
              %v155 = vld [vmem:[%s107 + $0x114] sm:%s100]
              %156 = vst [vmem:[%s108 + $0x5c] sm:%s100] %v155
              %v157 = vld [vmem:[%s107 + $0x120] sm:%s100]
              %158 = vst [vmem:[%s108 + $0x60] sm:%s100] %v157
              %v159 = vld [vmem:[%s107 + $0x12c] sm:%s100]
              %160 = vst [vmem:[%s108 + $0x64] sm:%s100] %v159
              %v161 = vld [vmem:[%s107 + $0x138] sm:%s100]
              %162 = vst [vmem:[%s108 + $0x68] sm:%s100] %v161
              %v163 = vld [vmem:[%s107 + $0x144] sm:%s100]
              %164 = vst [vmem:[%s108 + $0x6c] sm:%s100] %v163
              %v165 = vld [vmem:[%s107 + $0x150] sm:%s100]
              %166 = vst [vmem:[%s108 + $0x70] sm:%s100] %v165
              %v167 = vld [vmem:[%s107 + $0x15c] sm:%s100]
              %168 = vst [vmem:[%s108 + $0x74] sm:%s100] %v167
              %v169 = vld [vmem:[%s107 + $0x168] sm:%s100]
              %170 = vst [vmem:[%s108 + $0x78] sm:%s100] %v169
              %v171 = vld [vmem:[%s107 + $0x174] sm:%s100]
              %172 = vst [vmem:[%s108 + $0x7c] sm:%s100] %v171
            $region40: #{linear_snowball_forward.6} parent=27 // loop_footer
              %s106 = sadd.s32 1, %s102
            $region41: #{linear_snowball_forward.6} parent=27 // loop_footer_branch
              %101 = sbr.rel target = $region37
            $region42: #{linear_snowball_forward.6} parent=27 // loop_exit
              _
          $region28: #{linear_snowball_forward.6} parent=12 // pred_fallthru
            _
        $region13: #{linear_snowball_forward.6} parent=8 // pred_fallthru
          _
        // Predicated region
        $region14: #{linear_snowball_forward.6} parent=8 // pred_check
          _
        $region15: #{linear_snowball_forward.6} parent=8 // pred_check_branch
          %14 = sbr.rel (0) target = $region17
        $region16: #{linear_snowball_forward.6} parent=8 // pred_region
          %s16 = ssub.s32 16, 1
          loop: start=0, step=1, limit=1
          $region18: #{linear_snowball_forward.6} parent=16 // loop_pre_header
            _
          $region19: #{linear_snowball_forward.6} parent=16 // loop_header
            %s18 = sphi 0, %s22
            %p19 = scmp.ge.s32.totalorder %s18, 1
            %s23 = sphi %s0, %s0
            %s24 = sphi [#allocation2], [#allocation2]
          $region20: #{linear_snowball_forward.6} parent=16 // loop_header_branch
            %21 = sbr.rel (%p19) target = $region24
          $region21: #{linear_snowball_forward.6} parent=16 // loop_body
            %v25 = vld [vmem:[%s23] sm:%s16]
            %26 = vst [vmem:[%s24] sm:%s16] %v25
            %v27 = vld [vmem:[%s23 + $0xc] sm:%s16]
            %28 = vst [vmem:[%s24 + $0x4] sm:%s16] %v27
            %v29 = vld [vmem:[%s23 + $0x18] sm:%s16]
            %30 = vst [vmem:[%s24 + $0x8] sm:%s16] %v29
            %v31 = vld [vmem:[%s23 + $0x24] sm:%s16]
            %32 = vst [vmem:[%s24 + $0xc] sm:%s16] %v31
            %v33 = vld [vmem:[%s23 + $0x30] sm:%s16]
            %34 = vst [vmem:[%s24 + $0x10] sm:%s16] %v33
            %v35 = vld [vmem:[%s23 + $0x3c] sm:%s16]
            %36 = vst [vmem:[%s24 + $0x14] sm:%s16] %v35
            %v37 = vld [vmem:[%s23 + $0x48] sm:%s16]
            %38 = vst [vmem:[%s24 + $0x18] sm:%s16] %v37
            %v39 = vld [vmem:[%s23 + $0x54] sm:%s16]
            %40 = vst [vmem:[%s24 + $0x1c] sm:%s16] %v39
            %v41 = vld [vmem:[%s23 + $0x60] sm:%s16]
            %42 = vst [vmem:[%s24 + $0x20] sm:%s16] %v41
            %v43 = vld [vmem:[%s23 + $0x6c] sm:%s16]
            %44 = vst [vmem:[%s24 + $0x24] sm:%s16] %v43
            %v45 = vld [vmem:[%s23 + $0x78] sm:%s16]
            %46 = vst [vmem:[%s24 + $0x28] sm:%s16] %v45
            %v47 = vld [vmem:[%s23 + $0x84] sm:%s16]
            %48 = vst [vmem:[%s24 + $0x2c] sm:%s16] %v47
            %v49 = vld [vmem:[%s23 + $0x90] sm:%s16]
            %50 = vst [vmem:[%s24 + $0x30] sm:%s16] %v49
            %v51 = vld [vmem:[%s23 + $0x9c] sm:%s16]
            %52 = vst [vmem:[%s24 + $0x34] sm:%s16] %v51
            %v53 = vld [vmem:[%s23 + $0xa8] sm:%s16]
            %54 = vst [vmem:[%s24 + $0x38] sm:%s16] %v53
            %v55 = vld [vmem:[%s23 + $0xb4] sm:%s16]
            %56 = vst [vmem:[%s24 + $0x3c] sm:%s16] %v55
            %v57 = vld [vmem:[%s23 + $0xc0] sm:%s16]
            %58 = vst [vmem:[%s24 + $0x40] sm:%s16] %v57
            %v59 = vld [vmem:[%s23 + $0xcc] sm:%s16]
            %60 = vst [vmem:[%s24 + $0x44] sm:%s16] %v59
            %v61 = vld [vmem:[%s23 + $0xd8] sm:%s16]
            %62 = vst [vmem:[%s24 + $0x48] sm:%s16] %v61
            %v63 = vld [vmem:[%s23 + $0xe4] sm:%s16]
            %64 = vst [vmem:[%s24 + $0x4c] sm:%s16] %v63
            %v65 = vld [vmem:[%s23 + $0xf0] sm:%s16]
            %66 = vst [vmem:[%s24 + $0x50] sm:%s16] %v65
            %v67 = vld [vmem:[%s23 + $0xfc] sm:%s16]
            %68 = vst [vmem:[%s24 + $0x54] sm:%s16] %v67
            %v69 = vld [vmem:[%s23 + $0x108] sm:%s16]
            %70 = vst [vmem:[%s24 + $0x58] sm:%s16] %v69
            %v71 = vld [vmem:[%s23 + $0x114] sm:%s16]
            %72 = vst [vmem:[%s24 + $0x5c] sm:%s16] %v71
            %v73 = vld [vmem:[%s23 + $0x120] sm:%s16]
            %74 = vst [vmem:[%s24 + $0x60] sm:%s16] %v73
            %v75 = vld [vmem:[%s23 + $0x12c] sm:%s16]
            %76 = vst [vmem:[%s24 + $0x64] sm:%s16] %v75
            %v77 = vld [vmem:[%s23 + $0x138] sm:%s16]
            %78 = vst [vmem:[%s24 + $0x68] sm:%s16] %v77
            %v79 = vld [vmem:[%s23 + $0x144] sm:%s16]
            %80 = vst [vmem:[%s24 + $0x6c] sm:%s16] %v79
            %v81 = vld [vmem:[%s23 + $0x150] sm:%s16]
            %82 = vst [vmem:[%s24 + $0x70] sm:%s16] %v81
            %v83 = vld [vmem:[%s23 + $0x15c] sm:%s16]
            %84 = vst [vmem:[%s24 + $0x74] sm:%s16] %v83
            %v85 = vld [vmem:[%s23 + $0x168] sm:%s16]
            %86 = vst [vmem:[%s24 + $0x78] sm:%s16] %v85
            %v87 = vld [vmem:[%s23 + $0x174] sm:%s16]
            %88 = vst [vmem:[%s24 + $0x7c] sm:%s16] %v87
          $region22: #{linear_snowball_forward.6} parent=16 // loop_footer
            %s22 = sadd.s32 1, %s18
          $region23: #{linear_snowball_forward.6} parent=16 // loop_footer_branch
            %17 = sbr.rel target = $region19
          $region24: #{linear_snowball_forward.6} parent=16 // loop_exit
            _
        $region17: #{linear_snowball_forward.6} parent=8 // pred_fallthru
          _
      $region9: #{linear_snowball_forward.6} parent=4 // pred_fallthru
        _
      %173 = vnop
    $region5: #{linear_snowball_forward.6} parent=1 // pred_fallthru
      _
    // Predicated region
    $region43: #{linear_snowball_forward.6} parent=1 // pred_check
      _
    $region44: #{linear_snowball_forward.6} parent=1 // pred_check_branch
      %175 = sbr.rel (0) target = $region46
    $region45: #{linear_snowball_forward.6} parent=1 // pred_region
      _
    $region46: #{linear_snowball_forward.6} parent=1 // pred_fallthru
      _
    // Predicated region
    $region47: #{linear_snowball_forward.6} parent=1 // pred_check
      _
    $region48: #{linear_snowball_forward.6} parent=1 // pred_check_branch
      %177 = sbr.rel (0) target = $region50
    $region49: #{linear_snowball_forward.6} parent=1 // pred_region
      _
    $region50: #{linear_snowball_forward.6} parent=1 // pred_fallthru
      _
    %v178 = vld [vmem:[#allocation2] sm:$0xf]
    %v179 = vld [vmem:[#allocation2 + $0x4] sm:$0xf]
    %v180 = vld [vmem:[#allocation2 + $0x8] sm:$0xf]
    %v181 = vld [vmem:[#allocation2 + $0xc] sm:$0xf]
    %v182 = vld [vmem:[#allocation2 + $0x10] sm:$0xf]
    %v183 = vld [vmem:[#allocation2 + $0x14] sm:$0xf]
    %v184 = vld [vmem:[#allocation2 + $0x18] sm:$0xf]
    %v185 = vld [vmem:[#allocation2 + $0x1c] sm:$0xf]
    %v186 = vld [vmem:[#allocation2 + $0x20] sm:$0xf]
    %v187 = vld [vmem:[#allocation2 + $0x24] sm:$0xf]
    %v188 = vld [vmem:[#allocation2 + $0x28] sm:$0xf]
    %v189 = vld [vmem:[#allocation2 + $0x2c] sm:$0xf]
    %v190 = vld [vmem:[#allocation2 + $0x30] sm:$0xf]
    %v191 = vld [vmem:[#allocation2 + $0x34] sm:$0xf]
    %v192 = vld [vmem:[#allocation2 + $0x38] sm:$0xf]
    %v193 = vld [vmem:[#allocation2 + $0x3c] sm:$0xf]
    %v194 = vld [vmem:[#allocation2 + $0x40] sm:$0xf]
    %v195 = vld [vmem:[#allocation2 + $0x44] sm:$0xf]
    %v196 = vld [vmem:[#allocation2 + $0x48] sm:$0xf]
    %v197 = vld [vmem:[#allocation2 + $0x4c] sm:$0xf]
    %v198 = vld [vmem:[#allocation2 + $0x50] sm:$0xf]
    %v199 = vld [vmem:[#allocation2 + $0x54] sm:$0xf]
    %v200 = vld [vmem:[#allocation2 + $0x58] sm:$0xf]
    %v201 = vld [vmem:[#allocation2 + $0x5c] sm:$0xf]
    %v202 = vld [vmem:[#allocation2 + $0x60] sm:$0xf]
    %v203 = vld [vmem:[#allocation2 + $0x64] sm:$0xf]
    %v204 = vld [vmem:[#allocation2 + $0x68] sm:$0xf]
    %v205 = vld [vmem:[#allocation2 + $0x6c] sm:$0xf]
    %v206 = vld [vmem:[#allocation2 + $0x70] sm:$0xf]
    %v207 = vld [vmem:[#allocation2 + $0x74] sm:$0xf]
    %v208 = vld [vmem:[#allocation2 + $0x78] sm:$0xf]
    %v209 = vld [vmem:[#allocation2 + $0x7c] sm:$0xf]
    %v210 = vld [vmem:[%s1] sm:$0xf]
    %v211 = vld [vmem:[%s1 + $0x4] sm:$0xf]
    %v212 = vld [vmem:[%s1 + $0x8] sm:$0xf]
    %v213 = vld [vmem:[%s1 + $0xc] sm:$0xf]
    %v214 = vld [vmem:[%s1 + $0x10] sm:$0xf]
    %v215 = vld [vmem:[%s1 + $0x14] sm:$0xf]
    %v216 = vld [vmem:[%s1 + $0x18] sm:$0xf]
    %v217 = vld [vmem:[%s1 + $0x1c] sm:$0xf]
    %v218 = vld [vmem:[%s1 + $0x20] sm:$0xf]
    %v219 = vld [vmem:[%s1 + $0x24] sm:$0xf]
    %v220 = vld [vmem:[%s1 + $0x28] sm:$0xf]
    %v221 = vld [vmem:[%s1 + $0x2c] sm:$0xf]
    %v222 = vld [vmem:[%s1 + $0x30] sm:$0xf]
    %v223 = vld [vmem:[%s1 + $0x34] sm:$0xf]
    %v224 = vld [vmem:[%s1 + $0x38] sm:$0xf]
    %v225 = vld [vmem:[%s1 + $0x3c] sm:$0xf]
    %v258 = vunpack.c.l.b16 %v178
    %v259 = vunpack.c.l.b16 %v179
    %v260 = vunpack.c.l.b16 %v180
    %v261 = vunpack.c.l.b16 %v181
    %v262 = vunpack.c.l.b16 %v182
    %v263 = vunpack.c.l.b16 %v183
    %v264 = vunpack.c.l.b16 %v184
    %v265 = vunpack.c.l.b16 %v185
    %v266 = vunpack.c.l.b16 %v186
    %v267 = vunpack.c.l.b16 %v187
    %v268 = vunpack.c.l.b16 %v188
    %v269 = vunpack.c.l.b16 %v189
    %v270 = vunpack.c.l.b16 %v190
    %v271 = vunpack.c.l.b16 %v191
    %v272 = vunpack.c.l.b16 %v192
    %v273 = vunpack.c.l.b16 %v193
    %v274 = vunpack.c.l.b16 %v194
    %v275 = vunpack.c.l.b16 %v195
    %v276 = vunpack.c.l.b16 %v196
    %v277 = vunpack.c.l.b16 %v197
    %v278 = vunpack.c.l.b16 %v198
    %v279 = vunpack.c.l.b16 %v199
    %v280 = vunpack.c.l.b16 %v200
    %v281 = vunpack.c.l.b16 %v201
    %v282 = vunpack.c.l.b16 %v202
    %v283 = vunpack.c.l.b16 %v203
    %v284 = vunpack.c.l.b16 %v204
    %v285 = vunpack.c.l.b16 %v205
    %v286 = vunpack.c.l.b16 %v206
    %v287 = vunpack.c.l.b16 %v207
    %v288 = vunpack.c.l.b16 %v208
    %v289 = vunpack.c.l.b16 %v209
    %v290 = vpack.c.b16 %v259, %v258
    %v291 = vpack.c.b16 %v261, %v260
    %v292 = vpack.c.b16 %v263, %v262
    %v293 = vpack.c.b16 %v265, %v264
    %v294 = vpack.c.b16 %v267, %v266
    %v295 = vpack.c.b16 %v269, %v268
    %v296 = vpack.c.b16 %v271, %v270
    %v297 = vpack.c.b16 %v273, %v272
    %v298 = vpack.c.b16 %v275, %v274
    %v299 = vpack.c.b16 %v277, %v276
    %v300 = vpack.c.b16 %v279, %v278
    %v301 = vpack.c.b16 %v281, %v280
    %v302 = vpack.c.b16 %v283, %v282
    %v303 = vpack.c.b16 %v285, %v284
    %v304 = vpack.c.b16 %v287, %v286
    %v305 = vpack.c.b16 %v289, %v288
    %v338 = vunpack.c.l.b16 %v210
    %v339 = vunpack.c.l.b16 %v211
    %v340 = vunpack.c.l.b16 %v212
    %v341 = vunpack.c.l.b16 %v213
    %v342 = vunpack.c.l.b16 %v214
    %v343 = vunpack.c.l.b16 %v215
    %v344 = vunpack.c.l.b16 %v216
    %v345 = vunpack.c.l.b16 %v217
    %v346 = vunpack.c.l.b16 %v218
    %v347 = vunpack.c.l.b16 %v219
    %v348 = vunpack.c.l.b16 %v220
    %v349 = vunpack.c.l.b16 %v221
    %v350 = vunpack.c.l.b16 %v222
    %v351 = vunpack.c.l.b16 %v223
    %v352 = vunpack.c.l.b16 %v224
    %v353 = vunpack.c.l.b16 %v225
    %v354 = vpack.c.b16 %v339, %v338
    %v355 = vpack.c.b16 %v341, %v340
    %v356 = vpack.c.b16 %v343, %v342
    %v357 = vpack.c.b16 %v345, %v344
    %v358 = vpack.c.b16 %v347, %v346
    %v359 = vpack.c.b16 %v349, %v348
    %v360 = vpack.c.b16 %v351, %v350
    %v361 = vpack.c.b16 %v353, %v352
    %370 = vmatpush.bf16.msra.mxu0 %v361
    %371 = vmatpush.bf16.msra.mxu0 %v360
    %372 = vmatpush.bf16.msra.mxu0 %v359
    %373 = vmatpush.bf16.msra.mxu0 %v358
    %374 = vmatpush.bf16.msra.mxu0 %v357
    %375 = vmatpush.bf16.msra.mxu0 %v356
    %376 = vmatpush.bf16.msra.mxu0 %v355
    %377 = vmatpush.bf16.msra.mxu0 %v354
    %378 = vmatmul.bf16.gmra.mxu0 %v290
    %v379 = vpop.f32.mrf.mxu0
    %v380 = vadd.f32 0.0, %v379
    %v381 = vpop.f32.mrf.mxu0
    %v382 = vadd.f32 0.0, %v381
    %383 = vmatmul.bf16.gmra.mxu0 %v291
    %v384 = vpop.f32.mrf.mxu0
    %v385 = vadd.f32 0.0, %v384
    %v386 = vpop.f32.mrf.mxu0
    %v387 = vadd.f32 0.0, %v386
    %388 = vmatmul.bf16.gmra.mxu0 %v292
    %v389 = vpop.f32.mrf.mxu0
    %v390 = vadd.f32 0.0, %v389
    %v391 = vpop.f32.mrf.mxu0
    %v392 = vadd.f32 0.0, %v391
    %393 = vmatmul.bf16.gmra.mxu0 %v293
    %v394 = vpop.f32.mrf.mxu0
    %v395 = vadd.f32 0.0, %v394
    %v396 = vpop.f32.mrf.mxu0
    %v397 = vadd.f32 0.0, %v396
    %398 = vmatmul.bf16.gmra.mxu0 %v294
    %v399 = vpop.f32.mrf.mxu0
    %v400 = vadd.f32 0.0, %v399
    %v401 = vpop.f32.mrf.mxu0
    %v402 = vadd.f32 0.0, %v401
    %403 = vmatmul.bf16.gmra.mxu0 %v295
    %v404 = vpop.f32.mrf.mxu0
    %v405 = vadd.f32 0.0, %v404
    %v406 = vpop.f32.mrf.mxu0
    %v407 = vadd.f32 0.0, %v406
    %408 = vmatmul.bf16.gmra.mxu0 %v296
    %v409 = vpop.f32.mrf.mxu0
    %v410 = vadd.f32 0.0, %v409
    %v411 = vpop.f32.mrf.mxu0
    %v412 = vadd.f32 0.0, %v411
    %413 = vmatmul.bf16.gmra.mxu0 %v297
    %v414 = vpop.f32.mrf.mxu0
    %v415 = vadd.f32 0.0, %v414
    %v416 = vpop.f32.mrf.mxu0
    %v417 = vadd.f32 0.0, %v416
    %418 = vmatmul.bf16.gmra.mxu0 %v298
    %v419 = vpop.f32.mrf.mxu0
    %v420 = vadd.f32 0.0, %v419
    %v421 = vpop.f32.mrf.mxu0
    %v422 = vadd.f32 0.0, %v421
    %423 = vmatmul.bf16.gmra.mxu0 %v299
    %v424 = vpop.f32.mrf.mxu0
    %v425 = vadd.f32 0.0, %v424
    %v426 = vpop.f32.mrf.mxu0
    %v427 = vadd.f32 0.0, %v426
    %428 = vmatmul.bf16.gmra.mxu0 %v300
    %v429 = vpop.f32.mrf.mxu0
    %v430 = vadd.f32 0.0, %v429
    %v431 = vpop.f32.mrf.mxu0
    %v432 = vadd.f32 0.0, %v431
    %433 = vmatmul.bf16.gmra.mxu0 %v301
    %v434 = vpop.f32.mrf.mxu0
    %v435 = vadd.f32 0.0, %v434
    %v436 = vpop.f32.mrf.mxu0
    %v437 = vadd.f32 0.0, %v436
    %438 = vmatmul.bf16.gmra.mxu0 %v302
    %v439 = vpop.f32.mrf.mxu0
    %v440 = vadd.f32 0.0, %v439
    %v441 = vpop.f32.mrf.mxu0
    %v442 = vadd.f32 0.0, %v441
    %443 = vmatmul.bf16.gmra.mxu0 %v303
    %v444 = vpop.f32.mrf.mxu0
    %v445 = vadd.f32 0.0, %v444
    %v446 = vpop.f32.mrf.mxu0
    %v447 = vadd.f32 0.0, %v446
    %448 = vmatmul.bf16.gmra.mxu0 %v304
    %v449 = vpop.f32.mrf.mxu0
    %v450 = vadd.f32 0.0, %v449
    %v451 = vpop.f32.mrf.mxu0
    %v452 = vadd.f32 0.0, %v451
    %453 = vmatmul.bf16.gmra.mxu0 %v305
    %v454 = vpop.f32.mrf.mxu0
    %v455 = vadd.f32 0.0, %v454
    %v456 = vpop.f32.mrf.mxu0
    %v457 = vadd.f32 0.0, %v456
    %458 = vdwg.mxu0
    %v459 = vpack.c.bf16 %v380, %v380
    %v460 = vpack.c.bf16 %v382, %v382
    %v461 = vpack.c.bf16 %v385, %v385
    %v462 = vpack.c.bf16 %v387, %v387
    %v463 = vpack.c.bf16 %v390, %v390
    %v464 = vpack.c.bf16 %v392, %v392
    %v465 = vpack.c.bf16 %v395, %v395
    %v466 = vpack.c.bf16 %v397, %v397
    %v467 = vpack.c.bf16 %v400, %v400
    %v468 = vpack.c.bf16 %v402, %v402
    %v469 = vpack.c.bf16 %v405, %v405
    %v470 = vpack.c.bf16 %v407, %v407
    %v471 = vpack.c.bf16 %v410, %v410
    %v472 = vpack.c.bf16 %v412, %v412
    %v473 = vpack.c.bf16 %v415, %v415
    %v474 = vpack.c.bf16 %v417, %v417
    %v475 = vpack.c.bf16 %v420, %v420
    %v476 = vpack.c.bf16 %v422, %v422
    %v477 = vpack.c.bf16 %v425, %v425
    %v478 = vpack.c.bf16 %v427, %v427
    %v479 = vpack.c.bf16 %v430, %v430
    %v480 = vpack.c.bf16 %v432, %v432
    %v481 = vpack.c.bf16 %v435, %v435
    %v482 = vpack.c.bf16 %v437, %v437
    %v483 = vpack.c.bf16 %v440, %v440
    %v484 = vpack.c.bf16 %v442, %v442
    %v485 = vpack.c.bf16 %v445, %v445
    %v486 = vpack.c.bf16 %v447, %v447
    %v487 = vpack.c.bf16 %v450, %v450
    %v488 = vpack.c.bf16 %v452, %v452
    %v489 = vpack.c.bf16 %v455, %v455
    %v490 = vpack.c.bf16 %v457, %v457
    %491 = vst [vmem:[%s2] sm:$0xf] %v459
    %492 = vst [vmem:[%s2 + $0x4] sm:$0xf] %v460
    %493 = vst [vmem:[%s2 + $0x8] sm:$0xf] %v461
    %494 = vst [vmem:[%s2 + $0xc] sm:$0xf] %v462
    %495 = vst [vmem:[%s2 + $0x10] sm:$0xf] %v463
    %496 = vst [vmem:[%s2 + $0x14] sm:$0xf] %v464
    %497 = vst [vmem:[%s2 + $0x18] sm:$0xf] %v465
    %498 = vst [vmem:[%s2 + $0x1c] sm:$0xf] %v466
    %499 = vst [vmem:[%s2 + $0x20] sm:$0xf] %v467
    %500 = vst [vmem:[%s2 + $0x24] sm:$0xf] %v468
    %501 = vst [vmem:[%s2 + $0x28] sm:$0xf] %v469
    %502 = vst [vmem:[%s2 + $0x2c] sm:$0xf] %v470
    %503 = vst [vmem:[%s2 + $0x30] sm:$0xf] %v471
    %504 = vst [vmem:[%s2 + $0x34] sm:$0xf] %v472
    %505 = vst [vmem:[%s2 + $0x38] sm:$0xf] %v473
    %506 = vst [vmem:[%s2 + $0x3c] sm:$0xf] %v474
    %507 = vst [vmem:[%s2 + $0x40] sm:$0xf] %v475
    %508 = vst [vmem:[%s2 + $0x44] sm:$0xf] %v476
    %509 = vst [vmem:[%s2 + $0x48] sm:$0xf] %v477
    %510 = vst [vmem:[%s2 + $0x4c] sm:$0xf] %v478
    %511 = vst [vmem:[%s2 + $0x50] sm:$0xf] %v479
    %512 = vst [vmem:[%s2 + $0x54] sm:$0xf] %v480
    %513 = vst [vmem:[%s2 + $0x58] sm:$0xf] %v481
    %514 = vst [vmem:[%s2 + $0x5c] sm:$0xf] %v482
    %515 = vst [vmem:[%s2 + $0x60] sm:$0xf] %v483
    %516 = vst [vmem:[%s2 + $0x64] sm:$0xf] %v484
    %517 = vst [vmem:[%s2 + $0x68] sm:$0xf] %v485
    %518 = vst [vmem:[%s2 + $0x6c] sm:$0xf] %v486
    %519 = vst [vmem:[%s2 + $0x70] sm:$0xf] %v487
    %520 = vst [vmem:[%s2 + $0x74] sm:$0xf] %v488
    %521 = vst [vmem:[%s2 + $0x78] sm:$0xf] %v489
    %522 = vst [vmem:[%s2 + $0x7c] sm:$0xf] %v490
    // Predicated region
    $region51: #{linear_snowball_forward.6} parent=1 // pred_check
      _
    $region52: #{linear_snowball_forward.6} parent=1 // pred_check_branch
      %524 = sbr.rel (0) target = $region54
    $region53: #{linear_snowball_forward.6} parent=1 // pred_region
      _
    $region54: #{linear_snowball_forward.6} parent=1 // pred_fallthru
      _
    // Predicated region
    $region55: #{linear_snowball_forward.6} parent=1 // pred_check
      _
    $region56: #{linear_snowball_forward.6} parent=1 // pred_check_branch
      %526 = sbr.rel (0) target = $region58
    $region57: #{linear_snowball_forward.6} parent=1 // pred_region
      _
    $region58: #{linear_snowball_forward.6} parent=1 // pred_fallthru
      _

// kernel: linear_snowball_forward.7
$region0: #{linear_snowball_forward.7}
  #allocation0 [shape = 'u32[]', space=smem, size = 0x4, offset = 0x4, fixed_abs, tag = 'smem constant byte address 0x4 - core index']
  #allocation1 [shape = 'u32[72,128]{1,0:T(1,128)}', space=vmem, size = 0x9000, scoped, tag = 'internal scratch']
  #allocation2 [shape = 'f32[256,128]{1,0:T(8,128)}', space=vmem, size = 0x20000, scoped, tag = 'scratch operand']
  %s0 = inlined_call_operand.vmem [shape: bf16[256,256], index: 0, kind: input, shape index: {}]
  %s1 = inlined_call_operand.vmem [shape: bf16[256,128], index: 1, kind: input, shape index: {}]
  %s2 = inlined_call_operand.vmem [shape: f32[1,128], index: 2, kind: input, shape index: {}]
  %s3 = inlined_call_operand.vmem [shape: bf16[256,384], index: 3, kind: input, shape index: {}, may-alias: {3,4}]
  %s4 = inlined_call_operand.vmem [shape: bf16[256,384], index: 4, kind: output, shape index: {}, may-alias: {3,4}]
  %s5 = sld [smem:[#allocation0]]
  $region67: #{linear_snowball_forward.7} parent=0
    _
  %s7 = ssub.s32 1, %s5
  %s8 = scalar_select 0, %s7, %s5
  $region1: #{linear_snowball_forward.7} parent=0
    #allocation3 [shape = 'u8[65536]{0}', space=vmem, size = 0x10000, scoped, tag = 'output window, operand 0, single buffered']
    // Predicated region
    $region2: #{linear_snowball_forward.7} parent=1 // pred_check
      _
    $region3: #{linear_snowball_forward.7} parent=1 // pred_check_branch
      %10 = sbr.rel (0) target = $region5
    $region4: #{linear_snowball_forward.7} parent=1 // pred_region
      _
    $region5: #{linear_snowball_forward.7} parent=1 // pred_fallthru
      _
    // Predicated region
    $region6: #{linear_snowball_forward.7} parent=1 // pred_check
      _
    $region7: #{linear_snowball_forward.7} parent=1 // pred_check_branch
      %12 = sbr.rel (0) target = $region9
    $region8: #{linear_snowball_forward.7} parent=1 // pred_region
      _
    $region9: #{linear_snowball_forward.7} parent=1 // pred_fallthru
      _
    // Predicated region
    $region10: #{linear_snowball_forward.7} parent=1 // pred_check
      _
    $region11: #{linear_snowball_forward.7} parent=1 // pred_check_branch
      %14 = sbr.rel (0) target = $region13
    $region12: #{linear_snowball_forward.7} parent=1 // pred_region
      _
    $region13: #{linear_snowball_forward.7} parent=1 // pred_fallthru
      _
    %p15 = scmp.eq.s32.totalorder 0, 0
    // Predicated region
    $region14: #{linear_snowball_forward.7} parent=1 // pred_check
      %p16 = pneg %p15
    $region15: #{linear_snowball_forward.7} parent=1 // pred_check_branch
      %18 = sbr.rel (%p16) target = $region17
    $region16: #{linear_snowball_forward.7} parent=1 // pred_region
      %19 = vst [vmem:[#allocation2] sm:$0xff] 0.0
      %20 = vst [vmem:[#allocation2 + $0x8] sm:$0xff] 0.0
      %21 = vst [vmem:[#allocation2 + $0x10] sm:$0xff] 0.0
      %22 = vst [vmem:[#allocation2 + $0x18] sm:$0xff] 0.0
      %23 = vst [vmem:[#allocation2 + $0x20] sm:$0xff] 0.0
      %24 = vst [vmem:[#allocation2 + $0x28] sm:$0xff] 0.0
      %25 = vst [vmem:[#allocation2 + $0x30] sm:$0xff] 0.0
      %26 = vst [vmem:[#allocation2 + $0x38] sm:$0xff] 0.0
      %27 = vst [vmem:[#allocation2 + $0x40] sm:$0xff] 0.0
      %28 = vst [vmem:[#allocation2 + $0x48] sm:$0xff] 0.0
      %29 = vst [vmem:[#allocation2 + $0x50] sm:$0xff] 0.0
      %30 = vst [vmem:[#allocation2 + $0x58] sm:$0xff] 0.0
      %31 = vst [vmem:[#allocation2 + $0x60] sm:$0xff] 0.0
      %32 = vst [vmem:[#allocation2 + $0x68] sm:$0xff] 0.0
      %33 = vst [vmem:[#allocation2 + $0x70] sm:$0xff] 0.0
      %34 = vst [vmem:[#allocation2 + $0x78] sm:$0xff] 0.0
      %35 = vst [vmem:[#allocation2 + $0x80] sm:$0xff] 0.0
      %36 = vst [vmem:[#allocation2 + $0x88] sm:$0xff] 0.0
      %37 = vst [vmem:[#allocation2 + $0x90] sm:$0xff] 0.0
      %38 = vst [vmem:[#allocation2 + $0x98] sm:$0xff] 0.0
      %39 = vst [vmem:[#allocation2 + $0xa0] sm:$0xff] 0.0
      %40 = vst [vmem:[#allocation2 + $0xa8] sm:$0xff] 0.0
      %41 = vst [vmem:[#allocation2 + $0xb0] sm:$0xff] 0.0
      %42 = vst [vmem:[#allocation2 + $0xb8] sm:$0xff] 0.0
      %43 = vst [vmem:[#allocation2 + $0xc0] sm:$0xff] 0.0
      %44 = vst [vmem:[#allocation2 + $0xc8] sm:$0xff] 0.0
      %45 = vst [vmem:[#allocation2 + $0xd0] sm:$0xff] 0.0
      %46 = vst [vmem:[#allocation2 + $0xd8] sm:$0xff] 0.0
      %47 = vst [vmem:[#allocation2 + $0xe0] sm:$0xff] 0.0
      %48 = vst [vmem:[#allocation2 + $0xe8] sm:$0xff] 0.0
      %49 = vst [vmem:[#allocation2 + $0xf0] sm:$0xff] 0.0
      %50 = vst [vmem:[#allocation2 + $0xf8] sm:$0xff] 0.0
    $region17: #{linear_snowball_forward.7} parent=1 // pred_fallthru
      _
    %s51 = smul.u32 0, 256
    %s52 = sshra.s32 %s51, 3
    %s53 = sand.u32 %s51, 7
    %s54 = smul.addr %s52, 4
    %s55 = scalar_lea.vmem %s1, %s54
    %v56 = vld [vmem:[%s55] sm:$0xf]
    %v57 = vld [vmem:[%s55 + $0x4] sm:$0xf]
    %v58 = vld [vmem:[%s55 + $0x8] sm:$0xf]
    %v59 = vld [vmem:[%s55 + $0xc] sm:$0xf]
    %v60 = vld [vmem:[%s55 + $0x10] sm:$0xf]
    %v61 = vld [vmem:[%s55 + $0x14] sm:$0xf]
    %v62 = vld [vmem:[%s55 + $0x18] sm:$0xf]
    %v63 = vld [vmem:[%s55 + $0x1c] sm:$0xf]
    %v64 = vld [vmem:[%s55 + $0x20] sm:$0xf]
    %v65 = vld [vmem:[%s55 + $0x24] sm:$0xf]
    %v66 = vld [vmem:[%s55 + $0x28] sm:$0xf]
    %v67 = vld [vmem:[%s55 + $0x2c] sm:$0xf]
    %v68 = vld [vmem:[%s55 + $0x30] sm:$0xf]
    %v69 = vld [vmem:[%s55 + $0x34] sm:$0xf]
    %v70 = vld [vmem:[%s55 + $0x38] sm:$0xf]
    %v71 = vld [vmem:[%s55 + $0x3c] sm:$0xf]
    %v72 = vld [vmem:[%s55 + $0x40] sm:$0xf]
    %v73 = vld [vmem:[%s55 + $0x44] sm:$0xf]
    %v74 = vld [vmem:[%s55 + $0x48] sm:$0xf]
    %v75 = vld [vmem:[%s55 + $0x4c] sm:$0xf]
    %v76 = vld [vmem:[%s55 + $0x50] sm:$0xf]
    %v77 = vld [vmem:[%s55 + $0x54] sm:$0xf]
    %v78 = vld [vmem:[%s55 + $0x58] sm:$0xf]
    %v79 = vld [vmem:[%s55 + $0x5c] sm:$0xf]
    %v80 = vld [vmem:[%s55 + $0x60] sm:$0xf]
    %v81 = vld [vmem:[%s55 + $0x64] sm:$0xf]
    %v82 = vld [vmem:[%s55 + $0x68] sm:$0xf]
    %v83 = vld [vmem:[%s55 + $0x6c] sm:$0xf]
    %v84 = vld [vmem:[%s55 + $0x70] sm:$0xf]
    %v85 = vld [vmem:[%s55 + $0x74] sm:$0xf]
    %v86 = vld [vmem:[%s55 + $0x78] sm:$0xf]
    %v87 = vld [vmem:[%s55 + $0x7c] sm:$0xf]
    %v88 = vld [vmem:[#allocation2] sm:$0xff]
    %v89 = vld [vmem:[#allocation2 + $0x8] sm:$0xff]
    %v90 = vld [vmem:[#allocation2 + $0x10] sm:$0xff]
    %v91 = vld [vmem:[#allocation2 + $0x18] sm:$0xff]
    %v92 = vld [vmem:[#allocation2 + $0x20] sm:$0xff]
    %v93 = vld [vmem:[#allocation2 + $0x28] sm:$0xff]
    %v94 = vld [vmem:[#allocation2 + $0x30] sm:$0xff]
    %v95 = vld [vmem:[#allocation2 + $0x38] sm:$0xff]
    %v96 = vld [vmem:[#allocation2 + $0x40] sm:$0xff]
    %v97 = vld [vmem:[#allocation2 + $0x48] sm:$0xff]
    %v98 = vld [vmem:[#allocation2 + $0x50] sm:$0xff]
    %v99 = vld [vmem:[#allocation2 + $0x58] sm:$0xff]
    %v100 = vld [vmem:[#allocation2 + $0x60] sm:$0xff]
    %v101 = vld [vmem:[#allocation2 + $0x68] sm:$0xff]
    %v102 = vld [vmem:[#allocation2 + $0x70] sm:$0xff]
    %v103 = vld [vmem:[#allocation2 + $0x78] sm:$0xff]
    %v104 = vld [vmem:[#allocation2 + $0x80] sm:$0xff]
    %v105 = vld [vmem:[#allocation2 + $0x88] sm:$0xff]
    %v106 = vld [vmem:[#allocation2 + $0x90] sm:$0xff]
    %v107 = vld [vmem:[#allocation2 + $0x98] sm:$0xff]
    %v108 = vld [vmem:[#allocation2 + $0xa0] sm:$0xff]
    %v109 = vld [vmem:[#allocation2 + $0xa8] sm:$0xff]
    %v110 = vld [vmem:[#allocation2 + $0xb0] sm:$0xff]
    %v111 = vld [vmem:[#allocation2 + $0xb8] sm:$0xff]
    %v112 = vld [vmem:[#allocation2 + $0xc0] sm:$0xff]
    %v113 = vld [vmem:[#allocation2 + $0xc8] sm:$0xff]
    %v114 = vld [vmem:[#allocation2 + $0xd0] sm:$0xff]
    %v115 = vld [vmem:[#allocation2 + $0xd8] sm:$0xff]
    %v116 = vld [vmem:[#allocation2 + $0xe0] sm:$0xff]
    %v117 = vld [vmem:[#allocation2 + $0xe8] sm:$0xff]
    %v118 = vld [vmem:[#allocation2 + $0xf0] sm:$0xff]
    %v119 = vld [vmem:[#allocation2 + $0xf8] sm:$0xff]
    %v120 = vld [vmem:[%s0] sm:$0xff]
    %v121 = vld [vmem:[%s0 + $0x8] sm:$0xff]
    %v122 = vld [vmem:[%s0 + $0x10] sm:$0xff]
    %v123 = vld [vmem:[%s0 + $0x18] sm:$0xff]
    %v124 = vld [vmem:[%s0 + $0x20] sm:$0xff]
    %v125 = vld [vmem:[%s0 + $0x28] sm:$0xff]
    %v126 = vld [vmem:[%s0 + $0x30] sm:$0xff]
    %v127 = vld [vmem:[%s0 + $0x38] sm:$0xff]
    %v128 = vld [vmem:[%s0 + $0x40] sm:$0xff]
    %v129 = vld [vmem:[%s0 + $0x48] sm:$0xff]
    %v130 = vld [vmem:[%s0 + $0x50] sm:$0xff]
    %v131 = vld [vmem:[%s0 + $0x58] sm:$0xff]
    %v132 = vld [vmem:[%s0 + $0x60] sm:$0xff]
    %v133 = vld [vmem:[%s0 + $0x68] sm:$0xff]
    %v134 = vld [vmem:[%s0 + $0x70] sm:$0xff]
    %v135 = vld [vmem:[%s0 + $0x78] sm:$0xff]
    %v136 = vld [vmem:[%s0 + $0x80] sm:$0xff]
    %v137 = vld [vmem:[%s0 + $0x88] sm:$0xff]
    %v138 = vld [vmem:[%s0 + $0x90] sm:$0xff]
    %v139 = vld [vmem:[%s0 + $0x98] sm:$0xff]
    %v140 = vld [vmem:[%s0 + $0xa0] sm:$0xff]
    %v141 = vld [vmem:[%s0 + $0xa8] sm:$0xff]
    %v142 = vld [vmem:[%s0 + $0xb0] sm:$0xff]
    %v143 = vld [vmem:[%s0 + $0xb8] sm:$0xff]
    %v144 = vld [vmem:[%s0 + $0xc0] sm:$0xff]
    %v145 = vld [vmem:[%s0 + $0xc8] sm:$0xff]
    %v146 = vld [vmem:[%s0 + $0xd0] sm:$0xff]
    %v147 = vld [vmem:[%s0 + $0xd8] sm:$0xff]
    %v148 = vld [vmem:[%s0 + $0xe0] sm:$0xff]
    %v149 = vld [vmem:[%s0 + $0xe8] sm:$0xff]
    %v150 = vld [vmem:[%s0 + $0xf0] sm:$0xff]
    %v151 = vld [vmem:[%s0 + $0xf8] sm:$0xff]
    %v184 = vunpack.c.l.b16 %v120
    %v185 = vunpack.c.h.b16 %v120
    %v186 = vunpack.c.l.b16 %v121
    %v187 = vunpack.c.h.b16 %v121
    %v188 = vunpack.c.l.b16 %v122
    %v189 = vunpack.c.h.b16 %v122
    %v190 = vunpack.c.l.b16 %v123
    %v191 = vunpack.c.h.b16 %v123
    %v192 = vunpack.c.l.b16 %v124
    %v193 = vunpack.c.h.b16 %v124
    %v194 = vunpack.c.l.b16 %v125
    %v195 = vunpack.c.h.b16 %v125
    %v196 = vunpack.c.l.b16 %v126
    %v197 = vunpack.c.h.b16 %v126
    %v198 = vunpack.c.l.b16 %v127
    %v199 = vunpack.c.h.b16 %v127
    %v200 = vunpack.c.l.b16 %v128
    %v201 = vunpack.c.h.b16 %v128
    %v202 = vunpack.c.l.b16 %v129
    %v203 = vunpack.c.h.b16 %v129
    %v204 = vunpack.c.l.b16 %v130
    %v205 = vunpack.c.h.b16 %v130
    %v206 = vunpack.c.l.b16 %v131
    %v207 = vunpack.c.h.b16 %v131
    %v208 = vunpack.c.l.b16 %v132
    %v209 = vunpack.c.h.b16 %v132
    %v210 = vunpack.c.l.b16 %v133
    %v211 = vunpack.c.h.b16 %v133
    %v212 = vunpack.c.l.b16 %v134
    %v213 = vunpack.c.h.b16 %v134
    %v214 = vunpack.c.l.b16 %v135
    %v215 = vunpack.c.h.b16 %v135
    %v216 = vunpack.c.l.b16 %v136
    %v217 = vunpack.c.h.b16 %v136
    %v218 = vunpack.c.l.b16 %v137
    %v219 = vunpack.c.h.b16 %v137
    %v220 = vunpack.c.l.b16 %v138
    %v221 = vunpack.c.h.b16 %v138
    %v222 = vunpack.c.l.b16 %v139
    %v223 = vunpack.c.h.b16 %v139
    %v224 = vunpack.c.l.b16 %v140
    %v225 = vunpack.c.h.b16 %v140
    %v226 = vunpack.c.l.b16 %v141
    %v227 = vunpack.c.h.b16 %v141
    %v228 = vunpack.c.l.b16 %v142
    %v229 = vunpack.c.h.b16 %v142
    %v230 = vunpack.c.l.b16 %v143
    %v231 = vunpack.c.h.b16 %v143
    %v232 = vunpack.c.l.b16 %v144
    %v233 = vunpack.c.h.b16 %v144
    %v234 = vunpack.c.l.b16 %v145
    %v235 = vunpack.c.h.b16 %v145
    %v236 = vunpack.c.l.b16 %v146
    %v237 = vunpack.c.h.b16 %v146
    %v238 = vunpack.c.l.b16 %v147
    %v239 = vunpack.c.h.b16 %v147
    %v240 = vunpack.c.l.b16 %v148
    %v241 = vunpack.c.h.b16 %v148
    %v242 = vunpack.c.l.b16 %v149
    %v243 = vunpack.c.h.b16 %v149
    %v244 = vunpack.c.l.b16 %v150
    %v245 = vunpack.c.h.b16 %v150
    %v246 = vunpack.c.l.b16 %v151
    %v247 = vunpack.c.h.b16 %v151
    %v248 = vpack.c.b16 %v186, %v184
    %v249 = vpack.c.b16 %v187, %v185
    %v250 = vpack.c.b16 %v190, %v188
    %v251 = vpack.c.b16 %v191, %v189
    %v252 = vpack.c.b16 %v194, %v192
    %v253 = vpack.c.b16 %v195, %v193
    %v254 = vpack.c.b16 %v198, %v196
    %v255 = vpack.c.b16 %v199, %v197
    %v256 = vpack.c.b16 %v202, %v200
    %v257 = vpack.c.b16 %v203, %v201
    %v258 = vpack.c.b16 %v206, %v204
    %v259 = vpack.c.b16 %v207, %v205
    %v260 = vpack.c.b16 %v210, %v208
    %v261 = vpack.c.b16 %v211, %v209
    %v262 = vpack.c.b16 %v214, %v212
    %v263 = vpack.c.b16 %v215, %v213
    %v264 = vpack.c.b16 %v218, %v216
    %v265 = vpack.c.b16 %v219, %v217
    %v266 = vpack.c.b16 %v222, %v220
    %v267 = vpack.c.b16 %v223, %v221
    %v268 = vpack.c.b16 %v226, %v224
    %v269 = vpack.c.b16 %v227, %v225
    %v270 = vpack.c.b16 %v230, %v228
    %v271 = vpack.c.b16 %v231, %v229
    %v272 = vpack.c.b16 %v234, %v232
    %v273 = vpack.c.b16 %v235, %v233
    %v274 = vpack.c.b16 %v238, %v236
    %v275 = vpack.c.b16 %v239, %v237
    %v276 = vpack.c.b16 %v242, %v240
    %v277 = vpack.c.b16 %v243, %v241
    %v278 = vpack.c.b16 %v246, %v244
    %v279 = vpack.c.b16 %v247, %v245
    %v344 = vunpack.c.l.b16 %v56
    %v345 = vunpack.c.l.b16 %v57
    %v346 = vunpack.c.l.b16 %v58
    %v347 = vunpack.c.l.b16 %v59
    %v348 = vunpack.c.l.b16 %v60
    %v349 = vunpack.c.l.b16 %v61
    %v350 = vunpack.c.l.b16 %v62
    %v351 = vunpack.c.l.b16 %v63
    %v352 = vunpack.c.l.b16 %v64
    %v353 = vunpack.c.l.b16 %v65
    %v354 = vunpack.c.l.b16 %v66
    %v355 = vunpack.c.l.b16 %v67
    %v356 = vunpack.c.l.b16 %v68
    %v357 = vunpack.c.l.b16 %v69
    %v358 = vunpack.c.l.b16 %v70
    %v359 = vunpack.c.l.b16 %v71
    %v360 = vunpack.c.l.b16 %v72
    %v361 = vunpack.c.l.b16 %v73
    %v362 = vunpack.c.l.b16 %v74
    %v363 = vunpack.c.l.b16 %v75
    %v364 = vunpack.c.l.b16 %v76
    %v365 = vunpack.c.l.b16 %v77
    %v366 = vunpack.c.l.b16 %v78
    %v367 = vunpack.c.l.b16 %v79
    %v368 = vunpack.c.l.b16 %v80
    %v369 = vunpack.c.l.b16 %v81
    %v370 = vunpack.c.l.b16 %v82
    %v371 = vunpack.c.l.b16 %v83
    %v372 = vunpack.c.l.b16 %v84
    %v373 = vunpack.c.l.b16 %v85
    %v374 = vunpack.c.l.b16 %v86
    %v375 = vunpack.c.l.b16 %v87
    %v376 = vpack.c.b16 %v345, %v344
    %v377 = vpack.c.b16 %v347, %v346
    %v378 = vpack.c.b16 %v349, %v348
    %v379 = vpack.c.b16 %v351, %v350
    %v380 = vpack.c.b16 %v353, %v352
    %v381 = vpack.c.b16 %v355, %v354
    %v382 = vpack.c.b16 %v357, %v356
    %v383 = vpack.c.b16 %v359, %v358
    %v384 = vpack.c.b16 %v361, %v360
    %v385 = vpack.c.b16 %v363, %v362
    %v386 = vpack.c.b16 %v365, %v364
    %v387 = vpack.c.b16 %v367, %v366
    %v388 = vpack.c.b16 %v369, %v368
    %v389 = vpack.c.b16 %v371, %v370
    %v390 = vpack.c.b16 %v373, %v372
    %v391 = vpack.c.b16 %v375, %v374
    %408 = vmatpush.bf16.msra.mxu0 %v383
    %409 = vmatpush.bf16.msra.mxu0 %v382
    %410 = vmatpush.bf16.msra.mxu0 %v381
    %411 = vmatpush.bf16.msra.mxu0 %v380
    %412 = vmatpush.bf16.msra.mxu0 %v379
    %413 = vmatpush.bf16.msra.mxu0 %v378
    %414 = vmatpush.bf16.msra.mxu0 %v377
    %415 = vmatpush.bf16.msra.mxu0 %v376
    %416 = vmatmul.bf16.gmra.mxu0 %v248
    %v417 = vpop.f32.mrf.mxu0
    %v418 = vadd.f32 0.0, %v417
    %v419 = vpop.f32.mrf.mxu0
    %v420 = vadd.f32 0.0, %v419
    %421 = vmatmul.bf16.gmra.mxu0 %v250
    %v422 = vpop.f32.mrf.mxu0
    %v423 = vadd.f32 0.0, %v422
    %v424 = vpop.f32.mrf.mxu0
    %v425 = vadd.f32 0.0, %v424
    %426 = vmatmul.bf16.gmra.mxu0 %v252
    %v427 = vpop.f32.mrf.mxu0
    %v428 = vadd.f32 0.0, %v427
    %v429 = vpop.f32.mrf.mxu0
    %v430 = vadd.f32 0.0, %v429
    %431 = vmatmul.bf16.gmra.mxu0 %v254
    %v432 = vpop.f32.mrf.mxu0
    %v433 = vadd.f32 0.0, %v432
    %v434 = vpop.f32.mrf.mxu0
    %v435 = vadd.f32 0.0, %v434
    %436 = vmatmul.bf16.gmra.mxu0 %v256
    %v437 = vpop.f32.mrf.mxu0
    %v438 = vadd.f32 0.0, %v437
    %v439 = vpop.f32.mrf.mxu0
    %v440 = vadd.f32 0.0, %v439
    %441 = vmatmul.bf16.gmra.mxu0 %v258
    %v442 = vpop.f32.mrf.mxu0
    %v443 = vadd.f32 0.0, %v442
    %v444 = vpop.f32.mrf.mxu0
    %v445 = vadd.f32 0.0, %v444
    %446 = vmatmul.bf16.gmra.mxu0 %v260
    %v447 = vpop.f32.mrf.mxu0
    %v448 = vadd.f32 0.0, %v447
    %v449 = vpop.f32.mrf.mxu0
    %v450 = vadd.f32 0.0, %v449
    %451 = vmatmul.bf16.gmra.mxu0 %v262
    %v452 = vpop.f32.mrf.mxu0
    %v453 = vadd.f32 0.0, %v452
    %v454 = vpop.f32.mrf.mxu0
    %v455 = vadd.f32 0.0, %v454
    %456 = vmatmul.bf16.gmra.mxu0 %v264
    %v457 = vpop.f32.mrf.mxu0
    %v458 = vadd.f32 0.0, %v457
    %v459 = vpop.f32.mrf.mxu0
    %v460 = vadd.f32 0.0, %v459
    %461 = vmatmul.bf16.gmra.mxu0 %v266
    %v462 = vpop.f32.mrf.mxu0
    %v463 = vadd.f32 0.0, %v462
    %v464 = vpop.f32.mrf.mxu0
    %v465 = vadd.f32 0.0, %v464
    %466 = vmatmul.bf16.gmra.mxu0 %v268
    %v467 = vpop.f32.mrf.mxu0
    %v468 = vadd.f32 0.0, %v467
    %v469 = vpop.f32.mrf.mxu0
    %v470 = vadd.f32 0.0, %v469
    %471 = vmatmul.bf16.gmra.mxu0 %v270
    %v472 = vpop.f32.mrf.mxu0
    %v473 = vadd.f32 0.0, %v472
    %v474 = vpop.f32.mrf.mxu0
    %v475 = vadd.f32 0.0, %v474
    %476 = vmatmul.bf16.gmra.mxu0 %v272
    %v477 = vpop.f32.mrf.mxu0
    %v478 = vadd.f32 0.0, %v477
    %v479 = vpop.f32.mrf.mxu0
    %v480 = vadd.f32 0.0, %v479
    %481 = vmatmul.bf16.gmra.mxu0 %v274
    %v482 = vpop.f32.mrf.mxu0
    %v483 = vadd.f32 0.0, %v482
    %v484 = vpop.f32.mrf.mxu0
    %v485 = vadd.f32 0.0, %v484
    %486 = vmatmul.bf16.gmra.mxu0 %v276
    %v487 = vpop.f32.mrf.mxu0
    %v488 = vadd.f32 0.0, %v487
    %v489 = vpop.f32.mrf.mxu0
    %v490 = vadd.f32 0.0, %v489
    %491 = vmatmul.bf16.gmra.mxu0 %v278
    %v492 = vpop.f32.mrf.mxu0
    %v493 = vadd.f32 0.0, %v492
    %v494 = vpop.f32.mrf.mxu0
    %v495 = vadd.f32 0.0, %v494
    %496 = vdwg.mxu0
    %497 = vmatpush.bf16.msra.mxu0 %v391
    %498 = vmatpush.bf16.msra.mxu0 %v390
    %499 = vmatpush.bf16.msra.mxu0 %v389
    %500 = vmatpush.bf16.msra.mxu0 %v388
    %501 = vmatpush.bf16.msra.mxu0 %v387
    %502 = vmatpush.bf16.msra.mxu0 %v386
    %503 = vmatpush.bf16.msra.mxu0 %v385
    %504 = vmatpush.bf16.msra.mxu0 %v384
    %505 = vmatmul.bf16.gmra.mxu0 %v249
    %v506 = vpop.f32.mrf.mxu0
    %v507 = vadd.f32 %v418, %v506
    %v508 = vpop.f32.mrf.mxu0
    %v509 = vadd.f32 %v420, %v508
    %510 = vmatmul.bf16.gmra.mxu0 %v251
    %v511 = vpop.f32.mrf.mxu0
    %v512 = vadd.f32 %v423, %v511
    %v513 = vpop.f32.mrf.mxu0
    %v514 = vadd.f32 %v425, %v513
    %515 = vmatmul.bf16.gmra.mxu0 %v253
    %v516 = vpop.f32.mrf.mxu0
    %v517 = vadd.f32 %v428, %v516
    %v518 = vpop.f32.mrf.mxu0
    %v519 = vadd.f32 %v430, %v518
    %520 = vmatmul.bf16.gmra.mxu0 %v255
    %v521 = vpop.f32.mrf.mxu0
    %v522 = vadd.f32 %v433, %v521
    %v523 = vpop.f32.mrf.mxu0
    %v524 = vadd.f32 %v435, %v523
    %525 = vmatmul.bf16.gmra.mxu0 %v257
    %v526 = vpop.f32.mrf.mxu0
    %v527 = vadd.f32 %v438, %v526
    %v528 = vpop.f32.mrf.mxu0
    %v529 = vadd.f32 %v440, %v528
    %530 = vmatmul.bf16.gmra.mxu0 %v259
    %v531 = vpop.f32.mrf.mxu0
    %v532 = vadd.f32 %v443, %v531
    %v533 = vpop.f32.mrf.mxu0
    %v534 = vadd.f32 %v445, %v533
    %535 = vmatmul.bf16.gmra.mxu0 %v261
    %v536 = vpop.f32.mrf.mxu0
    %v537 = vadd.f32 %v448, %v536
    %v538 = vpop.f32.mrf.mxu0
    %v539 = vadd.f32 %v450, %v538
    %540 = vmatmul.bf16.gmra.mxu0 %v263
    %v541 = vpop.f32.mrf.mxu0
    %v542 = vadd.f32 %v453, %v541
    %v543 = vpop.f32.mrf.mxu0
    %v544 = vadd.f32 %v455, %v543
    %545 = vmatmul.bf16.gmra.mxu0 %v265
    %v546 = vpop.f32.mrf.mxu0
    %v547 = vadd.f32 %v458, %v546
    %v548 = vpop.f32.mrf.mxu0
    %v549 = vadd.f32 %v460, %v548
    %550 = vmatmul.bf16.gmra.mxu0 %v267
    %v551 = vpop.f32.mrf.mxu0
    %v552 = vadd.f32 %v463, %v551
    %v553 = vpop.f32.mrf.mxu0
    %v554 = vadd.f32 %v465, %v553
    %555 = vmatmul.bf16.gmra.mxu0 %v269
    %v556 = vpop.f32.mrf.mxu0
    %v557 = vadd.f32 %v468, %v556
    %v558 = vpop.f32.mrf.mxu0
    %v559 = vadd.f32 %v470, %v558
    %560 = vmatmul.bf16.gmra.mxu0 %v271
    %v561 = vpop.f32.mrf.mxu0
    %v562 = vadd.f32 %v473, %v561
    %v563 = vpop.f32.mrf.mxu0
    %v564 = vadd.f32 %v475, %v563
    %565 = vmatmul.bf16.gmra.mxu0 %v273
    %v566 = vpop.f32.mrf.mxu0
    %v567 = vadd.f32 %v478, %v566
    %v568 = vpop.f32.mrf.mxu0
    %v569 = vadd.f32 %v480, %v568
    %570 = vmatmul.bf16.gmra.mxu0 %v275
    %v571 = vpop.f32.mrf.mxu0
    %v572 = vadd.f32 %v483, %v571
    %v573 = vpop.f32.mrf.mxu0
    %v574 = vadd.f32 %v485, %v573
    %575 = vmatmul.bf16.gmra.mxu0 %v277
    %v576 = vpop.f32.mrf.mxu0
    %v577 = vadd.f32 %v488, %v576
    %v578 = vpop.f32.mrf.mxu0
    %v579 = vadd.f32 %v490, %v578
    %580 = vmatmul.bf16.gmra.mxu0 %v279
    %v581 = vpop.f32.mrf.mxu0
    %v582 = vadd.f32 %v493, %v581
    %v583 = vpop.f32.mrf.mxu0
    %v584 = vadd.f32 %v495, %v583
    %585 = vdwg.mxu0
    %v586 = vadd.f32 %v88, %v507
    %v587 = vadd.f32 %v89, %v509
    %v588 = vadd.f32 %v90, %v512
    %v589 = vadd.f32 %v91, %v514
    %v590 = vadd.f32 %v92, %v517
    %v591 = vadd.f32 %v93, %v519
    %v592 = vadd.f32 %v94, %v522
    %v593 = vadd.f32 %v95, %v524
    %v594 = vadd.f32 %v96, %v527
    %v595 = vadd.f32 %v97, %v529
    %v596 = vadd.f32 %v98, %v532
    %v597 = vadd.f32 %v99, %v534
    %v598 = vadd.f32 %v100, %v537
    %v599 = vadd.f32 %v101, %v539
    %v600 = vadd.f32 %v102, %v542
    %v601 = vadd.f32 %v103, %v544
    %v602 = vadd.f32 %v104, %v547
    %v603 = vadd.f32 %v105, %v549
    %v604 = vadd.f32 %v106, %v552
    %v605 = vadd.f32 %v107, %v554
    %v606 = vadd.f32 %v108, %v557
    %v607 = vadd.f32 %v109, %v559
    %v608 = vadd.f32 %v110, %v562
    %v609 = vadd.f32 %v111, %v564
    %v610 = vadd.f32 %v112, %v567
    %v611 = vadd.f32 %v113, %v569
    %v612 = vadd.f32 %v114, %v572
    %v613 = vadd.f32 %v115, %v574
    %v614 = vadd.f32 %v116, %v577
    %v615 = vadd.f32 %v117, %v579
    %v616 = vadd.f32 %v118, %v582
    %v617 = vadd.f32 %v119, %v584
    %618 = vst [vmem:[#allocation2] sm:$0xff] %v586
    %619 = vst [vmem:[#allocation2 + $0x8] sm:$0xff] %v587
    %620 = vst [vmem:[#allocation2 + $0x10] sm:$0xff] %v588
    %621 = vst [vmem:[#allocation2 + $0x18] sm:$0xff] %v589
    %622 = vst [vmem:[#allocation2 + $0x20] sm:$0xff] %v590
    %623 = vst [vmem:[#allocation2 + $0x28] sm:$0xff] %v591
    %624 = vst [vmem:[#allocation2 + $0x30] sm:$0xff] %v592
    %625 = vst [vmem:[#allocation2 + $0x38] sm:$0xff] %v593
    %626 = vst [vmem:[#allocation2 + $0x40] sm:$0xff] %v594
    %627 = vst [vmem:[#allocation2 + $0x48] sm:$0xff] %v595
    %628 = vst [vmem:[#allocation2 + $0x50] sm:$0xff] %v596
    %629 = vst [vmem:[#allocation2 + $0x58] sm:$0xff] %v597
    %630 = vst [vmem:[#allocation2 + $0x60] sm:$0xff] %v598
    %631 = vst [vmem:[#allocation2 + $0x68] sm:$0xff] %v599
    %632 = vst [vmem:[#allocation2 + $0x70] sm:$0xff] %v600
    %633 = vst [vmem:[#allocation2 + $0x78] sm:$0xff] %v601
    %634 = vst [vmem:[#allocation2 + $0x80] sm:$0xff] %v602
    %635 = vst [vmem:[#allocation2 + $0x88] sm:$0xff] %v603
    %636 = vst [vmem:[#allocation2 + $0x90] sm:$0xff] %v604
    %637 = vst [vmem:[#allocation2 + $0x98] sm:$0xff] %v605
    %638 = vst [vmem:[#allocation2 + $0xa0] sm:$0xff] %v606
    %639 = vst [vmem:[#allocation2 + $0xa8] sm:$0xff] %v607
    %640 = vst [vmem:[#allocation2 + $0xb0] sm:$0xff] %v608
    %641 = vst [vmem:[#allocation2 + $0xb8] sm:$0xff] %v609
    %642 = vst [vmem:[#allocation2 + $0xc0] sm:$0xff] %v610
    %643 = vst [vmem:[#allocation2 + $0xc8] sm:$0xff] %v611
    %644 = vst [vmem:[#allocation2 + $0xd0] sm:$0xff] %v612
    %645 = vst [vmem:[#allocation2 + $0xd8] sm:$0xff] %v613
    %646 = vst [vmem:[#allocation2 + $0xe0] sm:$0xff] %v614
    %647 = vst [vmem:[#allocation2 + $0xe8] sm:$0xff] %v615
    %648 = vst [vmem:[#allocation2 + $0xf0] sm:$0xff] %v616
    %649 = vst [vmem:[#allocation2 + $0xf8] sm:$0xff] %v617
    // Predicated region
    $region18: #{linear_snowball_forward.7} parent=1 // pred_check
      %p650 = pneg %p15
    $region19: #{linear_snowball_forward.7} parent=1 // pred_check_branch
      %652 = sbr.rel (%p650) target = $region21
    $region20: #{linear_snowball_forward.7} parent=1 // pred_region
      %v653 = vld [vmem:[#allocation2] sm:$0xff]
      %v654 = vld [vmem:[#allocation2 + $0x8] sm:$0xff]
      %v655 = vld [vmem:[#allocation2 + $0x10] sm:$0xff]
      %v656 = vld [vmem:[#allocation2 + $0x18] sm:$0xff]
      %v657 = vld [vmem:[#allocation2 + $0x20] sm:$0xff]
      %v658 = vld [vmem:[#allocation2 + $0x28] sm:$0xff]
      %v659 = vld [vmem:[#allocation2 + $0x30] sm:$0xff]
      %v660 = vld [vmem:[#allocation2 + $0x38] sm:$0xff]
      %v661 = vld [vmem:[#allocation2 + $0x40] sm:$0xff]
      %v662 = vld [vmem:[#allocation2 + $0x48] sm:$0xff]
      %v663 = vld [vmem:[#allocation2 + $0x50] sm:$0xff]
      %v664 = vld [vmem:[#allocation2 + $0x58] sm:$0xff]
      %v665 = vld [vmem:[#allocation2 + $0x60] sm:$0xff]
      %v666 = vld [vmem:[#allocation2 + $0x68] sm:$0xff]
      %v667 = vld [vmem:[#allocation2 + $0x70] sm:$0xff]
      %v668 = vld [vmem:[#allocation2 + $0x78] sm:$0xff]
      %v669 = vld [vmem:[#allocation2 + $0x80] sm:$0xff]
      %v670 = vld [vmem:[#allocation2 + $0x88] sm:$0xff]
      %v671 = vld [vmem:[#allocation2 + $0x90] sm:$0xff]
      %v672 = vld [vmem:[#allocation2 + $0x98] sm:$0xff]
      %v673 = vld [vmem:[#allocation2 + $0xa0] sm:$0xff]
      %v674 = vld [vmem:[#allocation2 + $0xa8] sm:$0xff]
      %v675 = vld [vmem:[#allocation2 + $0xb0] sm:$0xff]
      %v676 = vld [vmem:[#allocation2 + $0xb8] sm:$0xff]
      %v677 = vld [vmem:[#allocation2 + $0xc0] sm:$0xff]
      %v678 = vld [vmem:[#allocation2 + $0xc8] sm:$0xff]
      %v679 = vld [vmem:[#allocation2 + $0xd0] sm:$0xff]
      %v680 = vld [vmem:[#allocation2 + $0xd8] sm:$0xff]
      %v681 = vld [vmem:[#allocation2 + $0xe0] sm:$0xff]
      %v682 = vld [vmem:[#allocation2 + $0xe8] sm:$0xff]
      %v683 = vld [vmem:[#allocation2 + $0xf0] sm:$0xff]
      %v684 = vld [vmem:[#allocation2 + $0xf8] sm:$0xff]
      %v685 = vld [vmem:[%s2] sm:$0x1]
      %v687 = vperm.slane %v685, 0
      %v689 = vadd.f32 %v653, %v687
      %v690 = vadd.f32 %v654, %v687
      %v691 = vadd.f32 %v655, %v687
      %v692 = vadd.f32 %v656, %v687
      %v693 = vadd.f32 %v657, %v687
      %v694 = vadd.f32 %v658, %v687
      %v695 = vadd.f32 %v659, %v687
      %v696 = vadd.f32 %v660, %v687
      %v697 = vadd.f32 %v661, %v687
      %v698 = vadd.f32 %v662, %v687
      %v699 = vadd.f32 %v663, %v687
      %v700 = vadd.f32 %v664, %v687
      %v701 = vadd.f32 %v665, %v687
      %v702 = vadd.f32 %v666, %v687
      %v703 = vadd.f32 %v667, %v687
      %v704 = vadd.f32 %v668, %v687
      %v705 = vadd.f32 %v669, %v687
      %v706 = vadd.f32 %v670, %v687
      %v707 = vadd.f32 %v671, %v687
      %v708 = vadd.f32 %v672, %v687
      %v709 = vadd.f32 %v673, %v687
      %v710 = vadd.f32 %v674, %v687
      %v711 = vadd.f32 %v675, %v687
      %v712 = vadd.f32 %v676, %v687
      %v713 = vadd.f32 %v677, %v687
      %v714 = vadd.f32 %v678, %v687
      %v715 = vadd.f32 %v679, %v687
      %v716 = vadd.f32 %v680, %v687
      %v717 = vadd.f32 %v681, %v687
      %v718 = vadd.f32 %v682, %v687
      %v719 = vadd.f32 %v683, %v687
      %v720 = vadd.f32 %v684, %v687
      %v721 = vpack.c.bf16 %v689, %v689
      %v722 = vpack.c.bf16 %v690, %v690
      %v723 = vpack.c.bf16 %v691, %v691
      %v724 = vpack.c.bf16 %v692, %v692
      %v725 = vpack.c.bf16 %v693, %v693
      %v726 = vpack.c.bf16 %v694, %v694
      %v727 = vpack.c.bf16 %v695, %v695
      %v728 = vpack.c.bf16 %v696, %v696
      %v729 = vpack.c.bf16 %v697, %v697
      %v730 = vpack.c.bf16 %v698, %v698
      %v731 = vpack.c.bf16 %v699, %v699
      %v732 = vpack.c.bf16 %v700, %v700
      %v733 = vpack.c.bf16 %v701, %v701
      %v734 = vpack.c.bf16 %v702, %v702
      %v735 = vpack.c.bf16 %v703, %v703
      %v736 = vpack.c.bf16 %v704, %v704
      %v737 = vpack.c.bf16 %v705, %v705
      %v738 = vpack.c.bf16 %v706, %v706
      %v739 = vpack.c.bf16 %v707, %v707
      %v740 = vpack.c.bf16 %v708, %v708
      %v741 = vpack.c.bf16 %v709, %v709
      %v742 = vpack.c.bf16 %v710, %v710
      %v743 = vpack.c.bf16 %v711, %v711
      %v744 = vpack.c.bf16 %v712, %v712
      %v745 = vpack.c.bf16 %v713, %v713
      %v746 = vpack.c.bf16 %v714, %v714
      %v747 = vpack.c.bf16 %v715, %v715
      %v748 = vpack.c.bf16 %v716, %v716
      %v749 = vpack.c.bf16 %v717, %v717
      %v750 = vpack.c.bf16 %v718, %v718
      %v751 = vpack.c.bf16 %v719, %v719
      %v752 = vpack.c.bf16 %v720, %v720
      %753 = vst [vmem:[#allocation3] sm:$0xf] %v721
      %754 = vst [vmem:[#allocation3 + $0x4] sm:$0xf] %v722
      %755 = vst [vmem:[#allocation3 + $0x8] sm:$0xf] %v723
      %756 = vst [vmem:[#allocation3 + $0xc] sm:$0xf] %v724
      %757 = vst [vmem:[#allocation3 + $0x10] sm:$0xf] %v725
      %758 = vst [vmem:[#allocation3 + $0x14] sm:$0xf] %v726
      %759 = vst [vmem:[#allocation3 + $0x18] sm:$0xf] %v727
      %760 = vst [vmem:[#allocation3 + $0x1c] sm:$0xf] %v728
      %761 = vst [vmem:[#allocation3 + $0x20] sm:$0xf] %v729
      %762 = vst [vmem:[#allocation3 + $0x24] sm:$0xf] %v730
      %763 = vst [vmem:[#allocation3 + $0x28] sm:$0xf] %v731
      %764 = vst [vmem:[#allocation3 + $0x2c] sm:$0xf] %v732
      %765 = vst [vmem:[#allocation3 + $0x30] sm:$0xf] %v733
      %766 = vst [vmem:[#allocation3 + $0x34] sm:$0xf] %v734
      %767 = vst [vmem:[#allocation3 + $0x38] sm:$0xf] %v735
      %768 = vst [vmem:[#allocation3 + $0x3c] sm:$0xf] %v736
      %769 = vst [vmem:[#allocation3 + $0x40] sm:$0xf] %v737
      %770 = vst [vmem:[#allocation3 + $0x44] sm:$0xf] %v738
      %771 = vst [vmem:[#allocation3 + $0x48] sm:$0xf] %v739
      %772 = vst [vmem:[#allocation3 + $0x4c] sm:$0xf] %v740
      %773 = vst [vmem:[#allocation3 + $0x50] sm:$0xf] %v741
      %774 = vst [vmem:[#allocation3 + $0x54] sm:$0xf] %v742
      %775 = vst [vmem:[#allocation3 + $0x58] sm:$0xf] %v743
      %776 = vst [vmem:[#allocation3 + $0x5c] sm:$0xf] %v744
      %777 = vst [vmem:[#allocation3 + $0x60] sm:$0xf] %v745
      %778 = vst [vmem:[#allocation3 + $0x64] sm:$0xf] %v746
      %779 = vst [vmem:[#allocation3 + $0x68] sm:$0xf] %v747
      %780 = vst [vmem:[#allocation3 + $0x6c] sm:$0xf] %v748
      %781 = vst [vmem:[#allocation3 + $0x70] sm:$0xf] %v749
      %782 = vst [vmem:[#allocation3 + $0x74] sm:$0xf] %v750
      %783 = vst [vmem:[#allocation3 + $0x78] sm:$0xf] %v751
      %784 = vst [vmem:[#allocation3 + $0x7c] sm:$0xf] %v752
    $region21: #{linear_snowball_forward.7} parent=1 // pred_fallthru
      _
    // Predicated region
    $region22: #{linear_snowball_forward.7} parent=1 // pred_check
      _
    $region23: #{linear_snowball_forward.7} parent=1 // pred_check_branch
      %786 = sbr.rel (0) target = $region25
    $region24: #{linear_snowball_forward.7} parent=1 // pred_region
      %s787 = scalar_lea.vmem %s4, 4
      // Predicated region
      $region26: #{linear_snowball_forward.7} parent=24 // pred_check
        _
      $region27: #{linear_snowball_forward.7} parent=24 // pred_check_branch
        %789 = sbr.rel (0) target = $region29
      $region28: #{linear_snowball_forward.7} parent=24 // pred_region
        // Predicated region
        $region30: #{linear_snowball_forward.7} parent=28 // pred_check
          _
        $region31: #{linear_snowball_forward.7} parent=28 // pred_check_branch
          %791 = sbr.rel target = $region33
        $region32: #{linear_snowball_forward.7} parent=28 // pred_region
          // Predicated region
          $region45: #{linear_snowball_forward.7} parent=32 // pred_check
            _
          $region46: #{linear_snowball_forward.7} parent=32 // pred_check_branch
            %869 = sbr.rel (0) target = $region48
          $region47: #{linear_snowball_forward.7} parent=32 // pred_region
            loop: start=0, step=1, limit=1
            $region49: #{linear_snowball_forward.7} parent=47 // loop_pre_header
              _
            $region50: #{linear_snowball_forward.7} parent=47 // loop_header
              %s871 = sphi 0, %s875
              %p872 = scmp.ge.s32.totalorder %s871, 1
              %s876 = sphi [#allocation3], [#allocation3]
              %s877 = sphi %s787, %s787
            $region51: #{linear_snowball_forward.7} parent=47 // loop_header_branch
              %874 = sbr.rel (%p872) target = $region55
            $region52: #{linear_snowball_forward.7} parent=47 // loop_body
              _
            $region53: #{linear_snowball_forward.7} parent=47 // loop_footer
              %s875 = sadd.s32 1, %s871
            $region54: #{linear_snowball_forward.7} parent=47 // loop_footer_branch
              %870 = sbr.rel target = $region50
            $region55: #{linear_snowball_forward.7} parent=47 // loop_exit
              _
            %s879 = ssub.s32 16, 1
            loop: start=0, step=1, limit=1
            $region56: #{linear_snowball_forward.7} parent=47 // loop_pre_header
              _
            $region57: #{linear_snowball_forward.7} parent=47 // loop_header
              %s881 = sphi 0, %s885
              %p882 = scmp.ge.s32.totalorder %s881, 1
              %s886 = sphi [#allocation3], [#allocation3]
              %s887 = sphi %s787, %s787
            $region58: #{linear_snowball_forward.7} parent=47 // loop_header_branch
              %884 = sbr.rel (%p882) target = $region62
            $region59: #{linear_snowball_forward.7} parent=47 // loop_body
              %v888 = vld [vmem:[%s886] sm:%s879]
              %889 = vst [vmem:[%s887] sm:%s879] %v888
              %v890 = vld [vmem:[%s886 + $0x4] sm:%s879]
              %891 = vst [vmem:[%s887 + $0xc] sm:%s879] %v890
              %v892 = vld [vmem:[%s886 + $0x8] sm:%s879]
              %893 = vst [vmem:[%s887 + $0x18] sm:%s879] %v892
              %v894 = vld [vmem:[%s886 + $0xc] sm:%s879]
              %895 = vst [vmem:[%s887 + $0x24] sm:%s879] %v894
              %v896 = vld [vmem:[%s886 + $0x10] sm:%s879]
              %897 = vst [vmem:[%s887 + $0x30] sm:%s879] %v896
              %v898 = vld [vmem:[%s886 + $0x14] sm:%s879]
              %899 = vst [vmem:[%s887 + $0x3c] sm:%s879] %v898
              %v900 = vld [vmem:[%s886 + $0x18] sm:%s879]
              %901 = vst [vmem:[%s887 + $0x48] sm:%s879] %v900
              %v902 = vld [vmem:[%s886 + $0x1c] sm:%s879]
              %903 = vst [vmem:[%s887 + $0x54] sm:%s879] %v902
              %v904 = vld [vmem:[%s886 + $0x20] sm:%s879]
              %905 = vst [vmem:[%s887 + $0x60] sm:%s879] %v904
              %v906 = vld [vmem:[%s886 + $0x24] sm:%s879]
              %907 = vst [vmem:[%s887 + $0x6c] sm:%s879] %v906
              %v908 = vld [vmem:[%s886 + $0x28] sm:%s879]
              %909 = vst [vmem:[%s887 + $0x78] sm:%s879] %v908
              %v910 = vld [vmem:[%s886 + $0x2c] sm:%s879]
              %911 = vst [vmem:[%s887 + $0x84] sm:%s879] %v910
              %v912 = vld [vmem:[%s886 + $0x30] sm:%s879]
              %913 = vst [vmem:[%s887 + $0x90] sm:%s879] %v912
              %v914 = vld [vmem:[%s886 + $0x34] sm:%s879]
              %915 = vst [vmem:[%s887 + $0x9c] sm:%s879] %v914
              %v916 = vld [vmem:[%s886 + $0x38] sm:%s879]
              %917 = vst [vmem:[%s887 + $0xa8] sm:%s879] %v916
              %v918 = vld [vmem:[%s886 + $0x3c] sm:%s879]
              %919 = vst [vmem:[%s887 + $0xb4] sm:%s879] %v918
              %v920 = vld [vmem:[%s886 + $0x40] sm:%s879]
              %921 = vst [vmem:[%s887 + $0xc0] sm:%s879] %v920
              %v922 = vld [vmem:[%s886 + $0x44] sm:%s879]
              %923 = vst [vmem:[%s887 + $0xcc] sm:%s879] %v922
              %v924 = vld [vmem:[%s886 + $0x48] sm:%s879]
              %925 = vst [vmem:[%s887 + $0xd8] sm:%s879] %v924
              %v926 = vld [vmem:[%s886 + $0x4c] sm:%s879]
              %927 = vst [vmem:[%s887 + $0xe4] sm:%s879] %v926
              %v928 = vld [vmem:[%s886 + $0x50] sm:%s879]
              %929 = vst [vmem:[%s887 + $0xf0] sm:%s879] %v928
              %v930 = vld [vmem:[%s886 + $0x54] sm:%s879]
              %931 = vst [vmem:[%s887 + $0xfc] sm:%s879] %v930
              %v932 = vld [vmem:[%s886 + $0x58] sm:%s879]
              %933 = vst [vmem:[%s887 + $0x108] sm:%s879] %v932
              %v934 = vld [vmem:[%s886 + $0x5c] sm:%s879]
              %935 = vst [vmem:[%s887 + $0x114] sm:%s879] %v934
              %v936 = vld [vmem:[%s886 + $0x60] sm:%s879]
              %937 = vst [vmem:[%s887 + $0x120] sm:%s879] %v936
              %v938 = vld [vmem:[%s886 + $0x64] sm:%s879]
              %939 = vst [vmem:[%s887 + $0x12c] sm:%s879] %v938
              %v940 = vld [vmem:[%s886 + $0x68] sm:%s879]
              %941 = vst [vmem:[%s887 + $0x138] sm:%s879] %v940
              %v942 = vld [vmem:[%s886 + $0x6c] sm:%s879]
              %943 = vst [vmem:[%s887 + $0x144] sm:%s879] %v942
              %v944 = vld [vmem:[%s886 + $0x70] sm:%s879]
              %945 = vst [vmem:[%s887 + $0x150] sm:%s879] %v944
              %v946 = vld [vmem:[%s886 + $0x74] sm:%s879]
              %947 = vst [vmem:[%s887 + $0x15c] sm:%s879] %v946
              %v948 = vld [vmem:[%s886 + $0x78] sm:%s879]
              %949 = vst [vmem:[%s887 + $0x168] sm:%s879] %v948
              %v950 = vld [vmem:[%s886 + $0x7c] sm:%s879]
              %951 = vst [vmem:[%s887 + $0x174] sm:%s879] %v950
            $region60: #{linear_snowball_forward.7} parent=47 // loop_footer
              %s885 = sadd.s32 1, %s881
            $region61: #{linear_snowball_forward.7} parent=47 // loop_footer_branch
              %880 = sbr.rel target = $region57
            $region62: #{linear_snowball_forward.7} parent=47 // loop_exit
              _
          $region48: #{linear_snowball_forward.7} parent=32 // pred_fallthru
            _
        $region33: #{linear_snowball_forward.7} parent=28 // pred_fallthru
          _
        // Predicated region
        $region34: #{linear_snowball_forward.7} parent=28 // pred_check
          _
        $region35: #{linear_snowball_forward.7} parent=28 // pred_check_branch
          %793 = sbr.rel (0) target = $region37
        $region36: #{linear_snowball_forward.7} parent=28 // pred_region
          %s795 = ssub.s32 16, 1
          loop: start=0, step=1, limit=1
          $region38: #{linear_snowball_forward.7} parent=36 // loop_pre_header
            _
          $region39: #{linear_snowball_forward.7} parent=36 // loop_header
            %s797 = sphi 0, %s801
            %p798 = scmp.ge.s32.totalorder %s797, 1
            %s802 = sphi [#allocation3], [#allocation3]
            %s803 = sphi %s787, %s787
          $region40: #{linear_snowball_forward.7} parent=36 // loop_header_branch
            %800 = sbr.rel (%p798) target = $region44
          $region41: #{linear_snowball_forward.7} parent=36 // loop_body
            %v804 = vld [vmem:[%s802] sm:%s795]
            %805 = vst [vmem:[%s803] sm:%s795] %v804
            %v806 = vld [vmem:[%s802 + $0x4] sm:%s795]
            %807 = vst [vmem:[%s803 + $0xc] sm:%s795] %v806
            %v808 = vld [vmem:[%s802 + $0x8] sm:%s795]
            %809 = vst [vmem:[%s803 + $0x18] sm:%s795] %v808
            %v810 = vld [vmem:[%s802 + $0xc] sm:%s795]
            %811 = vst [vmem:[%s803 + $0x24] sm:%s795] %v810
            %v812 = vld [vmem:[%s802 + $0x10] sm:%s795]
            %813 = vst [vmem:[%s803 + $0x30] sm:%s795] %v812
            %v814 = vld [vmem:[%s802 + $0x14] sm:%s795]
            %815 = vst [vmem:[%s803 + $0x3c] sm:%s795] %v814
            %v816 = vld [vmem:[%s802 + $0x18] sm:%s795]
            %817 = vst [vmem:[%s803 + $0x48] sm:%s795] %v816
            %v818 = vld [vmem:[%s802 + $0x1c] sm:%s795]
            %819 = vst [vmem:[%s803 + $0x54] sm:%s795] %v818
            %v820 = vld [vmem:[%s802 + $0x20] sm:%s795]
            %821 = vst [vmem:[%s803 + $0x60] sm:%s795] %v820
            %v822 = vld [vmem:[%s802 + $0x24] sm:%s795]
            %823 = vst [vmem:[%s803 + $0x6c] sm:%s795] %v822
            %v824 = vld [vmem:[%s802 + $0x28] sm:%s795]
            %825 = vst [vmem:[%s803 + $0x78] sm:%s795] %v824
            %v826 = vld [vmem:[%s802 + $0x2c] sm:%s795]
            %827 = vst [vmem:[%s803 + $0x84] sm:%s795] %v826
            %v828 = vld [vmem:[%s802 + $0x30] sm:%s795]
            %829 = vst [vmem:[%s803 + $0x90] sm:%s795] %v828
            %v830 = vld [vmem:[%s802 + $0x34] sm:%s795]
            %831 = vst [vmem:[%s803 + $0x9c] sm:%s795] %v830
            %v832 = vld [vmem:[%s802 + $0x38] sm:%s795]
            %833 = vst [vmem:[%s803 + $0xa8] sm:%s795] %v832
            %v834 = vld [vmem:[%s802 + $0x3c] sm:%s795]
            %835 = vst [vmem:[%s803 + $0xb4] sm:%s795] %v834
            %v836 = vld [vmem:[%s802 + $0x40] sm:%s795]
            %837 = vst [vmem:[%s803 + $0xc0] sm:%s795] %v836
            %v838 = vld [vmem:[%s802 + $0x44] sm:%s795]
            %839 = vst [vmem:[%s803 + $0xcc] sm:%s795] %v838
            %v840 = vld [vmem:[%s802 + $0x48] sm:%s795]
            %841 = vst [vmem:[%s803 + $0xd8] sm:%s795] %v840
            %v842 = vld [vmem:[%s802 + $0x4c] sm:%s795]
            %843 = vst [vmem:[%s803 + $0xe4] sm:%s795] %v842
            %v844 = vld [vmem:[%s802 + $0x50] sm:%s795]
            %845 = vst [vmem:[%s803 + $0xf0] sm:%s795] %v844
            %v846 = vld [vmem:[%s802 + $0x54] sm:%s795]
            %847 = vst [vmem:[%s803 + $0xfc] sm:%s795] %v846
            %v848 = vld [vmem:[%s802 + $0x58] sm:%s795]
            %849 = vst [vmem:[%s803 + $0x108] sm:%s795] %v848
            %v850 = vld [vmem:[%s802 + $0x5c] sm:%s795]
            %851 = vst [vmem:[%s803 + $0x114] sm:%s795] %v850
            %v852 = vld [vmem:[%s802 + $0x60] sm:%s795]
            %853 = vst [vmem:[%s803 + $0x120] sm:%s795] %v852
            %v854 = vld [vmem:[%s802 + $0x64] sm:%s795]
            %855 = vst [vmem:[%s803 + $0x12c] sm:%s795] %v854
            %v856 = vld [vmem:[%s802 + $0x68] sm:%s795]
            %857 = vst [vmem:[%s803 + $0x138] sm:%s795] %v856
            %v858 = vld [vmem:[%s802 + $0x6c] sm:%s795]
            %859 = vst [vmem:[%s803 + $0x144] sm:%s795] %v858
            %v860 = vld [vmem:[%s802 + $0x70] sm:%s795]
            %861 = vst [vmem:[%s803 + $0x150] sm:%s795] %v860
            %v862 = vld [vmem:[%s802 + $0x74] sm:%s795]
            %863 = vst [vmem:[%s803 + $0x15c] sm:%s795] %v862
            %v864 = vld [vmem:[%s802 + $0x78] sm:%s795]
            %865 = vst [vmem:[%s803 + $0x168] sm:%s795] %v864
            %v866 = vld [vmem:[%s802 + $0x7c] sm:%s795]
            %867 = vst [vmem:[%s803 + $0x174] sm:%s795] %v866
          $region42: #{linear_snowball_forward.7} parent=36 // loop_footer
            %s801 = sadd.s32 1, %s797
          $region43: #{linear_snowball_forward.7} parent=36 // loop_footer_branch
            %796 = sbr.rel target = $region39
          $region44: #{linear_snowball_forward.7} parent=36 // loop_exit
            _
        $region37: #{linear_snowball_forward.7} parent=28 // pred_fallthru
          _
      $region29: #{linear_snowball_forward.7} parent=24 // pred_fallthru
        _
      %952 = vnop
    $region25: #{linear_snowball_forward.7} parent=1 // pred_fallthru
      _
    // Predicated region
    $region63: #{linear_snowball_forward.7} parent=1 // pred_check
      _
    $region64: #{linear_snowball_forward.7} parent=1 // pred_check_branch
      %954 = sbr.rel (0) target = $region66
    $region65: #{linear_snowball_forward.7} parent=1 // pred_region
      _
    $region66: #{linear_snowball_forward.7} parent=1 // pred_fallthru
      _

// kernel: linear_snowball_forward.9
$region0: #{linear_snowball_forward.9}
  #allocation0 [shape = 'u32[]', space=smem, size = 0x4, offset = 0x4, fixed_abs, tag = 'smem constant byte address 0x4 - core index']
  #allocation1 [shape = 'u32[72,128]{1,0:T(1,128)}', space=vmem, size = 0x9000, scoped, tag = 'internal scratch']
  #allocation2 [shape = 'f32[256,128]{1,0:T(8,128)}', space=vmem, size = 0x20000, scoped, tag = 'scratch operand']
  %s0 = inlined_call_operand.vmem [shape: bf16[256,256], index: 0, kind: input, shape index: {}]
  %s1 = inlined_call_operand.vmem [shape: bf16[256,128], index: 1, kind: input, shape index: {}]
  %s2 = inlined_call_operand.vmem [shape: f32[1,128], index: 2, kind: input, shape index: {}]
  %s3 = inlined_call_operand.vmem [shape: bf16[256,384], index: 3, kind: input, shape index: {}, may-alias: {3,4}]
  %s4 = inlined_call_operand.vmem [shape: bf16[256,384], index: 4, kind: output, shape index: {}, may-alias: {3,4}]
  %s5 = sld [smem:[#allocation0]]
  $region67: #{linear_snowball_forward.9} parent=0
    _
  %s7 = ssub.s32 1, %s5
  %s8 = scalar_select 0, %s7, %s5
  $region1: #{linear_snowball_forward.9} parent=0
    #allocation3 [shape = 'u8[65536]{0}', space=vmem, size = 0x10000, scoped, tag = 'output window, operand 0, single buffered']
    // Predicated region
    $region2: #{linear_snowball_forward.9} parent=1 // pred_check
      _
    $region3: #{linear_snowball_forward.9} parent=1 // pred_check_branch
      %10 = sbr.rel (0) target = $region5
    $region4: #{linear_snowball_forward.9} parent=1 // pred_region
      _
    $region5: #{linear_snowball_forward.9} parent=1 // pred_fallthru
      _
    // Predicated region
    $region6: #{linear_snowball_forward.9} parent=1 // pred_check
      _
    $region7: #{linear_snowball_forward.9} parent=1 // pred_check_branch
      %12 = sbr.rel (0) target = $region9
    $region8: #{linear_snowball_forward.9} parent=1 // pred_region
      _
    $region9: #{linear_snowball_forward.9} parent=1 // pred_fallthru
      _
    // Predicated region
    $region10: #{linear_snowball_forward.9} parent=1 // pred_check
      _
    $region11: #{linear_snowball_forward.9} parent=1 // pred_check_branch
      %14 = sbr.rel (0) target = $region13
    $region12: #{linear_snowball_forward.9} parent=1 // pred_region
      _
    $region13: #{linear_snowball_forward.9} parent=1 // pred_fallthru
      _
    %p15 = scmp.eq.s32.totalorder 0, 0
    // Predicated region
    $region14: #{linear_snowball_forward.9} parent=1 // pred_check
      %p16 = pneg %p15
    $region15: #{linear_snowball_forward.9} parent=1 // pred_check_branch
      %18 = sbr.rel (%p16) target = $region17
    $region16: #{linear_snowball_forward.9} parent=1 // pred_region
      %19 = vst [vmem:[#allocation2] sm:$0xff] 0.0
      %20 = vst [vmem:[#allocation2 + $0x8] sm:$0xff] 0.0
      %21 = vst [vmem:[#allocation2 + $0x10] sm:$0xff] 0.0
      %22 = vst [vmem:[#allocation2 + $0x18] sm:$0xff] 0.0
      %23 = vst [vmem:[#allocation2 + $0x20] sm:$0xff] 0.0
      %24 = vst [vmem:[#allocation2 + $0x28] sm:$0xff] 0.0
      %25 = vst [vmem:[#allocation2 + $0x30] sm:$0xff] 0.0
      %26 = vst [vmem:[#allocation2 + $0x38] sm:$0xff] 0.0
      %27 = vst [vmem:[#allocation2 + $0x40] sm:$0xff] 0.0
      %28 = vst [vmem:[#allocation2 + $0x48] sm:$0xff] 0.0
      %29 = vst [vmem:[#allocation2 + $0x50] sm:$0xff] 0.0
      %30 = vst [vmem:[#allocation2 + $0x58] sm:$0xff] 0.0
      %31 = vst [vmem:[#allocation2 + $0x60] sm:$0xff] 0.0
      %32 = vst [vmem:[#allocation2 + $0x68] sm:$0xff] 0.0
      %33 = vst [vmem:[#allocation2 + $0x70] sm:$0xff] 0.0
      %34 = vst [vmem:[#allocation2 + $0x78] sm:$0xff] 0.0
      %35 = vst [vmem:[#allocation2 + $0x80] sm:$0xff] 0.0
      %36 = vst [vmem:[#allocation2 + $0x88] sm:$0xff] 0.0
      %37 = vst [vmem:[#allocation2 + $0x90] sm:$0xff] 0.0
      %38 = vst [vmem:[#allocation2 + $0x98] sm:$0xff] 0.0
      %39 = vst [vmem:[#allocation2 + $0xa0] sm:$0xff] 0.0
      %40 = vst [vmem:[#allocation2 + $0xa8] sm:$0xff] 0.0
      %41 = vst [vmem:[#allocation2 + $0xb0] sm:$0xff] 0.0
      %42 = vst [vmem:[#allocation2 + $0xb8] sm:$0xff] 0.0
      %43 = vst [vmem:[#allocation2 + $0xc0] sm:$0xff] 0.0
      %44 = vst [vmem:[#allocation2 + $0xc8] sm:$0xff] 0.0
      %45 = vst [vmem:[#allocation2 + $0xd0] sm:$0xff] 0.0
      %46 = vst [vmem:[#allocation2 + $0xd8] sm:$0xff] 0.0
      %47 = vst [vmem:[#allocation2 + $0xe0] sm:$0xff] 0.0
      %48 = vst [vmem:[#allocation2 + $0xe8] sm:$0xff] 0.0
      %49 = vst [vmem:[#allocation2 + $0xf0] sm:$0xff] 0.0
      %50 = vst [vmem:[#allocation2 + $0xf8] sm:$0xff] 0.0
    $region17: #{linear_snowball_forward.9} parent=1 // pred_fallthru
      _
    %s51 = smul.u32 0, 256
    %s52 = sshra.s32 %s51, 3
    %s53 = sand.u32 %s51, 7
    %s54 = smul.addr %s52, 4
    %s55 = scalar_lea.vmem %s1, %s54
    %v56 = vld [vmem:[%s55] sm:$0xf]
    %v57 = vld [vmem:[%s55 + $0x4] sm:$0xf]
    %v58 = vld [vmem:[%s55 + $0x8] sm:$0xf]
    %v59 = vld [vmem:[%s55 + $0xc] sm:$0xf]
    %v60 = vld [vmem:[%s55 + $0x10] sm:$0xf]
    %v61 = vld [vmem:[%s55 + $0x14] sm:$0xf]
    %v62 = vld [vmem:[%s55 + $0x18] sm:$0xf]
    %v63 = vld [vmem:[%s55 + $0x1c] sm:$0xf]
    %v64 = vld [vmem:[%s55 + $0x20] sm:$0xf]
    %v65 = vld [vmem:[%s55 + $0x24] sm:$0xf]
    %v66 = vld [vmem:[%s55 + $0x28] sm:$0xf]
    %v67 = vld [vmem:[%s55 + $0x2c] sm:$0xf]
    %v68 = vld [vmem:[%s55 + $0x30] sm:$0xf]
    %v69 = vld [vmem:[%s55 + $0x34] sm:$0xf]
    %v70 = vld [vmem:[%s55 + $0x38] sm:$0xf]
    %v71 = vld [vmem:[%s55 + $0x3c] sm:$0xf]
    %v72 = vld [vmem:[%s55 + $0x40] sm:$0xf]
    %v73 = vld [vmem:[%s55 + $0x44] sm:$0xf]
    %v74 = vld [vmem:[%s55 + $0x48] sm:$0xf]
    %v75 = vld [vmem:[%s55 + $0x4c] sm:$0xf]
    %v76 = vld [vmem:[%s55 + $0x50] sm:$0xf]
    %v77 = vld [vmem:[%s55 + $0x54] sm:$0xf]
    %v78 = vld [vmem:[%s55 + $0x58] sm:$0xf]
    %v79 = vld [vmem:[%s55 + $0x5c] sm:$0xf]
    %v80 = vld [vmem:[%s55 + $0x60] sm:$0xf]
    %v81 = vld [vmem:[%s55 + $0x64] sm:$0xf]
    %v82 = vld [vmem:[%s55 + $0x68] sm:$0xf]
    %v83 = vld [vmem:[%s55 + $0x6c] sm:$0xf]
    %v84 = vld [vmem:[%s55 + $0x70] sm:$0xf]
    %v85 = vld [vmem:[%s55 + $0x74] sm:$0xf]
    %v86 = vld [vmem:[%s55 + $0x78] sm:$0xf]
    %v87 = vld [vmem:[%s55 + $0x7c] sm:$0xf]
    %v88 = vld [vmem:[#allocation2] sm:$0xff]
    %v89 = vld [vmem:[#allocation2 + $0x8] sm:$0xff]
    %v90 = vld [vmem:[#allocation2 + $0x10] sm:$0xff]
    %v91 = vld [vmem:[#allocation2 + $0x18] sm:$0xff]
    %v92 = vld [vmem:[#allocation2 + $0x20] sm:$0xff]
    %v93 = vld [vmem:[#allocation2 + $0x28] sm:$0xff]
    %v94 = vld [vmem:[#allocation2 + $0x30] sm:$0xff]
    %v95 = vld [vmem:[#allocation2 + $0x38] sm:$0xff]
    %v96 = vld [vmem:[#allocation2 + $0x40] sm:$0xff]
    %v97 = vld [vmem:[#allocation2 + $0x48] sm:$0xff]
    %v98 = vld [vmem:[#allocation2 + $0x50] sm:$0xff]
    %v99 = vld [vmem:[#allocation2 + $0x58] sm:$0xff]
    %v100 = vld [vmem:[#allocation2 + $0x60] sm:$0xff]
    %v101 = vld [vmem:[#allocation2 + $0x68] sm:$0xff]
    %v102 = vld [vmem:[#allocation2 + $0x70] sm:$0xff]
    %v103 = vld [vmem:[#allocation2 + $0x78] sm:$0xff]
    %v104 = vld [vmem:[#allocation2 + $0x80] sm:$0xff]
    %v105 = vld [vmem:[#allocation2 + $0x88] sm:$0xff]
    %v106 = vld [vmem:[#allocation2 + $0x90] sm:$0xff]
    %v107 = vld [vmem:[#allocation2 + $0x98] sm:$0xff]
    %v108 = vld [vmem:[#allocation2 + $0xa0] sm:$0xff]
    %v109 = vld [vmem:[#allocation2 + $0xa8] sm:$0xff]
    %v110 = vld [vmem:[#allocation2 + $0xb0] sm:$0xff]
    %v111 = vld [vmem:[#allocation2 + $0xb8] sm:$0xff]
    %v112 = vld [vmem:[#allocation2 + $0xc0] sm:$0xff]
    %v113 = vld [vmem:[#allocation2 + $0xc8] sm:$0xff]
    %v114 = vld [vmem:[#allocation2 + $0xd0] sm:$0xff]
    %v115 = vld [vmem:[#allocation2 + $0xd8] sm:$0xff]
    %v116 = vld [vmem:[#allocation2 + $0xe0] sm:$0xff]
    %v117 = vld [vmem:[#allocation2 + $0xe8] sm:$0xff]
    %v118 = vld [vmem:[#allocation2 + $0xf0] sm:$0xff]
    %v119 = vld [vmem:[#allocation2 + $0xf8] sm:$0xff]
    %v120 = vld [vmem:[%s0] sm:$0xff]
    %v121 = vld [vmem:[%s0 + $0x8] sm:$0xff]
    %v122 = vld [vmem:[%s0 + $0x10] sm:$0xff]
    %v123 = vld [vmem:[%s0 + $0x18] sm:$0xff]
    %v124 = vld [vmem:[%s0 + $0x20] sm:$0xff]
    %v125 = vld [vmem:[%s0 + $0x28] sm:$0xff]
    %v126 = vld [vmem:[%s0 + $0x30] sm:$0xff]
    %v127 = vld [vmem:[%s0 + $0x38] sm:$0xff]
    %v128 = vld [vmem:[%s0 + $0x40] sm:$0xff]
    %v129 = vld [vmem:[%s0 + $0x48] sm:$0xff]
    %v130 = vld [vmem:[%s0 + $0x50] sm:$0xff]
    %v131 = vld [vmem:[%s0 + $0x58] sm:$0xff]
    %v132 = vld [vmem:[%s0 + $0x60] sm:$0xff]
    %v133 = vld [vmem:[%s0 + $0x68] sm:$0xff]
    %v134 = vld [vmem:[%s0 + $0x70] sm:$0xff]
    %v135 = vld [vmem:[%s0 + $0x78] sm:$0xff]
    %v136 = vld [vmem:[%s0 + $0x80] sm:$0xff]
    %v137 = vld [vmem:[%s0 + $0x88] sm:$0xff]
    %v138 = vld [vmem:[%s0 + $0x90] sm:$0xff]
    %v139 = vld [vmem:[%s0 + $0x98] sm:$0xff]
    %v140 = vld [vmem:[%s0 + $0xa0] sm:$0xff]
    %v141 = vld [vmem:[%s0 + $0xa8] sm:$0xff]
    %v142 = vld [vmem:[%s0 + $0xb0] sm:$0xff]
    %v143 = vld [vmem:[%s0 + $0xb8] sm:$0xff]
    %v144 = vld [vmem:[%s0 + $0xc0] sm:$0xff]
    %v145 = vld [vmem:[%s0 + $0xc8] sm:$0xff]
    %v146 = vld [vmem:[%s0 + $0xd0] sm:$0xff]
    %v147 = vld [vmem:[%s0 + $0xd8] sm:$0xff]
    %v148 = vld [vmem:[%s0 + $0xe0] sm:$0xff]
    %v149 = vld [vmem:[%s0 + $0xe8] sm:$0xff]
    %v150 = vld [vmem:[%s0 + $0xf0] sm:$0xff]
    %v151 = vld [vmem:[%s0 + $0xf8] sm:$0xff]
    %v184 = vunpack.c.l.b16 %v120
    %v185 = vunpack.c.h.b16 %v120
    %v186 = vunpack.c.l.b16 %v121
    %v187 = vunpack.c.h.b16 %v121
    %v188 = vunpack.c.l.b16 %v122
    %v189 = vunpack.c.h.b16 %v122
    %v190 = vunpack.c.l.b16 %v123
    %v191 = vunpack.c.h.b16 %v123
    %v192 = vunpack.c.l.b16 %v124
    %v193 = vunpack.c.h.b16 %v124
    %v194 = vunpack.c.l.b16 %v125
    %v195 = vunpack.c.h.b16 %v125
    %v196 = vunpack.c.l.b16 %v126
    %v197 = vunpack.c.h.b16 %v126
    %v198 = vunpack.c.l.b16 %v127
    %v199 = vunpack.c.h.b16 %v127
    %v200 = vunpack.c.l.b16 %v128
    %v201 = vunpack.c.h.b16 %v128
    %v202 = vunpack.c.l.b16 %v129
    %v203 = vunpack.c.h.b16 %v129
    %v204 = vunpack.c.l.b16 %v130
    %v205 = vunpack.c.h.b16 %v130
    %v206 = vunpack.c.l.b16 %v131
    %v207 = vunpack.c.h.b16 %v131
    %v208 = vunpack.c.l.b16 %v132
    %v209 = vunpack.c.h.b16 %v132
    %v210 = vunpack.c.l.b16 %v133
    %v211 = vunpack.c.h.b16 %v133
    %v212 = vunpack.c.l.b16 %v134
    %v213 = vunpack.c.h.b16 %v134
    %v214 = vunpack.c.l.b16 %v135
    %v215 = vunpack.c.h.b16 %v135
    %v216 = vunpack.c.l.b16 %v136
    %v217 = vunpack.c.h.b16 %v136
    %v218 = vunpack.c.l.b16 %v137
    %v219 = vunpack.c.h.b16 %v137
    %v220 = vunpack.c.l.b16 %v138
    %v221 = vunpack.c.h.b16 %v138
    %v222 = vunpack.c.l.b16 %v139
    %v223 = vunpack.c.h.b16 %v139
    %v224 = vunpack.c.l.b16 %v140
    %v225 = vunpack.c.h.b16 %v140
    %v226 = vunpack.c.l.b16 %v141
    %v227 = vunpack.c.h.b16 %v141
    %v228 = vunpack.c.l.b16 %v142
    %v229 = vunpack.c.h.b16 %v142
    %v230 = vunpack.c.l.b16 %v143
    %v231 = vunpack.c.h.b16 %v143
    %v232 = vunpack.c.l.b16 %v144
    %v233 = vunpack.c.h.b16 %v144
    %v234 = vunpack.c.l.b16 %v145
    %v235 = vunpack.c.h.b16 %v145
    %v236 = vunpack.c.l.b16 %v146
    %v237 = vunpack.c.h.b16 %v146
    %v238 = vunpack.c.l.b16 %v147
    %v239 = vunpack.c.h.b16 %v147
    %v240 = vunpack.c.l.b16 %v148
    %v241 = vunpack.c.h.b16 %v148
    %v242 = vunpack.c.l.b16 %v149
    %v243 = vunpack.c.h.b16 %v149
    %v244 = vunpack.c.l.b16 %v150
    %v245 = vunpack.c.h.b16 %v150
    %v246 = vunpack.c.l.b16 %v151
    %v247 = vunpack.c.h.b16 %v151
    %v248 = vpack.c.b16 %v186, %v184
    %v249 = vpack.c.b16 %v187, %v185
    %v250 = vpack.c.b16 %v190, %v188
    %v251 = vpack.c.b16 %v191, %v189
    %v252 = vpack.c.b16 %v194, %v192
    %v253 = vpack.c.b16 %v195, %v193
    %v254 = vpack.c.b16 %v198, %v196
    %v255 = vpack.c.b16 %v199, %v197
    %v256 = vpack.c.b16 %v202, %v200
    %v257 = vpack.c.b16 %v203, %v201
    %v258 = vpack.c.b16 %v206, %v204
    %v259 = vpack.c.b16 %v207, %v205
    %v260 = vpack.c.b16 %v210, %v208
    %v261 = vpack.c.b16 %v211, %v209
    %v262 = vpack.c.b16 %v214, %v212
    %v263 = vpack.c.b16 %v215, %v213
    %v264 = vpack.c.b16 %v218, %v216
    %v265 = vpack.c.b16 %v219, %v217
    %v266 = vpack.c.b16 %v222, %v220
    %v267 = vpack.c.b16 %v223, %v221
    %v268 = vpack.c.b16 %v226, %v224
    %v269 = vpack.c.b16 %v227, %v225
    %v270 = vpack.c.b16 %v230, %v228
    %v271 = vpack.c.b16 %v231, %v229
    %v272 = vpack.c.b16 %v234, %v232
    %v273 = vpack.c.b16 %v235, %v233
    %v274 = vpack.c.b16 %v238, %v236
    %v275 = vpack.c.b16 %v239, %v237
    %v276 = vpack.c.b16 %v242, %v240
    %v277 = vpack.c.b16 %v243, %v241
    %v278 = vpack.c.b16 %v246, %v244
    %v279 = vpack.c.b16 %v247, %v245
    %v344 = vunpack.c.l.b16 %v56
    %v345 = vunpack.c.l.b16 %v57
    %v346 = vunpack.c.l.b16 %v58
    %v347 = vunpack.c.l.b16 %v59
    %v348 = vunpack.c.l.b16 %v60
    %v349 = vunpack.c.l.b16 %v61
    %v350 = vunpack.c.l.b16 %v62
    %v351 = vunpack.c.l.b16 %v63
    %v352 = vunpack.c.l.b16 %v64
    %v353 = vunpack.c.l.b16 %v65
    %v354 = vunpack.c.l.b16 %v66
    %v355 = vunpack.c.l.b16 %v67
    %v356 = vunpack.c.l.b16 %v68
    %v357 = vunpack.c.l.b16 %v69
    %v358 = vunpack.c.l.b16 %v70
    %v359 = vunpack.c.l.b16 %v71
    %v360 = vunpack.c.l.b16 %v72
    %v361 = vunpack.c.l.b16 %v73
    %v362 = vunpack.c.l.b16 %v74
    %v363 = vunpack.c.l.b16 %v75
    %v364 = vunpack.c.l.b16 %v76
    %v365 = vunpack.c.l.b16 %v77
    %v366 = vunpack.c.l.b16 %v78
    %v367 = vunpack.c.l.b16 %v79
    %v368 = vunpack.c.l.b16 %v80
    %v369 = vunpack.c.l.b16 %v81
    %v370 = vunpack.c.l.b16 %v82
    %v371 = vunpack.c.l.b16 %v83
    %v372 = vunpack.c.l.b16 %v84
    %v373 = vunpack.c.l.b16 %v85
    %v374 = vunpack.c.l.b16 %v86
    %v375 = vunpack.c.l.b16 %v87
    %v376 = vpack.c.b16 %v345, %v344
    %v377 = vpack.c.b16 %v347, %v346
    %v378 = vpack.c.b16 %v349, %v348
    %v379 = vpack.c.b16 %v351, %v350
    %v380 = vpack.c.b16 %v353, %v352
    %v381 = vpack.c.b16 %v355, %v354
    %v382 = vpack.c.b16 %v357, %v356
    %v383 = vpack.c.b16 %v359, %v358
    %v384 = vpack.c.b16 %v361, %v360
    %v385 = vpack.c.b16 %v363, %v362
    %v386 = vpack.c.b16 %v365, %v364
    %v387 = vpack.c.b16 %v367, %v366
    %v388 = vpack.c.b16 %v369, %v368
    %v389 = vpack.c.b16 %v371, %v370
    %v390 = vpack.c.b16 %v373, %v372
    %v391 = vpack.c.b16 %v375, %v374
    %408 = vmatpush.bf16.msra.mxu0 %v383
    %409 = vmatpush.bf16.msra.mxu0 %v382
    %410 = vmatpush.bf16.msra.mxu0 %v381
    %411 = vmatpush.bf16.msra.mxu0 %v380
    %412 = vmatpush.bf16.msra.mxu0 %v379
    %413 = vmatpush.bf16.msra.mxu0 %v378
    %414 = vmatpush.bf16.msra.mxu0 %v377
    %415 = vmatpush.bf16.msra.mxu0 %v376
    %416 = vmatmul.bf16.gmra.mxu0 %v248
    %v417 = vpop.f32.mrf.mxu0
    %v418 = vadd.f32 0.0, %v417
    %v419 = vpop.f32.mrf.mxu0
    %v420 = vadd.f32 0.0, %v419
    %421 = vmatmul.bf16.gmra.mxu0 %v250
    %v422 = vpop.f32.mrf.mxu0
    %v423 = vadd.f32 0.0, %v422
    %v424 = vpop.f32.mrf.mxu0
    %v425 = vadd.f32 0.0, %v424
    %426 = vmatmul.bf16.gmra.mxu0 %v252
    %v427 = vpop.f32.mrf.mxu0
    %v428 = vadd.f32 0.0, %v427
    %v429 = vpop.f32.mrf.mxu0
    %v430 = vadd.f32 0.0, %v429
    %431 = vmatmul.bf16.gmra.mxu0 %v254
    %v432 = vpop.f32.mrf.mxu0
    %v433 = vadd.f32 0.0, %v432
    %v434 = vpop.f32.mrf.mxu0
    %v435 = vadd.f32 0.0, %v434
    %436 = vmatmul.bf16.gmra.mxu0 %v256
    %v437 = vpop.f32.mrf.mxu0
    %v438 = vadd.f32 0.0, %v437
    %v439 = vpop.f32.mrf.mxu0
    %v440 = vadd.f32 0.0, %v439
    %441 = vmatmul.bf16.gmra.mxu0 %v258
    %v442 = vpop.f32.mrf.mxu0
    %v443 = vadd.f32 0.0, %v442
    %v444 = vpop.f32.mrf.mxu0
    %v445 = vadd.f32 0.0, %v444
    %446 = vmatmul.bf16.gmra.mxu0 %v260
    %v447 = vpop.f32.mrf.mxu0
    %v448 = vadd.f32 0.0, %v447
    %v449 = vpop.f32.mrf.mxu0
    %v450 = vadd.f32 0.0, %v449
    %451 = vmatmul.bf16.gmra.mxu0 %v262
    %v452 = vpop.f32.mrf.mxu0
    %v453 = vadd.f32 0.0, %v452
    %v454 = vpop.f32.mrf.mxu0
    %v455 = vadd.f32 0.0, %v454
    %456 = vmatmul.bf16.gmra.mxu0 %v264
    %v457 = vpop.f32.mrf.mxu0
    %v458 = vadd.f32 0.0, %v457
    %v459 = vpop.f32.mrf.mxu0
    %v460 = vadd.f32 0.0, %v459
    %461 = vmatmul.bf16.gmra.mxu0 %v266
    %v462 = vpop.f32.mrf.mxu0
    %v463 = vadd.f32 0.0, %v462
    %v464 = vpop.f32.mrf.mxu0
    %v465 = vadd.f32 0.0, %v464
    %466 = vmatmul.bf16.gmra.mxu0 %v268
    %v467 = vpop.f32.mrf.mxu0
    %v468 = vadd.f32 0.0, %v467
    %v469 = vpop.f32.mrf.mxu0
    %v470 = vadd.f32 0.0, %v469
    %471 = vmatmul.bf16.gmra.mxu0 %v270
    %v472 = vpop.f32.mrf.mxu0
    %v473 = vadd.f32 0.0, %v472
    %v474 = vpop.f32.mrf.mxu0
    %v475 = vadd.f32 0.0, %v474
    %476 = vmatmul.bf16.gmra.mxu0 %v272
    %v477 = vpop.f32.mrf.mxu0
    %v478 = vadd.f32 0.0, %v477
    %v479 = vpop.f32.mrf.mxu0
    %v480 = vadd.f32 0.0, %v479
    %481 = vmatmul.bf16.gmra.mxu0 %v274
    %v482 = vpop.f32.mrf.mxu0
    %v483 = vadd.f32 0.0, %v482
    %v484 = vpop.f32.mrf.mxu0
    %v485 = vadd.f32 0.0, %v484
    %486 = vmatmul.bf16.gmra.mxu0 %v276
    %v487 = vpop.f32.mrf.mxu0
    %v488 = vadd.f32 0.0, %v487
    %v489 = vpop.f32.mrf.mxu0
    %v490 = vadd.f32 0.0, %v489
    %491 = vmatmul.bf16.gmra.mxu0 %v278
    %v492 = vpop.f32.mrf.mxu0
    %v493 = vadd.f32 0.0, %v492
    %v494 = vpop.f32.mrf.mxu0
    %v495 = vadd.f32 0.0, %v494
    %496 = vdwg.mxu0
    %497 = vmatpush.bf16.msra.mxu0 %v391
    %498 = vmatpush.bf16.msra.mxu0 %v390
    %499 = vmatpush.bf16.msra.mxu0 %v389
    %500 = vmatpush.bf16.msra.mxu0 %v388
    %501 = vmatpush.bf16.msra.mxu0 %v387
    %502 = vmatpush.bf16.msra.mxu0 %v386
    %503 = vmatpush.bf16.msra.mxu0 %v385
    %504 = vmatpush.bf16.msra.mxu0 %v384
    %505 = vmatmul.bf16.gmra.mxu0 %v249
    %v506 = vpop.f32.mrf.mxu0
    %v507 = vadd.f32 %v418, %v506
    %v508 = vpop.f32.mrf.mxu0
    %v509 = vadd.f32 %v420, %v508
    %510 = vmatmul.bf16.gmra.mxu0 %v251
    %v511 = vpop.f32.mrf.mxu0
    %v512 = vadd.f32 %v423, %v511
    %v513 = vpop.f32.mrf.mxu0
    %v514 = vadd.f32 %v425, %v513
    %515 = vmatmul.bf16.gmra.mxu0 %v253
    %v516 = vpop.f32.mrf.mxu0
    %v517 = vadd.f32 %v428, %v516
    %v518 = vpop.f32.mrf.mxu0
    %v519 = vadd.f32 %v430, %v518
    %520 = vmatmul.bf16.gmra.mxu0 %v255
    %v521 = vpop.f32.mrf.mxu0
    %v522 = vadd.f32 %v433, %v521
    %v523 = vpop.f32.mrf.mxu0
    %v524 = vadd.f32 %v435, %v523
    %525 = vmatmul.bf16.gmra.mxu0 %v257
    %v526 = vpop.f32.mrf.mxu0
    %v527 = vadd.f32 %v438, %v526
    %v528 = vpop.f32.mrf.mxu0
    %v529 = vadd.f32 %v440, %v528
    %530 = vmatmul.bf16.gmra.mxu0 %v259
    %v531 = vpop.f32.mrf.mxu0
    %v532 = vadd.f32 %v443, %v531
    %v533 = vpop.f32.mrf.mxu0
    %v534 = vadd.f32 %v445, %v533
    %535 = vmatmul.bf16.gmra.mxu0 %v261
    %v536 = vpop.f32.mrf.mxu0
    %v537 = vadd.f32 %v448, %v536
    %v538 = vpop.f32.mrf.mxu0
    %v539 = vadd.f32 %v450, %v538
    %540 = vmatmul.bf16.gmra.mxu0 %v263
    %v541 = vpop.f32.mrf.mxu0
    %v542 = vadd.f32 %v453, %v541
    %v543 = vpop.f32.mrf.mxu0
    %v544 = vadd.f32 %v455, %v543
    %545 = vmatmul.bf16.gmra.mxu0 %v265
    %v546 = vpop.f32.mrf.mxu0
    %v547 = vadd.f32 %v458, %v546
    %v548 = vpop.f32.mrf.mxu0
    %v549 = vadd.f32 %v460, %v548
    %550 = vmatmul.bf16.gmra.mxu0 %v267
    %v551 = vpop.f32.mrf.mxu0
    %v552 = vadd.f32 %v463, %v551
    %v553 = vpop.f32.mrf.mxu0
    %v554 = vadd.f32 %v465, %v553
    %555 = vmatmul.bf16.gmra.mxu0 %v269
    %v556 = vpop.f32.mrf.mxu0
    %v557 = vadd.f32 %v468, %v556
    %v558 = vpop.f32.mrf.mxu0
    %v559 = vadd.f32 %v470, %v558
    %560 = vmatmul.bf16.gmra.mxu0 %v271
    %v561 = vpop.f32.mrf.mxu0
    %v562 = vadd.f32 %v473, %v561
    %v563 = vpop.f32.mrf.mxu0
    %v564 = vadd.f32 %v475, %v563
    %565 = vmatmul.bf16.gmra.mxu0 %v273
    %v566 = vpop.f32.mrf.mxu0
    %v567 = vadd.f32 %v478, %v566
    %v568 = vpop.f32.mrf.mxu0
    %v569 = vadd.f32 %v480, %v568
    %570 = vmatmul.bf16.gmra.mxu0 %v275
    %v571 = vpop.f32.mrf.mxu0
    %v572 = vadd.f32 %v483, %v571
    %v573 = vpop.f32.mrf.mxu0
    %v574 = vadd.f32 %v485, %v573
    %575 = vmatmul.bf16.gmra.mxu0 %v277
    %v576 = vpop.f32.mrf.mxu0
    %v577 = vadd.f32 %v488, %v576
    %v578 = vpop.f32.mrf.mxu0
    %v579 = vadd.f32 %v490, %v578
    %580 = vmatmul.bf16.gmra.mxu0 %v279
    %v581 = vpop.f32.mrf.mxu0
    %v582 = vadd.f32 %v493, %v581
    %v583 = vpop.f32.mrf.mxu0
    %v584 = vadd.f32 %v495, %v583
    %585 = vdwg.mxu0
    %v586 = vadd.f32 %v88, %v507
    %v587 = vadd.f32 %v89, %v509
    %v588 = vadd.f32 %v90, %v512
    %v589 = vadd.f32 %v91, %v514
    %v590 = vadd.f32 %v92, %v517
    %v591 = vadd.f32 %v93, %v519
    %v592 = vadd.f32 %v94, %v522
    %v593 = vadd.f32 %v95, %v524
    %v594 = vadd.f32 %v96, %v527
    %v595 = vadd.f32 %v97, %v529
    %v596 = vadd.f32 %v98, %v532
    %v597 = vadd.f32 %v99, %v534
    %v598 = vadd.f32 %v100, %v537
    %v599 = vadd.f32 %v101, %v539
    %v600 = vadd.f32 %v102, %v542
    %v601 = vadd.f32 %v103, %v544
    %v602 = vadd.f32 %v104, %v547
    %v603 = vadd.f32 %v105, %v549
    %v604 = vadd.f32 %v106, %v552
    %v605 = vadd.f32 %v107, %v554
    %v606 = vadd.f32 %v108, %v557
    %v607 = vadd.f32 %v109, %v559
    %v608 = vadd.f32 %v110, %v562
    %v609 = vadd.f32 %v111, %v564
    %v610 = vadd.f32 %v112, %v567
    %v611 = vadd.f32 %v113, %v569
    %v612 = vadd.f32 %v114, %v572
    %v613 = vadd.f32 %v115, %v574
    %v614 = vadd.f32 %v116, %v577
    %v615 = vadd.f32 %v117, %v579
    %v616 = vadd.f32 %v118, %v582
    %v617 = vadd.f32 %v119, %v584
    %618 = vst [vmem:[#allocation2] sm:$0xff] %v586
    %619 = vst [vmem:[#allocation2 + $0x8] sm:$0xff] %v587
    %620 = vst [vmem:[#allocation2 + $0x10] sm:$0xff] %v588
    %621 = vst [vmem:[#allocation2 + $0x18] sm:$0xff] %v589
    %622 = vst [vmem:[#allocation2 + $0x20] sm:$0xff] %v590
    %623 = vst [vmem:[#allocation2 + $0x28] sm:$0xff] %v591
    %624 = vst [vmem:[#allocation2 + $0x30] sm:$0xff] %v592
    %625 = vst [vmem:[#allocation2 + $0x38] sm:$0xff] %v593
    %626 = vst [vmem:[#allocation2 + $0x40] sm:$0xff] %v594
    %627 = vst [vmem:[#allocation2 + $0x48] sm:$0xff] %v595
    %628 = vst [vmem:[#allocation2 + $0x50] sm:$0xff] %v596
    %629 = vst [vmem:[#allocation2 + $0x58] sm:$0xff] %v597
    %630 = vst [vmem:[#allocation2 + $0x60] sm:$0xff] %v598
    %631 = vst [vmem:[#allocation2 + $0x68] sm:$0xff] %v599
    %632 = vst [vmem:[#allocation2 + $0x70] sm:$0xff] %v600
    %633 = vst [vmem:[#allocation2 + $0x78] sm:$0xff] %v601
    %634 = vst [vmem:[#allocation2 + $0x80] sm:$0xff] %v602
    %635 = vst [vmem:[#allocation2 + $0x88] sm:$0xff] %v603
    %636 = vst [vmem:[#allocation2 + $0x90] sm:$0xff] %v604
    %637 = vst [vmem:[#allocation2 + $0x98] sm:$0xff] %v605
    %638 = vst [vmem:[#allocation2 + $0xa0] sm:$0xff] %v606
    %639 = vst [vmem:[#allocation2 + $0xa8] sm:$0xff] %v607
    %640 = vst [vmem:[#allocation2 + $0xb0] sm:$0xff] %v608
    %641 = vst [vmem:[#allocation2 + $0xb8] sm:$0xff] %v609
    %642 = vst [vmem:[#allocation2 + $0xc0] sm:$0xff] %v610
    %643 = vst [vmem:[#allocation2 + $0xc8] sm:$0xff] %v611
    %644 = vst [vmem:[#allocation2 + $0xd0] sm:$0xff] %v612
    %645 = vst [vmem:[#allocation2 + $0xd8] sm:$0xff] %v613
    %646 = vst [vmem:[#allocation2 + $0xe0] sm:$0xff] %v614
    %647 = vst [vmem:[#allocation2 + $0xe8] sm:$0xff] %v615
    %648 = vst [vmem:[#allocation2 + $0xf0] sm:$0xff] %v616
    %649 = vst [vmem:[#allocation2 + $0xf8] sm:$0xff] %v617
    // Predicated region
    $region18: #{linear_snowball_forward.9} parent=1 // pred_check
      %p650 = pneg %p15
    $region19: #{linear_snowball_forward.9} parent=1 // pred_check_branch
      %652 = sbr.rel (%p650) target = $region21
    $region20: #{linear_snowball_forward.9} parent=1 // pred_region
      %v653 = vld [vmem:[#allocation2] sm:$0xff]
      %v654 = vld [vmem:[#allocation2 + $0x8] sm:$0xff]
      %v655 = vld [vmem:[#allocation2 + $0x10] sm:$0xff]
      %v656 = vld [vmem:[#allocation2 + $0x18] sm:$0xff]
      %v657 = vld [vmem:[#allocation2 + $0x20] sm:$0xff]
      %v658 = vld [vmem:[#allocation2 + $0x28] sm:$0xff]
      %v659 = vld [vmem:[#allocation2 + $0x30] sm:$0xff]
      %v660 = vld [vmem:[#allocation2 + $0x38] sm:$0xff]
      %v661 = vld [vmem:[#allocation2 + $0x40] sm:$0xff]
      %v662 = vld [vmem:[#allocation2 + $0x48] sm:$0xff]
      %v663 = vld [vmem:[#allocation2 + $0x50] sm:$0xff]
      %v664 = vld [vmem:[#allocation2 + $0x58] sm:$0xff]
      %v665 = vld [vmem:[#allocation2 + $0x60] sm:$0xff]
      %v666 = vld [vmem:[#allocation2 + $0x68] sm:$0xff]
      %v667 = vld [vmem:[#allocation2 + $0x70] sm:$0xff]
      %v668 = vld [vmem:[#allocation2 + $0x78] sm:$0xff]
      %v669 = vld [vmem:[#allocation2 + $0x80] sm:$0xff]
      %v670 = vld [vmem:[#allocation2 + $0x88] sm:$0xff]
      %v671 = vld [vmem:[#allocation2 + $0x90] sm:$0xff]
      %v672 = vld [vmem:[#allocation2 + $0x98] sm:$0xff]
      %v673 = vld [vmem:[#allocation2 + $0xa0] sm:$0xff]
      %v674 = vld [vmem:[#allocation2 + $0xa8] sm:$0xff]
      %v675 = vld [vmem:[#allocation2 + $0xb0] sm:$0xff]
      %v676 = vld [vmem:[#allocation2 + $0xb8] sm:$0xff]
      %v677 = vld [vmem:[#allocation2 + $0xc0] sm:$0xff]
      %v678 = vld [vmem:[#allocation2 + $0xc8] sm:$0xff]
      %v679 = vld [vmem:[#allocation2 + $0xd0] sm:$0xff]
      %v680 = vld [vmem:[#allocation2 + $0xd8] sm:$0xff]
      %v681 = vld [vmem:[#allocation2 + $0xe0] sm:$0xff]
      %v682 = vld [vmem:[#allocation2 + $0xe8] sm:$0xff]
      %v683 = vld [vmem:[#allocation2 + $0xf0] sm:$0xff]
      %v684 = vld [vmem:[#allocation2 + $0xf8] sm:$0xff]
      %v685 = vld [vmem:[%s2] sm:$0x1]
      %v687 = vperm.slane %v685, 0
      %v689 = vadd.f32 %v653, %v687
      %v690 = vadd.f32 %v654, %v687
      %v691 = vadd.f32 %v655, %v687
      %v692 = vadd.f32 %v656, %v687
      %v693 = vadd.f32 %v657, %v687
      %v694 = vadd.f32 %v658, %v687
      %v695 = vadd.f32 %v659, %v687
      %v696 = vadd.f32 %v660, %v687
      %v697 = vadd.f32 %v661, %v687
      %v698 = vadd.f32 %v662, %v687
      %v699 = vadd.f32 %v663, %v687
      %v700 = vadd.f32 %v664, %v687
      %v701 = vadd.f32 %v665, %v687
      %v702 = vadd.f32 %v666, %v687
      %v703 = vadd.f32 %v667, %v687
      %v704 = vadd.f32 %v668, %v687
      %v705 = vadd.f32 %v669, %v687
      %v706 = vadd.f32 %v670, %v687
      %v707 = vadd.f32 %v671, %v687
      %v708 = vadd.f32 %v672, %v687
      %v709 = vadd.f32 %v673, %v687
      %v710 = vadd.f32 %v674, %v687
      %v711 = vadd.f32 %v675, %v687
      %v712 = vadd.f32 %v676, %v687
      %v713 = vadd.f32 %v677, %v687
      %v714 = vadd.f32 %v678, %v687
      %v715 = vadd.f32 %v679, %v687
      %v716 = vadd.f32 %v680, %v687
      %v717 = vadd.f32 %v681, %v687
      %v718 = vadd.f32 %v682, %v687
      %v719 = vadd.f32 %v683, %v687
      %v720 = vadd.f32 %v684, %v687
      %v721 = vpack.c.bf16 %v689, %v689
      %v722 = vpack.c.bf16 %v690, %v690
      %v723 = vpack.c.bf16 %v691, %v691
      %v724 = vpack.c.bf16 %v692, %v692
      %v725 = vpack.c.bf16 %v693, %v693
      %v726 = vpack.c.bf16 %v694, %v694
      %v727 = vpack.c.bf16 %v695, %v695
      %v728 = vpack.c.bf16 %v696, %v696
      %v729 = vpack.c.bf16 %v697, %v697
      %v730 = vpack.c.bf16 %v698, %v698
      %v731 = vpack.c.bf16 %v699, %v699
      %v732 = vpack.c.bf16 %v700, %v700
      %v733 = vpack.c.bf16 %v701, %v701
      %v734 = vpack.c.bf16 %v702, %v702
      %v735 = vpack.c.bf16 %v703, %v703
      %v736 = vpack.c.bf16 %v704, %v704
      %v737 = vpack.c.bf16 %v705, %v705
      %v738 = vpack.c.bf16 %v706, %v706
      %v739 = vpack.c.bf16 %v707, %v707
      %v740 = vpack.c.bf16 %v708, %v708
      %v741 = vpack.c.bf16 %v709, %v709
      %v742 = vpack.c.bf16 %v710, %v710
      %v743 = vpack.c.bf16 %v711, %v711
      %v744 = vpack.c.bf16 %v712, %v712
      %v745 = vpack.c.bf16 %v713, %v713
      %v746 = vpack.c.bf16 %v714, %v714
      %v747 = vpack.c.bf16 %v715, %v715
      %v748 = vpack.c.bf16 %v716, %v716
      %v749 = vpack.c.bf16 %v717, %v717
      %v750 = vpack.c.bf16 %v718, %v718
      %v751 = vpack.c.bf16 %v719, %v719
      %v752 = vpack.c.bf16 %v720, %v720
      %753 = vst [vmem:[#allocation3] sm:$0xf] %v721
      %754 = vst [vmem:[#allocation3 + $0x4] sm:$0xf] %v722
      %755 = vst [vmem:[#allocation3 + $0x8] sm:$0xf] %v723
      %756 = vst [vmem:[#allocation3 + $0xc] sm:$0xf] %v724
      %757 = vst [vmem:[#allocation3 + $0x10] sm:$0xf] %v725
      %758 = vst [vmem:[#allocation3 + $0x14] sm:$0xf] %v726
      %759 = vst [vmem:[#allocation3 + $0x18] sm:$0xf] %v727
      %760 = vst [vmem:[#allocation3 + $0x1c] sm:$0xf] %v728
      %761 = vst [vmem:[#allocation3 + $0x20] sm:$0xf] %v729
      %762 = vst [vmem:[#allocation3 + $0x24] sm:$0xf] %v730
      %763 = vst [vmem:[#allocation3 + $0x28] sm:$0xf] %v731
      %764 = vst [vmem:[#allocation3 + $0x2c] sm:$0xf] %v732
      %765 = vst [vmem:[#allocation3 + $0x30] sm:$0xf] %v733
      %766 = vst [vmem:[#allocation3 + $0x34] sm:$0xf] %v734
      %767 = vst [vmem:[#allocation3 + $0x38] sm:$0xf] %v735
      %768 = vst [vmem:[#allocation3 + $0x3c] sm:$0xf] %v736
      %769 = vst [vmem:[#allocation3 + $0x40] sm:$0xf] %v737
      %770 = vst [vmem:[#allocation3 + $0x44] sm:$0xf] %v738
      %771 = vst [vmem:[#allocation3 + $0x48] sm:$0xf] %v739
      %772 = vst [vmem:[#allocation3 + $0x4c] sm:$0xf] %v740
      %773 = vst [vmem:[#allocation3 + $0x50] sm:$0xf] %v741
      %774 = vst [vmem:[#allocation3 + $0x54] sm:$0xf] %v742
      %775 = vst [vmem:[#allocation3 + $0x58] sm:$0xf] %v743
      %776 = vst [vmem:[#allocation3 + $0x5c] sm:$0xf] %v744
      %777 = vst [vmem:[#allocation3 + $0x60] sm:$0xf] %v745
      %778 = vst [vmem:[#allocation3 + $0x64] sm:$0xf] %v746
      %779 = vst [vmem:[#allocation3 + $0x68] sm:$0xf] %v747
      %780 = vst [vmem:[#allocation3 + $0x6c] sm:$0xf] %v748
      %781 = vst [vmem:[#allocation3 + $0x70] sm:$0xf] %v749
      %782 = vst [vmem:[#allocation3 + $0x74] sm:$0xf] %v750
      %783 = vst [vmem:[#allocation3 + $0x78] sm:$0xf] %v751
      %784 = vst [vmem:[#allocation3 + $0x7c] sm:$0xf] %v752
    $region21: #{linear_snowball_forward.9} parent=1 // pred_fallthru
      _
    // Predicated region
    $region22: #{linear_snowball_forward.9} parent=1 // pred_check
      _
    $region23: #{linear_snowball_forward.9} parent=1 // pred_check_branch
      %786 = sbr.rel (0) target = $region25
    $region24: #{linear_snowball_forward.9} parent=1 // pred_region
      %s787 = scalar_lea.vmem %s4, 8
      // Predicated region
      $region26: #{linear_snowball_forward.9} parent=24 // pred_check
        _
      $region27: #{linear_snowball_forward.9} parent=24 // pred_check_branch
        %789 = sbr.rel (0) target = $region29
      $region28: #{linear_snowball_forward.9} parent=24 // pred_region
        // Predicated region
        $region30: #{linear_snowball_forward.9} parent=28 // pred_check
          _
        $region31: #{linear_snowball_forward.9} parent=28 // pred_check_branch
          %791 = sbr.rel target = $region33
        $region32: #{linear_snowball_forward.9} parent=28 // pred_region
          // Predicated region
          $region45: #{linear_snowball_forward.9} parent=32 // pred_check
            _
          $region46: #{linear_snowball_forward.9} parent=32 // pred_check_branch
            %869 = sbr.rel (0) target = $region48
          $region47: #{linear_snowball_forward.9} parent=32 // pred_region
            loop: start=0, step=1, limit=1
            $region49: #{linear_snowball_forward.9} parent=47 // loop_pre_header
              _
            $region50: #{linear_snowball_forward.9} parent=47 // loop_header
              %s871 = sphi 0, %s875
              %p872 = scmp.ge.s32.totalorder %s871, 1
              %s876 = sphi [#allocation3], [#allocation3]
              %s877 = sphi %s787, %s787
            $region51: #{linear_snowball_forward.9} parent=47 // loop_header_branch
              %874 = sbr.rel (%p872) target = $region55
            $region52: #{linear_snowball_forward.9} parent=47 // loop_body
              _
            $region53: #{linear_snowball_forward.9} parent=47 // loop_footer
              %s875 = sadd.s32 1, %s871
            $region54: #{linear_snowball_forward.9} parent=47 // loop_footer_branch
              %870 = sbr.rel target = $region50
            $region55: #{linear_snowball_forward.9} parent=47 // loop_exit
              _
            %s879 = ssub.s32 16, 1
            loop: start=0, step=1, limit=1
            $region56: #{linear_snowball_forward.9} parent=47 // loop_pre_header
              _
            $region57: #{linear_snowball_forward.9} parent=47 // loop_header
              %s881 = sphi 0, %s885
              %p882 = scmp.ge.s32.totalorder %s881, 1
              %s886 = sphi [#allocation3], [#allocation3]
              %s887 = sphi %s787, %s787
            $region58: #{linear_snowball_forward.9} parent=47 // loop_header_branch
              %884 = sbr.rel (%p882) target = $region62
            $region59: #{linear_snowball_forward.9} parent=47 // loop_body
              %v888 = vld [vmem:[%s886] sm:%s879]
              %889 = vst [vmem:[%s887] sm:%s879] %v888
              %v890 = vld [vmem:[%s886 + $0x4] sm:%s879]
              %891 = vst [vmem:[%s887 + $0xc] sm:%s879] %v890
              %v892 = vld [vmem:[%s886 + $0x8] sm:%s879]
              %893 = vst [vmem:[%s887 + $0x18] sm:%s879] %v892
              %v894 = vld [vmem:[%s886 + $0xc] sm:%s879]
              %895 = vst [vmem:[%s887 + $0x24] sm:%s879] %v894
              %v896 = vld [vmem:[%s886 + $0x10] sm:%s879]
              %897 = vst [vmem:[%s887 + $0x30] sm:%s879] %v896
              %v898 = vld [vmem:[%s886 + $0x14] sm:%s879]
              %899 = vst [vmem:[%s887 + $0x3c] sm:%s879] %v898
              %v900 = vld [vmem:[%s886 + $0x18] sm:%s879]
              %901 = vst [vmem:[%s887 + $0x48] sm:%s879] %v900
              %v902 = vld [vmem:[%s886 + $0x1c] sm:%s879]
              %903 = vst [vmem:[%s887 + $0x54] sm:%s879] %v902
              %v904 = vld [vmem:[%s886 + $0x20] sm:%s879]
              %905 = vst [vmem:[%s887 + $0x60] sm:%s879] %v904
              %v906 = vld [vmem:[%s886 + $0x24] sm:%s879]
              %907 = vst [vmem:[%s887 + $0x6c] sm:%s879] %v906
              %v908 = vld [vmem:[%s886 + $0x28] sm:%s879]
              %909 = vst [vmem:[%s887 + $0x78] sm:%s879] %v908
              %v910 = vld [vmem:[%s886 + $0x2c] sm:%s879]
              %911 = vst [vmem:[%s887 + $0x84] sm:%s879] %v910
              %v912 = vld [vmem:[%s886 + $0x30] sm:%s879]
              %913 = vst [vmem:[%s887 + $0x90] sm:%s879] %v912
              %v914 = vld [vmem:[%s886 + $0x34] sm:%s879]
              %915 = vst [vmem:[%s887 + $0x9c] sm:%s879] %v914
              %v916 = vld [vmem:[%s886 + $0x38] sm:%s879]
              %917 = vst [vmem:[%s887 + $0xa8] sm:%s879] %v916
              %v918 = vld [vmem:[%s886 + $0x3c] sm:%s879]
              %919 = vst [vmem:[%s887 + $0xb4] sm:%s879] %v918
              %v920 = vld [vmem:[%s886 + $0x40] sm:%s879]
              %921 = vst [vmem:[%s887 + $0xc0] sm:%s879] %v920
              %v922 = vld [vmem:[%s886 + $0x44] sm:%s879]
              %923 = vst [vmem:[%s887 + $0xcc] sm:%s879] %v922
              %v924 = vld [vmem:[%s886 + $0x48] sm:%s879]
              %925 = vst [vmem:[%s887 + $0xd8] sm:%s879] %v924
              %v926 = vld [vmem:[%s886 + $0x4c] sm:%s879]
              %927 = vst [vmem:[%s887 + $0xe4] sm:%s879] %v926
              %v928 = vld [vmem:[%s886 + $0x50] sm:%s879]
              %929 = vst [vmem:[%s887 + $0xf0] sm:%s879] %v928
              %v930 = vld [vmem:[%s886 + $0x54] sm:%s879]
              %931 = vst [vmem:[%s887 + $0xfc] sm:%s879] %v930
              %v932 = vld [vmem:[%s886 + $0x58] sm:%s879]
              %933 = vst [vmem:[%s887 + $0x108] sm:%s879] %v932
              %v934 = vld [vmem:[%s886 + $0x5c] sm:%s879]
              %935 = vst [vmem:[%s887 + $0x114] sm:%s879] %v934
              %v936 = vld [vmem:[%s886 + $0x60] sm:%s879]
              %937 = vst [vmem:[%s887 + $0x120] sm:%s879] %v936
              %v938 = vld [vmem:[%s886 + $0x64] sm:%s879]
              %939 = vst [vmem:[%s887 + $0x12c] sm:%s879] %v938
              %v940 = vld [vmem:[%s886 + $0x68] sm:%s879]
              %941 = vst [vmem:[%s887 + $0x138] sm:%s879] %v940
              %v942 = vld [vmem:[%s886 + $0x6c] sm:%s879]
              %943 = vst [vmem:[%s887 + $0x144] sm:%s879] %v942
              %v944 = vld [vmem:[%s886 + $0x70] sm:%s879]
              %945 = vst [vmem:[%s887 + $0x150] sm:%s879] %v944
              %v946 = vld [vmem:[%s886 + $0x74] sm:%s879]
              %947 = vst [vmem:[%s887 + $0x15c] sm:%s879] %v946
              %v948 = vld [vmem:[%s886 + $0x78] sm:%s879]
              %949 = vst [vmem:[%s887 + $0x168] sm:%s879] %v948
              %v950 = vld [vmem:[%s886 + $0x7c] sm:%s879]
              %951 = vst [vmem:[%s887 + $0x174] sm:%s879] %v950
            $region60: #{linear_snowball_forward.9} parent=47 // loop_footer
              %s885 = sadd.s32 1, %s881
            $region61: #{linear_snowball_forward.9} parent=47 // loop_footer_branch
              %880 = sbr.rel target = $region57
            $region62: #{linear_snowball_forward.9} parent=47 // loop_exit
              _
          $region48: #{linear_snowball_forward.9} parent=32 // pred_fallthru
            _
        $region33: #{linear_snowball_forward.9} parent=28 // pred_fallthru
          _
        // Predicated region
        $region34: #{linear_snowball_forward.9} parent=28 // pred_check
          _
        $region35: #{linear_snowball_forward.9} parent=28 // pred_check_branch
          %793 = sbr.rel (0) target = $region37
        $region36: #{linear_snowball_forward.9} parent=28 // pred_region
          %s795 = ssub.s32 16, 1
          loop: start=0, step=1, limit=1
          $region38: #{linear_snowball_forward.9} parent=36 // loop_pre_header
            _
          $region39: #{linear_snowball_forward.9} parent=36 // loop_header
            %s797 = sphi 0, %s801
            %p798 = scmp.ge.s32.totalorder %s797, 1
            %s802 = sphi [#allocation3], [#allocation3]
            %s803 = sphi %s787, %s787
          $region40: #{linear_snowball_forward.9} parent=36 // loop_header_branch
            %800 = sbr.rel (%p798) target = $region44
          $region41: #{linear_snowball_forward.9} parent=36 // loop_body
            %v804 = vld [vmem:[%s802] sm:%s795]
            %805 = vst [vmem:[%s803] sm:%s795] %v804
            %v806 = vld [vmem:[%s802 + $0x4] sm:%s795]
            %807 = vst [vmem:[%s803 + $0xc] sm:%s795] %v806
            %v808 = vld [vmem:[%s802 + $0x8] sm:%s795]
            %809 = vst [vmem:[%s803 + $0x18] sm:%s795] %v808
            %v810 = vld [vmem:[%s802 + $0xc] sm:%s795]
            %811 = vst [vmem:[%s803 + $0x24] sm:%s795] %v810
            %v812 = vld [vmem:[%s802 + $0x10] sm:%s795]
            %813 = vst [vmem:[%s803 + $0x30] sm:%s795] %v812
            %v814 = vld [vmem:[%s802 + $0x14] sm:%s795]
            %815 = vst [vmem:[%s803 + $0x3c] sm:%s795] %v814
            %v816 = vld [vmem:[%s802 + $0x18] sm:%s795]
            %817 = vst [vmem:[%s803 + $0x48] sm:%s795] %v816
            %v818 = vld [vmem:[%s802 + $0x1c] sm:%s795]
            %819 = vst [vmem:[%s803 + $0x54] sm:%s795] %v818
            %v820 = vld [vmem:[%s802 + $0x20] sm:%s795]
            %821 = vst [vmem:[%s803 + $0x60] sm:%s795] %v820
            %v822 = vld [vmem:[%s802 + $0x24] sm:%s795]
            %823 = vst [vmem:[%s803 + $0x6c] sm:%s795] %v822
            %v824 = vld [vmem:[%s802 + $0x28] sm:%s795]
            %825 = vst [vmem:[%s803 + $0x78] sm:%s795] %v824
            %v826 = vld [vmem:[%s802 + $0x2c] sm:%s795]
            %827 = vst [vmem:[%s803 + $0x84] sm:%s795] %v826
            %v828 = vld [vmem:[%s802 + $0x30] sm:%s795]
            %829 = vst [vmem:[%s803 + $0x90] sm:%s795] %v828
            %v830 = vld [vmem:[%s802 + $0x34] sm:%s795]
            %831 = vst [vmem:[%s803 + $0x9c] sm:%s795] %v830
            %v832 = vld [vmem:[%s802 + $0x38] sm:%s795]
            %833 = vst [vmem:[%s803 + $0xa8] sm:%s795] %v832
            %v834 = vld [vmem:[%s802 + $0x3c] sm:%s795]
            %835 = vst [vmem:[%s803 + $0xb4] sm:%s795] %v834
            %v836 = vld [vmem:[%s802 + $0x40] sm:%s795]
            %837 = vst [vmem:[%s803 + $0xc0] sm:%s795] %v836
            %v838 = vld [vmem:[%s802 + $0x44] sm:%s795]
            %839 = vst [vmem:[%s803 + $0xcc] sm:%s795] %v838
            %v840 = vld [vmem:[%s802 + $0x48] sm:%s795]
            %841 = vst [vmem:[%s803 + $0xd8] sm:%s795] %v840
            %v842 = vld [vmem:[%s802 + $0x4c] sm:%s795]
            %843 = vst [vmem:[%s803 + $0xe4] sm:%s795] %v842
            %v844 = vld [vmem:[%s802 + $0x50] sm:%s795]
            %845 = vst [vmem:[%s803 + $0xf0] sm:%s795] %v844
            %v846 = vld [vmem:[%s802 + $0x54] sm:%s795]
            %847 = vst [vmem:[%s803 + $0xfc] sm:%s795] %v846
            %v848 = vld [vmem:[%s802 + $0x58] sm:%s795]
            %849 = vst [vmem:[%s803 + $0x108] sm:%s795] %v848
            %v850 = vld [vmem:[%s802 + $0x5c] sm:%s795]
            %851 = vst [vmem:[%s803 + $0x114] sm:%s795] %v850
            %v852 = vld [vmem:[%s802 + $0x60] sm:%s795]
            %853 = vst [vmem:[%s803 + $0x120] sm:%s795] %v852
            %v854 = vld [vmem:[%s802 + $0x64] sm:%s795]
            %855 = vst [vmem:[%s803 + $0x12c] sm:%s795] %v854
            %v856 = vld [vmem:[%s802 + $0x68] sm:%s795]
            %857 = vst [vmem:[%s803 + $0x138] sm:%s795] %v856
            %v858 = vld [vmem:[%s802 + $0x6c] sm:%s795]
            %859 = vst [vmem:[%s803 + $0x144] sm:%s795] %v858
            %v860 = vld [vmem:[%s802 + $0x70] sm:%s795]
            %861 = vst [vmem:[%s803 + $0x150] sm:%s795] %v860
            %v862 = vld [vmem:[%s802 + $0x74] sm:%s795]
            %863 = vst [vmem:[%s803 + $0x15c] sm:%s795] %v862
            %v864 = vld [vmem:[%s802 + $0x78] sm:%s795]
            %865 = vst [vmem:[%s803 + $0x168] sm:%s795] %v864
            %v866 = vld [vmem:[%s802 + $0x7c] sm:%s795]
            %867 = vst [vmem:[%s803 + $0x174] sm:%s795] %v866
          $region42: #{linear_snowball_forward.9} parent=36 // loop_footer
            %s801 = sadd.s32 1, %s797
          $region43: #{linear_snowball_forward.9} parent=36 // loop_footer_branch
            %796 = sbr.rel target = $region39
          $region44: #{linear_snowball_forward.9} parent=36 // loop_exit
            _
        $region37: #{linear_snowball_forward.9} parent=28 // pred_fallthru
          _
      $region29: #{linear_snowball_forward.9} parent=24 // pred_fallthru
        _
      %952 = vnop
    $region25: #{linear_snowball_forward.9} parent=1 // pred_fallthru
      _
    // Predicated region
    $region63: #{linear_snowball_forward.9} parent=1 // pred_check
      _
    $region64: #{linear_snowball_forward.9} parent=1 // pred_check_branch
      %954 = sbr.rel (0) target = $region66
    $region65: #{linear_snowball_forward.9} parent=1 // pred_region
      _
    $region66: #{linear_snowball_forward.9} parent=1 // pred_fallthru
      _

// kernel: linear_snowball_forward.10
$region0: #{linear_snowball_forward.10}
  #allocation0 [shape = 'u32[]', space=smem, size = 0x4, offset = 0x4, fixed_abs, tag = 'smem constant byte address 0x4 - core index']
  #allocation1 [shape = 'u32[72,128]{1,0:T(1,128)}', space=vmem, size = 0x9000, scoped, tag = 'internal scratch']
  %s0 = inlined_call_operand.vmem [shape: bf16[256,384], index: 0, kind: input, shape index: {}]
  %s1 = inlined_call_operand.vmem [shape: bf16[384,128], index: 1, kind: input, shape index: {}]
  %s2 = inlined_call_operand.vmem [shape: bf16[256,128], index: 2, kind: output, shape index: {}]
  %s3 = sld [smem:[#allocation0]]
  $region18: #{linear_snowball_forward.10} parent=0
    _
  %s5 = ssub.s32 1, %s3
  %s6 = scalar_select 0, %s5, %s3
  // Predicated region
  $region2: #{linear_snowball_forward.10} parent=0 // pred_check
    _
  $region3: #{linear_snowball_forward.10} parent=0 // pred_check_branch
    %8 = sbr.rel (0) target = $region5
  $region4: #{linear_snowball_forward.10} parent=0 // pred_region
    _
  $region5: #{linear_snowball_forward.10} parent=0 // pred_fallthru
    _
  // Predicated region
  $region6: #{linear_snowball_forward.10} parent=0 // pred_check
    _
  $region7: #{linear_snowball_forward.10} parent=0 // pred_check_branch
    %10 = sbr.rel (0) target = $region9
  $region8: #{linear_snowball_forward.10} parent=0 // pred_region
    _
  $region9: #{linear_snowball_forward.10} parent=0 // pred_fallthru
    _
  %v11 = vld [vmem:[%s0] sm:$0xff]
  %v12 = vld [vmem:[%s0 + $0x8] sm:$0xf]
  %v13 = vld [vmem:[%s0 + $0xc] sm:$0xff]
  %v14 = vld [vmem:[%s0 + $0x14] sm:$0xf]
  %v15 = vld [vmem:[%s0 + $0x18] sm:$0xff]
  %v16 = vld [vmem:[%s0 + $0x20] sm:$0xf]
  %v17 = vld [vmem:[%s0 + $0x24] sm:$0xff]
  %v18 = vld [vmem:[%s0 + $0x2c] sm:$0xf]
  %v19 = vld [vmem:[%s0 + $0x30] sm:$0xff]
  %v20 = vld [vmem:[%s0 + $0x38] sm:$0xf]
  %v21 = vld [vmem:[%s0 + $0x3c] sm:$0xff]
  %v22 = vld [vmem:[%s0 + $0x44] sm:$0xf]
  %v23 = vld [vmem:[%s0 + $0x48] sm:$0xff]
  %v24 = vld [vmem:[%s0 + $0x50] sm:$0xf]
  %v25 = vld [vmem:[%s0 + $0x54] sm:$0xff]
  %v26 = vld [vmem:[%s0 + $0x5c] sm:$0xf]
  %v27 = vld [vmem:[%s0 + $0x60] sm:$0xff]
  %v28 = vld [vmem:[%s0 + $0x68] sm:$0xf]
  %v29 = vld [vmem:[%s0 + $0x6c] sm:$0xff]
  %v30 = vld [vmem:[%s0 + $0x74] sm:$0xf]
  %v31 = vld [vmem:[%s0 + $0x78] sm:$0xff]
  %v32 = vld [vmem:[%s0 + $0x80] sm:$0xf]
  %v33 = vld [vmem:[%s0 + $0x84] sm:$0xff]
  %v34 = vld [vmem:[%s0 + $0x8c] sm:$0xf]
  %v35 = vld [vmem:[%s0 + $0x90] sm:$0xff]
  %v36 = vld [vmem:[%s0 + $0x98] sm:$0xf]
  %v37 = vld [vmem:[%s0 + $0x9c] sm:$0xff]
  %v38 = vld [vmem:[%s0 + $0xa4] sm:$0xf]
  %v39 = vld [vmem:[%s0 + $0xa8] sm:$0xff]
  %v40 = vld [vmem:[%s0 + $0xb0] sm:$0xf]
  %v41 = vld [vmem:[%s0 + $0xb4] sm:$0xff]
  %v42 = vld [vmem:[%s0 + $0xbc] sm:$0xf]
  %v43 = vld [vmem:[%s0 + $0xc0] sm:$0xff]
  %v44 = vld [vmem:[%s0 + $0xc8] sm:$0xf]
  %v45 = vld [vmem:[%s0 + $0xcc] sm:$0xff]
  %v46 = vld [vmem:[%s0 + $0xd4] sm:$0xf]
  %v47 = vld [vmem:[%s0 + $0xd8] sm:$0xff]
  %v48 = vld [vmem:[%s0 + $0xe0] sm:$0xf]
  %v49 = vld [vmem:[%s0 + $0xe4] sm:$0xff]
  %v50 = vld [vmem:[%s0 + $0xec] sm:$0xf]
  %v51 = vld [vmem:[%s0 + $0xf0] sm:$0xff]
  %v52 = vld [vmem:[%s0 + $0xf8] sm:$0xf]
  %v53 = vld [vmem:[%s0 + $0xfc] sm:$0xff]
  %v54 = vld [vmem:[%s0 + $0x104] sm:$0xf]
  %v55 = vld [vmem:[%s0 + $0x108] sm:$0xff]
  %v56 = vld [vmem:[%s0 + $0x110] sm:$0xf]
  %v57 = vld [vmem:[%s0 + $0x114] sm:$0xff]
  %v58 = vld [vmem:[%s0 + $0x11c] sm:$0xf]
  %v59 = vld [vmem:[%s0 + $0x120] sm:$0xff]
  %v60 = vld [vmem:[%s0 + $0x128] sm:$0xf]
  %v61 = vld [vmem:[%s0 + $0x12c] sm:$0xff]
  %v62 = vld [vmem:[%s0 + $0x134] sm:$0xf]
  %v63 = vld [vmem:[%s0 + $0x138] sm:$0xff]
  %v64 = vld [vmem:[%s0 + $0x140] sm:$0xf]
  %v65 = vld [vmem:[%s0 + $0x144] sm:$0xff]
  %v66 = vld [vmem:[%s0 + $0x14c] sm:$0xf]
  %v67 = vld [vmem:[%s0 + $0x150] sm:$0xff]
  %v68 = vld [vmem:[%s0 + $0x158] sm:$0xf]
  %v69 = vld [vmem:[%s0 + $0x15c] sm:$0xff]
  %v70 = vld [vmem:[%s0 + $0x164] sm:$0xf]
  %v71 = vld [vmem:[%s0 + $0x168] sm:$0xff]
  %v72 = vld [vmem:[%s0 + $0x170] sm:$0xf]
  %v73 = vld [vmem:[%s0 + $0x174] sm:$0xff]
  %v74 = vld [vmem:[%s0 + $0x17c] sm:$0xf]
  %v75 = vld [vmem:[%s1] sm:$0xf]
  %v76 = vld [vmem:[%s1 + $0x4] sm:$0xf]
  %v77 = vld [vmem:[%s1 + $0x8] sm:$0xf]
  %v78 = vld [vmem:[%s1 + $0xc] sm:$0xf]
  %v79 = vld [vmem:[%s1 + $0x10] sm:$0xf]
  %v80 = vld [vmem:[%s1 + $0x14] sm:$0xf]
  %v81 = vld [vmem:[%s1 + $0x18] sm:$0xf]
  %v82 = vld [vmem:[%s1 + $0x1c] sm:$0xf]
  %v83 = vld [vmem:[%s1 + $0x20] sm:$0xf]
  %v84 = vld [vmem:[%s1 + $0x24] sm:$0xf]
  %v85 = vld [vmem:[%s1 + $0x28] sm:$0xf]
  %v86 = vld [vmem:[%s1 + $0x2c] sm:$0xf]
  %v87 = vld [vmem:[%s1 + $0x30] sm:$0xf]
  %v88 = vld [vmem:[%s1 + $0x34] sm:$0xf]
  %v89 = vld [vmem:[%s1 + $0x38] sm:$0xf]
  %v90 = vld [vmem:[%s1 + $0x3c] sm:$0xf]
  %v91 = vld [vmem:[%s1 + $0x40] sm:$0xf]
  %v92 = vld [vmem:[%s1 + $0x44] sm:$0xf]
  %v93 = vld [vmem:[%s1 + $0x48] sm:$0xf]
  %v94 = vld [vmem:[%s1 + $0x4c] sm:$0xf]
  %v95 = vld [vmem:[%s1 + $0x50] sm:$0xf]
  %v96 = vld [vmem:[%s1 + $0x54] sm:$0xf]
  %v97 = vld [vmem:[%s1 + $0x58] sm:$0xf]
  %v98 = vld [vmem:[%s1 + $0x5c] sm:$0xf]
  %v99 = vld [vmem:[%s1 + $0x60] sm:$0xf]
  %v100 = vld [vmem:[%s1 + $0x64] sm:$0xf]
  %v101 = vld [vmem:[%s1 + $0x68] sm:$0xf]
  %v102 = vld [vmem:[%s1 + $0x6c] sm:$0xf]
  %v103 = vld [vmem:[%s1 + $0x70] sm:$0xf]
  %v104 = vld [vmem:[%s1 + $0x74] sm:$0xf]
  %v105 = vld [vmem:[%s1 + $0x78] sm:$0xf]
  %v106 = vld [vmem:[%s1 + $0x7c] sm:$0xf]
  %v107 = vld [vmem:[%s1 + $0x80] sm:$0xf]
  %v108 = vld [vmem:[%s1 + $0x84] sm:$0xf]
  %v109 = vld [vmem:[%s1 + $0x88] sm:$0xf]
  %v110 = vld [vmem:[%s1 + $0x8c] sm:$0xf]
  %v111 = vld [vmem:[%s1 + $0x90] sm:$0xf]
  %v112 = vld [vmem:[%s1 + $0x94] sm:$0xf]
  %v113 = vld [vmem:[%s1 + $0x98] sm:$0xf]
  %v114 = vld [vmem:[%s1 + $0x9c] sm:$0xf]
  %v115 = vld [vmem:[%s1 + $0xa0] sm:$0xf]
  %v116 = vld [vmem:[%s1 + $0xa4] sm:$0xf]
  %v117 = vld [vmem:[%s1 + $0xa8] sm:$0xf]
  %v118 = vld [vmem:[%s1 + $0xac] sm:$0xf]
  %v119 = vld [vmem:[%s1 + $0xb0] sm:$0xf]
  %v120 = vld [vmem:[%s1 + $0xb4] sm:$0xf]
  %v121 = vld [vmem:[%s1 + $0xb8] sm:$0xf]
  %v122 = vld [vmem:[%s1 + $0xbc] sm:$0xf]
  %v187 = vunpack.c.l.b16 %v11
  %v188 = vunpack.c.h.b16 %v11
  %v189 = vunpack.c.l.b16 %v12
  %v190 = vunpack.c.l.b16 %v13
  %v191 = vunpack.c.h.b16 %v13
  %v192 = vunpack.c.l.b16 %v14
  %v193 = vunpack.c.l.b16 %v15
  %v194 = vunpack.c.h.b16 %v15
  %v195 = vunpack.c.l.b16 %v16
  %v196 = vunpack.c.l.b16 %v17
  %v197 = vunpack.c.h.b16 %v17
  %v198 = vunpack.c.l.b16 %v18
  %v199 = vunpack.c.l.b16 %v19
  %v200 = vunpack.c.h.b16 %v19
  %v201 = vunpack.c.l.b16 %v20
  %v202 = vunpack.c.l.b16 %v21
  %v203 = vunpack.c.h.b16 %v21
  %v204 = vunpack.c.l.b16 %v22
  %v205 = vunpack.c.l.b16 %v23
  %v206 = vunpack.c.h.b16 %v23
  %v207 = vunpack.c.l.b16 %v24
  %v208 = vunpack.c.l.b16 %v25
  %v209 = vunpack.c.h.b16 %v25
  %v210 = vunpack.c.l.b16 %v26
  %v211 = vunpack.c.l.b16 %v27
  %v212 = vunpack.c.h.b16 %v27
  %v213 = vunpack.c.l.b16 %v28
  %v214 = vunpack.c.l.b16 %v29
  %v215 = vunpack.c.h.b16 %v29
  %v216 = vunpack.c.l.b16 %v30
  %v217 = vunpack.c.l.b16 %v31
  %v218 = vunpack.c.h.b16 %v31
  %v219 = vunpack.c.l.b16 %v32
  %v220 = vunpack.c.l.b16 %v33
  %v221 = vunpack.c.h.b16 %v33
  %v222 = vunpack.c.l.b16 %v34
  %v223 = vunpack.c.l.b16 %v35
  %v224 = vunpack.c.h.b16 %v35
  %v225 = vunpack.c.l.b16 %v36
  %v226 = vunpack.c.l.b16 %v37
  %v227 = vunpack.c.h.b16 %v37
  %v228 = vunpack.c.l.b16 %v38
  %v229 = vunpack.c.l.b16 %v39
  %v230 = vunpack.c.h.b16 %v39
  %v231 = vunpack.c.l.b16 %v40
  %v232 = vunpack.c.l.b16 %v41
  %v233 = vunpack.c.h.b16 %v41
  %v234 = vunpack.c.l.b16 %v42
  %v235 = vunpack.c.l.b16 %v43
  %v236 = vunpack.c.h.b16 %v43
  %v237 = vunpack.c.l.b16 %v44
  %v238 = vunpack.c.l.b16 %v45
  %v239 = vunpack.c.h.b16 %v45
  %v240 = vunpack.c.l.b16 %v46
  %v241 = vunpack.c.l.b16 %v47
  %v242 = vunpack.c.h.b16 %v47
  %v243 = vunpack.c.l.b16 %v48
  %v244 = vunpack.c.l.b16 %v49
  %v245 = vunpack.c.h.b16 %v49
  %v246 = vunpack.c.l.b16 %v50
  %v247 = vunpack.c.l.b16 %v51
  %v248 = vunpack.c.h.b16 %v51
  %v249 = vunpack.c.l.b16 %v52
  %v250 = vunpack.c.l.b16 %v53
  %v251 = vunpack.c.h.b16 %v53
  %v252 = vunpack.c.l.b16 %v54
  %v253 = vunpack.c.l.b16 %v55
  %v254 = vunpack.c.h.b16 %v55
  %v255 = vunpack.c.l.b16 %v56
  %v256 = vunpack.c.l.b16 %v57
  %v257 = vunpack.c.h.b16 %v57
  %v258 = vunpack.c.l.b16 %v58
  %v259 = vunpack.c.l.b16 %v59
  %v260 = vunpack.c.h.b16 %v59
  %v261 = vunpack.c.l.b16 %v60
  %v262 = vunpack.c.l.b16 %v61
  %v263 = vunpack.c.h.b16 %v61
  %v264 = vunpack.c.l.b16 %v62
  %v265 = vunpack.c.l.b16 %v63
  %v266 = vunpack.c.h.b16 %v63
  %v267 = vunpack.c.l.b16 %v64
  %v268 = vunpack.c.l.b16 %v65
  %v269 = vunpack.c.h.b16 %v65
  %v270 = vunpack.c.l.b16 %v66
  %v271 = vunpack.c.l.b16 %v67
  %v272 = vunpack.c.h.b16 %v67
  %v273 = vunpack.c.l.b16 %v68
  %v274 = vunpack.c.l.b16 %v69
  %v275 = vunpack.c.h.b16 %v69
  %v276 = vunpack.c.l.b16 %v70
  %v277 = vunpack.c.l.b16 %v71
  %v278 = vunpack.c.h.b16 %v71
  %v279 = vunpack.c.l.b16 %v72
  %v280 = vunpack.c.l.b16 %v73
  %v281 = vunpack.c.h.b16 %v73
  %v282 = vunpack.c.l.b16 %v74
  %v283 = vpack.c.b16 %v190, %v187
  %v284 = vpack.c.b16 %v191, %v188
  %v285 = vpack.c.b16 %v192, %v189
  %v286 = vpack.c.b16 %v196, %v193
  %v287 = vpack.c.b16 %v197, %v194
  %v288 = vpack.c.b16 %v198, %v195
  %v289 = vpack.c.b16 %v202, %v199
  %v290 = vpack.c.b16 %v203, %v200
  %v291 = vpack.c.b16 %v204, %v201
  %v292 = vpack.c.b16 %v208, %v205
  %v293 = vpack.c.b16 %v209, %v206
  %v294 = vpack.c.b16 %v210, %v207
  %v295 = vpack.c.b16 %v214, %v211
  %v296 = vpack.c.b16 %v215, %v212
  %v297 = vpack.c.b16 %v216, %v213
  %v298 = vpack.c.b16 %v220, %v217
  %v299 = vpack.c.b16 %v221, %v218
  %v300 = vpack.c.b16 %v222, %v219
  %v301 = vpack.c.b16 %v226, %v223
  %v302 = vpack.c.b16 %v227, %v224
  %v303 = vpack.c.b16 %v228, %v225
  %v304 = vpack.c.b16 %v232, %v229
  %v305 = vpack.c.b16 %v233, %v230
  %v306 = vpack.c.b16 %v234, %v231
  %v307 = vpack.c.b16 %v238, %v235
  %v308 = vpack.c.b16 %v239, %v236
  %v309 = vpack.c.b16 %v240, %v237
  %v310 = vpack.c.b16 %v244, %v241
  %v311 = vpack.c.b16 %v245, %v242
  %v312 = vpack.c.b16 %v246, %v243
  %v313 = vpack.c.b16 %v250, %v247
  %v314 = vpack.c.b16 %v251, %v248
  %v315 = vpack.c.b16 %v252, %v249
  %v316 = vpack.c.b16 %v256, %v253
  %v317 = vpack.c.b16 %v257, %v254
  %v318 = vpack.c.b16 %v258, %v255
  %v319 = vpack.c.b16 %v262, %v259
  %v320 = vpack.c.b16 %v263, %v260
  %v321 = vpack.c.b16 %v264, %v261
  %v322 = vpack.c.b16 %v268, %v265
  %v323 = vpack.c.b16 %v269, %v266
  %v324 = vpack.c.b16 %v270, %v267
  %v325 = vpack.c.b16 %v274, %v271
  %v326 = vpack.c.b16 %v275, %v272
  %v327 = vpack.c.b16 %v276, %v273
  %v328 = vpack.c.b16 %v280, %v277
  %v329 = vpack.c.b16 %v281, %v278
  %v330 = vpack.c.b16 %v282, %v279
  %v427 = vunpack.c.l.b16 %v75
  %v428 = vunpack.c.l.b16 %v76
  %v429 = vunpack.c.l.b16 %v77
  %v430 = vunpack.c.l.b16 %v78
  %v431 = vunpack.c.l.b16 %v79
  %v432 = vunpack.c.l.b16 %v80
  %v433 = vunpack.c.l.b16 %v81
  %v434 = vunpack.c.l.b16 %v82
  %v435 = vunpack.c.l.b16 %v83
  %v436 = vunpack.c.l.b16 %v84
  %v437 = vunpack.c.l.b16 %v85
  %v438 = vunpack.c.l.b16 %v86
  %v439 = vunpack.c.l.b16 %v87
  %v440 = vunpack.c.l.b16 %v88
  %v441 = vunpack.c.l.b16 %v89
  %v442 = vunpack.c.l.b16 %v90
  %v443 = vunpack.c.l.b16 %v91
  %v444 = vunpack.c.l.b16 %v92
  %v445 = vunpack.c.l.b16 %v93
  %v446 = vunpack.c.l.b16 %v94
  %v447 = vunpack.c.l.b16 %v95
  %v448 = vunpack.c.l.b16 %v96
  %v449 = vunpack.c.l.b16 %v97
  %v450 = vunpack.c.l.b16 %v98
  %v451 = vunpack.c.l.b16 %v99
  %v452 = vunpack.c.l.b16 %v100
  %v453 = vunpack.c.l.b16 %v101
  %v454 = vunpack.c.l.b16 %v102
  %v455 = vunpack.c.l.b16 %v103
  %v456 = vunpack.c.l.b16 %v104
  %v457 = vunpack.c.l.b16 %v105
  %v458 = vunpack.c.l.b16 %v106
  %v459 = vunpack.c.l.b16 %v107
  %v460 = vunpack.c.l.b16 %v108
  %v461 = vunpack.c.l.b16 %v109
  %v462 = vunpack.c.l.b16 %v110
  %v463 = vunpack.c.l.b16 %v111
  %v464 = vunpack.c.l.b16 %v112
  %v465 = vunpack.c.l.b16 %v113
  %v466 = vunpack.c.l.b16 %v114
  %v467 = vunpack.c.l.b16 %v115
  %v468 = vunpack.c.l.b16 %v116
  %v469 = vunpack.c.l.b16 %v117
  %v470 = vunpack.c.l.b16 %v118
  %v471 = vunpack.c.l.b16 %v119
  %v472 = vunpack.c.l.b16 %v120
  %v473 = vunpack.c.l.b16 %v121
  %v474 = vunpack.c.l.b16 %v122
  %v475 = vpack.c.b16 %v428, %v427
  %v476 = vpack.c.b16 %v430, %v429
  %v477 = vpack.c.b16 %v432, %v431
  %v478 = vpack.c.b16 %v434, %v433
  %v479 = vpack.c.b16 %v436, %v435
  %v480 = vpack.c.b16 %v438, %v437
  %v481 = vpack.c.b16 %v440, %v439
  %v482 = vpack.c.b16 %v442, %v441
  %v483 = vpack.c.b16 %v444, %v443
  %v484 = vpack.c.b16 %v446, %v445
  %v485 = vpack.c.b16 %v448, %v447
  %v486 = vpack.c.b16 %v450, %v449
  %v487 = vpack.c.b16 %v452, %v451
  %v488 = vpack.c.b16 %v454, %v453
  %v489 = vpack.c.b16 %v456, %v455
  %v490 = vpack.c.b16 %v458, %v457
  %v491 = vpack.c.b16 %v460, %v459
  %v492 = vpack.c.b16 %v462, %v461
  %v493 = vpack.c.b16 %v464, %v463
  %v494 = vpack.c.b16 %v466, %v465
  %v495 = vpack.c.b16 %v468, %v467
  %v496 = vpack.c.b16 %v470, %v469
  %v497 = vpack.c.b16 %v472, %v471
  %v498 = vpack.c.b16 %v474, %v473
  %523 = vmatpush.bf16.msra.mxu0 %v482
  %524 = vmatpush.bf16.msra.mxu0 %v481
  %525 = vmatpush.bf16.msra.mxu0 %v480
  %526 = vmatpush.bf16.msra.mxu0 %v479
  %527 = vmatpush.bf16.msra.mxu0 %v478
  %528 = vmatpush.bf16.msra.mxu0 %v477
  %529 = vmatpush.bf16.msra.mxu0 %v476
  %530 = vmatpush.bf16.msra.mxu0 %v475
  %531 = vmatmul.bf16.gmra.mxu0 %v283
  %v532 = vpop.f32.mrf.mxu0
  %v533 = vadd.f32 0.0, %v532
  %v534 = vpop.f32.mrf.mxu0
  %v535 = vadd.f32 0.0, %v534
  %536 = vmatmul.bf16.gmra.mxu0 %v286
  %v537 = vpop.f32.mrf.mxu0
  %v538 = vadd.f32 0.0, %v537
  %v539 = vpop.f32.mrf.mxu0
  %v540 = vadd.f32 0.0, %v539
  %541 = vmatmul.bf16.gmra.mxu0 %v289
  %v542 = vpop.f32.mrf.mxu0
  %v543 = vadd.f32 0.0, %v542
  %v544 = vpop.f32.mrf.mxu0
  %v545 = vadd.f32 0.0, %v544
  %546 = vmatmul.bf16.gmra.mxu0 %v292
  %v547 = vpop.f32.mrf.mxu0
  %v548 = vadd.f32 0.0, %v547
  %v549 = vpop.f32.mrf.mxu0
  %v550 = vadd.f32 0.0, %v549
  %551 = vmatmul.bf16.gmra.mxu0 %v295
  %v552 = vpop.f32.mrf.mxu0
  %v553 = vadd.f32 0.0, %v552
  %v554 = vpop.f32.mrf.mxu0
  %v555 = vadd.f32 0.0, %v554
  %556 = vmatmul.bf16.gmra.mxu0 %v298
  %v557 = vpop.f32.mrf.mxu0
  %v558 = vadd.f32 0.0, %v557
  %v559 = vpop.f32.mrf.mxu0
  %v560 = vadd.f32 0.0, %v559
  %561 = vmatmul.bf16.gmra.mxu0 %v301
  %v562 = vpop.f32.mrf.mxu0
  %v563 = vadd.f32 0.0, %v562
  %v564 = vpop.f32.mrf.mxu0
  %v565 = vadd.f32 0.0, %v564
  %566 = vmatmul.bf16.gmra.mxu0 %v304
  %v567 = vpop.f32.mrf.mxu0
  %v568 = vadd.f32 0.0, %v567
  %v569 = vpop.f32.mrf.mxu0
  %v570 = vadd.f32 0.0, %v569
  %571 = vmatmul.bf16.gmra.mxu0 %v307
  %v572 = vpop.f32.mrf.mxu0
  %v573 = vadd.f32 0.0, %v572
  %v574 = vpop.f32.mrf.mxu0
  %v575 = vadd.f32 0.0, %v574
  %576 = vmatmul.bf16.gmra.mxu0 %v310
  %v577 = vpop.f32.mrf.mxu0
  %v578 = vadd.f32 0.0, %v577
  %v579 = vpop.f32.mrf.mxu0
  %v580 = vadd.f32 0.0, %v579
  %581 = vmatmul.bf16.gmra.mxu0 %v313
  %v582 = vpop.f32.mrf.mxu0
  %v583 = vadd.f32 0.0, %v582
  %v584 = vpop.f32.mrf.mxu0
  %v585 = vadd.f32 0.0, %v584
  %586 = vmatmul.bf16.gmra.mxu0 %v316
  %v587 = vpop.f32.mrf.mxu0
  %v588 = vadd.f32 0.0, %v587
  %v589 = vpop.f32.mrf.mxu0
  %v590 = vadd.f32 0.0, %v589
  %591 = vmatmul.bf16.gmra.mxu0 %v319
  %v592 = vpop.f32.mrf.mxu0
  %v593 = vadd.f32 0.0, %v592
  %v594 = vpop.f32.mrf.mxu0
  %v595 = vadd.f32 0.0, %v594
  %596 = vmatmul.bf16.gmra.mxu0 %v322
  %v597 = vpop.f32.mrf.mxu0
  %v598 = vadd.f32 0.0, %v597
  %v599 = vpop.f32.mrf.mxu0
  %v600 = vadd.f32 0.0, %v599
  %601 = vmatmul.bf16.gmra.mxu0 %v325
  %v602 = vpop.f32.mrf.mxu0
  %v603 = vadd.f32 0.0, %v602
  %v604 = vpop.f32.mrf.mxu0
  %v605 = vadd.f32 0.0, %v604
  %606 = vmatmul.bf16.gmra.mxu0 %v328
  %v607 = vpop.f32.mrf.mxu0
  %v608 = vadd.f32 0.0, %v607
  %v609 = vpop.f32.mrf.mxu0
  %v610 = vadd.f32 0.0, %v609
  %611 = vdwg.mxu0
  %612 = vmatpush.bf16.msra.mxu0 %v490
  %613 = vmatpush.bf16.msra.mxu0 %v489
  %614 = vmatpush.bf16.msra.mxu0 %v488
  %615 = vmatpush.bf16.msra.mxu0 %v487
  %616 = vmatpush.bf16.msra.mxu0 %v486
  %617 = vmatpush.bf16.msra.mxu0 %v485
  %618 = vmatpush.bf16.msra.mxu0 %v484
  %619 = vmatpush.bf16.msra.mxu0 %v483
  %620 = vmatmul.bf16.gmra.mxu0 %v284
  %v621 = vpop.f32.mrf.mxu0
  %v622 = vadd.f32 %v533, %v621
  %v623 = vpop.f32.mrf.mxu0
  %v624 = vadd.f32 %v535, %v623
  %625 = vmatmul.bf16.gmra.mxu0 %v287
  %v626 = vpop.f32.mrf.mxu0
  %v627 = vadd.f32 %v538, %v626
  %v628 = vpop.f32.mrf.mxu0
  %v629 = vadd.f32 %v540, %v628
  %630 = vmatmul.bf16.gmra.mxu0 %v290
  %v631 = vpop.f32.mrf.mxu0
  %v632 = vadd.f32 %v543, %v631
  %v633 = vpop.f32.mrf.mxu0
  %v634 = vadd.f32 %v545, %v633
  %635 = vmatmul.bf16.gmra.mxu0 %v293
  %v636 = vpop.f32.mrf.mxu0
  %v637 = vadd.f32 %v548, %v636
  %v638 = vpop.f32.mrf.mxu0
  %v639 = vadd.f32 %v550, %v638
  %640 = vmatmul.bf16.gmra.mxu0 %v296
  %v641 = vpop.f32.mrf.mxu0
  %v642 = vadd.f32 %v553, %v641
  %v643 = vpop.f32.mrf.mxu0
  %v644 = vadd.f32 %v555, %v643
  %645 = vmatmul.bf16.gmra.mxu0 %v299
  %v646 = vpop.f32.mrf.mxu0
  %v647 = vadd.f32 %v558, %v646
  %v648 = vpop.f32.mrf.mxu0
  %v649 = vadd.f32 %v560, %v648
  %650 = vmatmul.bf16.gmra.mxu0 %v302
  %v651 = vpop.f32.mrf.mxu0
  %v652 = vadd.f32 %v563, %v651
  %v653 = vpop.f32.mrf.mxu0
  %v654 = vadd.f32 %v565, %v653
  %655 = vmatmul.bf16.gmra.mxu0 %v305
  %v656 = vpop.f32.mrf.mxu0
  %v657 = vadd.f32 %v568, %v656
  %v658 = vpop.f32.mrf.mxu0
  %v659 = vadd.f32 %v570, %v658
  %660 = vmatmul.bf16.gmra.mxu0 %v308
  %v661 = vpop.f32.mrf.mxu0
  %v662 = vadd.f32 %v573, %v661
  %v663 = vpop.f32.mrf.mxu0
  %v664 = vadd.f32 %v575, %v663
  %665 = vmatmul.bf16.gmra.mxu0 %v311
  %v666 = vpop.f32.mrf.mxu0
  %v667 = vadd.f32 %v578, %v666
  %v668 = vpop.f32.mrf.mxu0
  %v669 = vadd.f32 %v580, %v668
  %670 = vmatmul.bf16.gmra.mxu0 %v314
  %v671 = vpop.f32.mrf.mxu0
  %v672 = vadd.f32 %v583, %v671
  %v673 = vpop.f32.mrf.mxu0
  %v674 = vadd.f32 %v585, %v673
  %675 = vmatmul.bf16.gmra.mxu0 %v317
  %v676 = vpop.f32.mrf.mxu0
  %v677 = vadd.f32 %v588, %v676
  %v678 = vpop.f32.mrf.mxu0
  %v679 = vadd.f32 %v590, %v678
  %680 = vmatmul.bf16.gmra.mxu0 %v320
  %v681 = vpop.f32.mrf.mxu0
  %v682 = vadd.f32 %v593, %v681
  %v683 = vpop.f32.mrf.mxu0
  %v684 = vadd.f32 %v595, %v683
  %685 = vmatmul.bf16.gmra.mxu0 %v323
  %v686 = vpop.f32.mrf.mxu0
  %v687 = vadd.f32 %v598, %v686
  %v688 = vpop.f32.mrf.mxu0
  %v689 = vadd.f32 %v600, %v688
  %690 = vmatmul.bf16.gmra.mxu0 %v326
  %v691 = vpop.f32.mrf.mxu0
  %v692 = vadd.f32 %v603, %v691
  %v693 = vpop.f32.mrf.mxu0
  %v694 = vadd.f32 %v605, %v693
  %695 = vmatmul.bf16.gmra.mxu0 %v329
  %v696 = vpop.f32.mrf.mxu0
  %v697 = vadd.f32 %v608, %v696
  %v698 = vpop.f32.mrf.mxu0
  %v699 = vadd.f32 %v610, %v698
  %700 = vdwg.mxu0
  %701 = vmatpush.bf16.msra.mxu0 %v498
  %702 = vmatpush.bf16.msra.mxu0 %v497
  %703 = vmatpush.bf16.msra.mxu0 %v496
  %704 = vmatpush.bf16.msra.mxu0 %v495
  %705 = vmatpush.bf16.msra.mxu0 %v494
  %706 = vmatpush.bf16.msra.mxu0 %v493
  %707 = vmatpush.bf16.msra.mxu0 %v492
  %708 = vmatpush.bf16.msra.mxu0 %v491
  %709 = vmatmul.bf16.gmra.mxu0 %v285
  %v710 = vpop.f32.mrf.mxu0
  %v711 = vadd.f32 %v622, %v710
  %v712 = vpop.f32.mrf.mxu0
  %v713 = vadd.f32 %v624, %v712
  %714 = vmatmul.bf16.gmra.mxu0 %v288
  %v715 = vpop.f32.mrf.mxu0
  %v716 = vadd.f32 %v627, %v715
  %v717 = vpop.f32.mrf.mxu0
  %v718 = vadd.f32 %v629, %v717
  %719 = vmatmul.bf16.gmra.mxu0 %v291
  %v720 = vpop.f32.mrf.mxu0
  %v721 = vadd.f32 %v632, %v720
  %v722 = vpop.f32.mrf.mxu0
  %v723 = vadd.f32 %v634, %v722
  %724 = vmatmul.bf16.gmra.mxu0 %v294
  %v725 = vpop.f32.mrf.mxu0
  %v726 = vadd.f32 %v637, %v725
  %v727 = vpop.f32.mrf.mxu0
  %v728 = vadd.f32 %v639, %v727
  %729 = vmatmul.bf16.gmra.mxu0 %v297
  %v730 = vpop.f32.mrf.mxu0
  %v731 = vadd.f32 %v642, %v730
  %v732 = vpop.f32.mrf.mxu0
  %v733 = vadd.f32 %v644, %v732
  %734 = vmatmul.bf16.gmra.mxu0 %v300
  %v735 = vpop.f32.mrf.mxu0
  %v736 = vadd.f32 %v647, %v735
  %v737 = vpop.f32.mrf.mxu0
  %v738 = vadd.f32 %v649, %v737
  %739 = vmatmul.bf16.gmra.mxu0 %v303
  %v740 = vpop.f32.mrf.mxu0
  %v741 = vadd.f32 %v652, %v740
  %v742 = vpop.f32.mrf.mxu0
  %v743 = vadd.f32 %v654, %v742
  %744 = vmatmul.bf16.gmra.mxu0 %v306
  %v745 = vpop.f32.mrf.mxu0
  %v746 = vadd.f32 %v657, %v745
  %v747 = vpop.f32.mrf.mxu0
  %v748 = vadd.f32 %v659, %v747
  %749 = vmatmul.bf16.gmra.mxu0 %v309
  %v750 = vpop.f32.mrf.mxu0
  %v751 = vadd.f32 %v662, %v750
  %v752 = vpop.f32.mrf.mxu0
  %v753 = vadd.f32 %v664, %v752
  %754 = vmatmul.bf16.gmra.mxu0 %v312
  %v755 = vpop.f32.mrf.mxu0
  %v756 = vadd.f32 %v667, %v755
  %v757 = vpop.f32.mrf.mxu0
  %v758 = vadd.f32 %v669, %v757
  %759 = vmatmul.bf16.gmra.mxu0 %v315
  %v760 = vpop.f32.mrf.mxu0
  %v761 = vadd.f32 %v672, %v760
  %v762 = vpop.f32.mrf.mxu0
  %v763 = vadd.f32 %v674, %v762
  %764 = vmatmul.bf16.gmra.mxu0 %v318
  %v765 = vpop.f32.mrf.mxu0
  %v766 = vadd.f32 %v677, %v765
  %v767 = vpop.f32.mrf.mxu0
  %v768 = vadd.f32 %v679, %v767
  %769 = vmatmul.bf16.gmra.mxu0 %v321
  %v770 = vpop.f32.mrf.mxu0
  %v771 = vadd.f32 %v682, %v770
  %v772 = vpop.f32.mrf.mxu0
  %v773 = vadd.f32 %v684, %v772
  %774 = vmatmul.bf16.gmra.mxu0 %v324
  %v775 = vpop.f32.mrf.mxu0
  %v776 = vadd.f32 %v687, %v775
  %v777 = vpop.f32.mrf.mxu0
  %v778 = vadd.f32 %v689, %v777
  %779 = vmatmul.bf16.gmra.mxu0 %v327
  %v780 = vpop.f32.mrf.mxu0
  %v781 = vadd.f32 %v692, %v780
  %v782 = vpop.f32.mrf.mxu0
  %v783 = vadd.f32 %v694, %v782
  %784 = vmatmul.bf16.gmra.mxu0 %v330
  %v785 = vpop.f32.mrf.mxu0
  %v786 = vadd.f32 %v697, %v785
  %v787 = vpop.f32.mrf.mxu0
  %v788 = vadd.f32 %v699, %v787
  %789 = vdwg.mxu0
  %v790 = vpack.c.bf16 %v711, %v711
  %v791 = vpack.c.bf16 %v713, %v713
  %v792 = vpack.c.bf16 %v716, %v716
  %v793 = vpack.c.bf16 %v718, %v718
  %v794 = vpack.c.bf16 %v721, %v721
  %v795 = vpack.c.bf16 %v723, %v723
  %v796 = vpack.c.bf16 %v726, %v726
  %v797 = vpack.c.bf16 %v728, %v728
  %v798 = vpack.c.bf16 %v731, %v731
  %v799 = vpack.c.bf16 %v733, %v733
  %v800 = vpack.c.bf16 %v736, %v736
  %v801 = vpack.c.bf16 %v738, %v738
  %v802 = vpack.c.bf16 %v741, %v741
  %v803 = vpack.c.bf16 %v743, %v743
  %v804 = vpack.c.bf16 %v746, %v746
  %v805 = vpack.c.bf16 %v748, %v748
  %v806 = vpack.c.bf16 %v751, %v751
  %v807 = vpack.c.bf16 %v753, %v753
  %v808 = vpack.c.bf16 %v756, %v756
  %v809 = vpack.c.bf16 %v758, %v758
  %v810 = vpack.c.bf16 %v761, %v761
  %v811 = vpack.c.bf16 %v763, %v763
  %v812 = vpack.c.bf16 %v766, %v766
  %v813 = vpack.c.bf16 %v768, %v768
  %v814 = vpack.c.bf16 %v771, %v771
  %v815 = vpack.c.bf16 %v773, %v773
  %v816 = vpack.c.bf16 %v776, %v776
  %v817 = vpack.c.bf16 %v778, %v778
  %v818 = vpack.c.bf16 %v781, %v781
  %v819 = vpack.c.bf16 %v783, %v783
  %v820 = vpack.c.bf16 %v786, %v786
  %v821 = vpack.c.bf16 %v788, %v788
  %822 = vst [vmem:[%s2] sm:$0xf] %v790
  %823 = vst [vmem:[%s2 + $0x4] sm:$0xf] %v791
  %824 = vst [vmem:[%s2 + $0x8] sm:$0xf] %v792
  %825 = vst [vmem:[%s2 + $0xc] sm:$0xf] %v793
  %826 = vst [vmem:[%s2 + $0x10] sm:$0xf] %v794
  %827 = vst [vmem:[%s2 + $0x14] sm:$0xf] %v795
  %828 = vst [vmem:[%s2 + $0x18] sm:$0xf] %v796
  %829 = vst [vmem:[%s2 + $0x1c] sm:$0xf] %v797
  %830 = vst [vmem:[%s2 + $0x20] sm:$0xf] %v798
  %831 = vst [vmem:[%s2 + $0x24] sm:$0xf] %v799
  %832 = vst [vmem:[%s2 + $0x28] sm:$0xf] %v800
  %833 = vst [vmem:[%s2 + $0x2c] sm:$0xf] %v801
  %834 = vst [vmem:[%s2 + $0x30] sm:$0xf] %v802
  %835 = vst [vmem:[%s2 + $0x34] sm:$0xf] %v803
  %836 = vst [vmem:[%s2 + $0x38] sm:$0xf] %v804
  %837 = vst [vmem:[%s2 + $0x3c] sm:$0xf] %v805
  %838 = vst [vmem:[%s2 + $0x40] sm:$0xf] %v806
  %839 = vst [vmem:[%s2 + $0x44] sm:$0xf] %v807
  %840 = vst [vmem:[%s2 + $0x48] sm:$0xf] %v808
  %841 = vst [vmem:[%s2 + $0x4c] sm:$0xf] %v809
  %842 = vst [vmem:[%s2 + $0x50] sm:$0xf] %v810
  %843 = vst [vmem:[%s2 + $0x54] sm:$0xf] %v811
  %844 = vst [vmem:[%s2 + $0x58] sm:$0xf] %v812
  %845 = vst [vmem:[%s2 + $0x5c] sm:$0xf] %v813
  %846 = vst [vmem:[%s2 + $0x60] sm:$0xf] %v814
  %847 = vst [vmem:[%s2 + $0x64] sm:$0xf] %v815
  %848 = vst [vmem:[%s2 + $0x68] sm:$0xf] %v816
  %849 = vst [vmem:[%s2 + $0x6c] sm:$0xf] %v817
  %850 = vst [vmem:[%s2 + $0x70] sm:$0xf] %v818
  %851 = vst [vmem:[%s2 + $0x74] sm:$0xf] %v819
  %852 = vst [vmem:[%s2 + $0x78] sm:$0xf] %v820
  %853 = vst [vmem:[%s2 + $0x7c] sm:$0xf] %v821
  // Predicated region
  $region10: #{linear_snowball_forward.10} parent=0 // pred_check
    _
  $region11: #{linear_snowball_forward.10} parent=0 // pred_check_branch
    %855 = sbr.rel (0) target = $region13
  $region12: #{linear_snowball_forward.10} parent=0 // pred_region
    _
  $region13: #{linear_snowball_forward.10} parent=0 // pred_fallthru
    _
  // Predicated region
  $region14: #{linear_snowball_forward.10} parent=0 // pred_check
    _
  $region15: #{linear_snowball_forward.10} parent=0 // pred_check_branch
    %857 = sbr.rel (0) target = $region17
  $region16: #{linear_snowball_forward.10} parent=0 // pred_region
    _
  $region17: #{linear_snowball_forward.10} parent=0 // pred_fallthru
    _

// kernel: linear_snowball_forward.11
$region0: #{linear_snowball_forward.11}
  #allocation0 [shape = 'u32[]', space=smem, size = 0x4, offset = 0x4, fixed_abs, tag = 'smem constant byte address 0x4 - core index']
  #allocation1 [shape = 'u32[72,128]{1,0:T(1,128)}', space=vmem, size = 0x9000, scoped, tag = 'internal scratch']
  #allocation2 [shape = 'f32[256,128]{1,0:T(8,128)}', space=vmem, size = 0x20000, scoped, tag = 'scratch operand']
  %s0 = inlined_call_operand.vmem [shape: bf16[256,256], index: 0, kind: input, shape index: {}]
  %s1 = inlined_call_operand.vmem [shape: bf16[256,128], index: 1, kind: input, shape index: {}]
  %s2 = inlined_call_operand.vmem [shape: f32[1,128], index: 2, kind: input, shape index: {}]
  %s3 = inlined_call_operand.vmem [shape: f32[256,128], index: 3, kind: output, shape index: {}]
  %s4 = sld [smem:[#allocation0]]
  $region30: #{linear_snowball_forward.11} parent=0
    _
  %s6 = ssub.s32 1, %s4
  %s7 = scalar_select 0, %s6, %s4
  // Predicated region
  $region2: #{linear_snowball_forward.11} parent=0 // pred_check
    _
  $region3: #{linear_snowball_forward.11} parent=0 // pred_check_branch
    %9 = sbr.rel (0) target = $region5
  $region4: #{linear_snowball_forward.11} parent=0 // pred_region
    _
  $region5: #{linear_snowball_forward.11} parent=0 // pred_fallthru
    _
  // Predicated region
  $region6: #{linear_snowball_forward.11} parent=0 // pred_check
    _
  $region7: #{linear_snowball_forward.11} parent=0 // pred_check_branch
    %11 = sbr.rel (0) target = $region9
  $region8: #{linear_snowball_forward.11} parent=0 // pred_region
    _
  $region9: #{linear_snowball_forward.11} parent=0 // pred_fallthru
    _
  // Predicated region
  $region10: #{linear_snowball_forward.11} parent=0 // pred_check
    _
  $region11: #{linear_snowball_forward.11} parent=0 // pred_check_branch
    %13 = sbr.rel (0) target = $region13
  $region12: #{linear_snowball_forward.11} parent=0 // pred_region
    _
  $region13: #{linear_snowball_forward.11} parent=0 // pred_fallthru
    _
  %p14 = scmp.eq.s32.totalorder 0, 0
  // Predicated region
  $region14: #{linear_snowball_forward.11} parent=0 // pred_check
    %p15 = pneg %p14
  $region15: #{linear_snowball_forward.11} parent=0 // pred_check_branch
    %17 = sbr.rel (%p15) target = $region17
  $region16: #{linear_snowball_forward.11} parent=0 // pred_region
    %18 = vst [vmem:[#allocation2] sm:$0xff] 0.0
    %19 = vst [vmem:[#allocation2 + $0x8] sm:$0xff] 0.0
    %20 = vst [vmem:[#allocation2 + $0x10] sm:$0xff] 0.0
    %21 = vst [vmem:[#allocation2 + $0x18] sm:$0xff] 0.0
    %22 = vst [vmem:[#allocation2 + $0x20] sm:$0xff] 0.0
    %23 = vst [vmem:[#allocation2 + $0x28] sm:$0xff] 0.0
    %24 = vst [vmem:[#allocation2 + $0x30] sm:$0xff] 0.0
    %25 = vst [vmem:[#allocation2 + $0x38] sm:$0xff] 0.0
    %26 = vst [vmem:[#allocation2 + $0x40] sm:$0xff] 0.0
    %27 = vst [vmem:[#allocation2 + $0x48] sm:$0xff] 0.0
    %28 = vst [vmem:[#allocation2 + $0x50] sm:$0xff] 0.0
    %29 = vst [vmem:[#allocation2 + $0x58] sm:$0xff] 0.0
    %30 = vst [vmem:[#allocation2 + $0x60] sm:$0xff] 0.0
    %31 = vst [vmem:[#allocation2 + $0x68] sm:$0xff] 0.0
    %32 = vst [vmem:[#allocation2 + $0x70] sm:$0xff] 0.0
    %33 = vst [vmem:[#allocation2 + $0x78] sm:$0xff] 0.0
    %34 = vst [vmem:[#allocation2 + $0x80] sm:$0xff] 0.0
    %35 = vst [vmem:[#allocation2 + $0x88] sm:$0xff] 0.0
    %36 = vst [vmem:[#allocation2 + $0x90] sm:$0xff] 0.0
    %37 = vst [vmem:[#allocation2 + $0x98] sm:$0xff] 0.0
    %38 = vst [vmem:[#allocation2 + $0xa0] sm:$0xff] 0.0
    %39 = vst [vmem:[#allocation2 + $0xa8] sm:$0xff] 0.0
    %40 = vst [vmem:[#allocation2 + $0xb0] sm:$0xff] 0.0
    %41 = vst [vmem:[#allocation2 + $0xb8] sm:$0xff] 0.0
    %42 = vst [vmem:[#allocation2 + $0xc0] sm:$0xff] 0.0
    %43 = vst [vmem:[#allocation2 + $0xc8] sm:$0xff] 0.0
    %44 = vst [vmem:[#allocation2 + $0xd0] sm:$0xff] 0.0
    %45 = vst [vmem:[#allocation2 + $0xd8] sm:$0xff] 0.0
    %46 = vst [vmem:[#allocation2 + $0xe0] sm:$0xff] 0.0
    %47 = vst [vmem:[#allocation2 + $0xe8] sm:$0xff] 0.0
    %48 = vst [vmem:[#allocation2 + $0xf0] sm:$0xff] 0.0
    %49 = vst [vmem:[#allocation2 + $0xf8] sm:$0xff] 0.0
  $region17: #{linear_snowball_forward.11} parent=0 // pred_fallthru
    _
  %s50 = smul.u32 0, 256
  %s51 = sshra.s32 %s50, 3
  %s52 = sand.u32 %s50, 7
  %s53 = smul.addr %s51, 4
  %s54 = scalar_lea.vmem %s1, %s53
  %v55 = vld [vmem:[%s54] sm:$0xf]
  %v56 = vld [vmem:[%s54 + $0x4] sm:$0xf]
  %v57 = vld [vmem:[%s54 + $0x8] sm:$0xf]
  %v58 = vld [vmem:[%s54 + $0xc] sm:$0xf]
  %v59 = vld [vmem:[%s54 + $0x10] sm:$0xf]
  %v60 = vld [vmem:[%s54 + $0x14] sm:$0xf]
  %v61 = vld [vmem:[%s54 + $0x18] sm:$0xf]
  %v62 = vld [vmem:[%s54 + $0x1c] sm:$0xf]
  %v63 = vld [vmem:[%s54 + $0x20] sm:$0xf]
  %v64 = vld [vmem:[%s54 + $0x24] sm:$0xf]
  %v65 = vld [vmem:[%s54 + $0x28] sm:$0xf]
  %v66 = vld [vmem:[%s54 + $0x2c] sm:$0xf]
  %v67 = vld [vmem:[%s54 + $0x30] sm:$0xf]
  %v68 = vld [vmem:[%s54 + $0x34] sm:$0xf]
  %v69 = vld [vmem:[%s54 + $0x38] sm:$0xf]
  %v70 = vld [vmem:[%s54 + $0x3c] sm:$0xf]
  %v71 = vld [vmem:[%s54 + $0x40] sm:$0xf]
  %v72 = vld [vmem:[%s54 + $0x44] sm:$0xf]
  %v73 = vld [vmem:[%s54 + $0x48] sm:$0xf]
  %v74 = vld [vmem:[%s54 + $0x4c] sm:$0xf]
  %v75 = vld [vmem:[%s54 + $0x50] sm:$0xf]
  %v76 = vld [vmem:[%s54 + $0x54] sm:$0xf]
  %v77 = vld [vmem:[%s54 + $0x58] sm:$0xf]
  %v78 = vld [vmem:[%s54 + $0x5c] sm:$0xf]
  %v79 = vld [vmem:[%s54 + $0x60] sm:$0xf]
  %v80 = vld [vmem:[%s54 + $0x64] sm:$0xf]
  %v81 = vld [vmem:[%s54 + $0x68] sm:$0xf]
  %v82 = vld [vmem:[%s54 + $0x6c] sm:$0xf]
  %v83 = vld [vmem:[%s54 + $0x70] sm:$0xf]
  %v84 = vld [vmem:[%s54 + $0x74] sm:$0xf]
  %v85 = vld [vmem:[%s54 + $0x78] sm:$0xf]
  %v86 = vld [vmem:[%s54 + $0x7c] sm:$0xf]
  %v87 = vld [vmem:[#allocation2] sm:$0xff]
  %v88 = vld [vmem:[#allocation2 + $0x8] sm:$0xff]
  %v89 = vld [vmem:[#allocation2 + $0x10] sm:$0xff]
  %v90 = vld [vmem:[#allocation2 + $0x18] sm:$0xff]
  %v91 = vld [vmem:[#allocation2 + $0x20] sm:$0xff]
  %v92 = vld [vmem:[#allocation2 + $0x28] sm:$0xff]
  %v93 = vld [vmem:[#allocation2 + $0x30] sm:$0xff]
  %v94 = vld [vmem:[#allocation2 + $0x38] sm:$0xff]
  %v95 = vld [vmem:[#allocation2 + $0x40] sm:$0xff]
  %v96 = vld [vmem:[#allocation2 + $0x48] sm:$0xff]
  %v97 = vld [vmem:[#allocation2 + $0x50] sm:$0xff]
  %v98 = vld [vmem:[#allocation2 + $0x58] sm:$0xff]
  %v99 = vld [vmem:[#allocation2 + $0x60] sm:$0xff]
  %v100 = vld [vmem:[#allocation2 + $0x68] sm:$0xff]
  %v101 = vld [vmem:[#allocation2 + $0x70] sm:$0xff]
  %v102 = vld [vmem:[#allocation2 + $0x78] sm:$0xff]
  %v103 = vld [vmem:[#allocation2 + $0x80] sm:$0xff]
  %v104 = vld [vmem:[#allocation2 + $0x88] sm:$0xff]
  %v105 = vld [vmem:[#allocation2 + $0x90] sm:$0xff]
  %v106 = vld [vmem:[#allocation2 + $0x98] sm:$0xff]
  %v107 = vld [vmem:[#allocation2 + $0xa0] sm:$0xff]
  %v108 = vld [vmem:[#allocation2 + $0xa8] sm:$0xff]
  %v109 = vld [vmem:[#allocation2 + $0xb0] sm:$0xff]
  %v110 = vld [vmem:[#allocation2 + $0xb8] sm:$0xff]
  %v111 = vld [vmem:[#allocation2 + $0xc0] sm:$0xff]
  %v112 = vld [vmem:[#allocation2 + $0xc8] sm:$0xff]
  %v113 = vld [vmem:[#allocation2 + $0xd0] sm:$0xff]
  %v114 = vld [vmem:[#allocation2 + $0xd8] sm:$0xff]
  %v115 = vld [vmem:[#allocation2 + $0xe0] sm:$0xff]
  %v116 = vld [vmem:[#allocation2 + $0xe8] sm:$0xff]
  %v117 = vld [vmem:[#allocation2 + $0xf0] sm:$0xff]
  %v118 = vld [vmem:[#allocation2 + $0xf8] sm:$0xff]
  %v119 = vld [vmem:[%s0] sm:$0xff]
  %v120 = vld [vmem:[%s0 + $0x8] sm:$0xff]
  %v121 = vld [vmem:[%s0 + $0x10] sm:$0xff]
  %v122 = vld [vmem:[%s0 + $0x18] sm:$0xff]
  %v123 = vld [vmem:[%s0 + $0x20] sm:$0xff]
  %v124 = vld [vmem:[%s0 + $0x28] sm:$0xff]
  %v125 = vld [vmem:[%s0 + $0x30] sm:$0xff]
  %v126 = vld [vmem:[%s0 + $0x38] sm:$0xff]
  %v127 = vld [vmem:[%s0 + $0x40] sm:$0xff]
  %v128 = vld [vmem:[%s0 + $0x48] sm:$0xff]
  %v129 = vld [vmem:[%s0 + $0x50] sm:$0xff]
  %v130 = vld [vmem:[%s0 + $0x58] sm:$0xff]
  %v131 = vld [vmem:[%s0 + $0x60] sm:$0xff]
  %v132 = vld [vmem:[%s0 + $0x68] sm:$0xff]
  %v133 = vld [vmem:[%s0 + $0x70] sm:$0xff]
  %v134 = vld [vmem:[%s0 + $0x78] sm:$0xff]
  %v135 = vld [vmem:[%s0 + $0x80] sm:$0xff]
  %v136 = vld [vmem:[%s0 + $0x88] sm:$0xff]
  %v137 = vld [vmem:[%s0 + $0x90] sm:$0xff]
  %v138 = vld [vmem:[%s0 + $0x98] sm:$0xff]
  %v139 = vld [vmem:[%s0 + $0xa0] sm:$0xff]
  %v140 = vld [vmem:[%s0 + $0xa8] sm:$0xff]
  %v141 = vld [vmem:[%s0 + $0xb0] sm:$0xff]
  %v142 = vld [vmem:[%s0 + $0xb8] sm:$0xff]
  %v143 = vld [vmem:[%s0 + $0xc0] sm:$0xff]
  %v144 = vld [vmem:[%s0 + $0xc8] sm:$0xff]
  %v145 = vld [vmem:[%s0 + $0xd0] sm:$0xff]
  %v146 = vld [vmem:[%s0 + $0xd8] sm:$0xff]
  %v147 = vld [vmem:[%s0 + $0xe0] sm:$0xff]
  %v148 = vld [vmem:[%s0 + $0xe8] sm:$0xff]
  %v149 = vld [vmem:[%s0 + $0xf0] sm:$0xff]
  %v150 = vld [vmem:[%s0 + $0xf8] sm:$0xff]
  %v183 = vunpack.c.l.b16 %v119
  %v184 = vunpack.c.h.b16 %v119
  %v185 = vunpack.c.l.b16 %v120
  %v186 = vunpack.c.h.b16 %v120
  %v187 = vunpack.c.l.b16 %v121
  %v188 = vunpack.c.h.b16 %v121
  %v189 = vunpack.c.l.b16 %v122
  %v190 = vunpack.c.h.b16 %v122
  %v191 = vunpack.c.l.b16 %v123
  %v192 = vunpack.c.h.b16 %v123
  %v193 = vunpack.c.l.b16 %v124
  %v194 = vunpack.c.h.b16 %v124
  %v195 = vunpack.c.l.b16 %v125
  %v196 = vunpack.c.h.b16 %v125
  %v197 = vunpack.c.l.b16 %v126
  %v198 = vunpack.c.h.b16 %v126
  %v199 = vunpack.c.l.b16 %v127
  %v200 = vunpack.c.h.b16 %v127
  %v201 = vunpack.c.l.b16 %v128
  %v202 = vunpack.c.h.b16 %v128
  %v203 = vunpack.c.l.b16 %v129
  %v204 = vunpack.c.h.b16 %v129
  %v205 = vunpack.c.l.b16 %v130
  %v206 = vunpack.c.h.b16 %v130
  %v207 = vunpack.c.l.b16 %v131
  %v208 = vunpack.c.h.b16 %v131
  %v209 = vunpack.c.l.b16 %v132
  %v210 = vunpack.c.h.b16 %v132
  %v211 = vunpack.c.l.b16 %v133
  %v212 = vunpack.c.h.b16 %v133
  %v213 = vunpack.c.l.b16 %v134
  %v214 = vunpack.c.h.b16 %v134
  %v215 = vunpack.c.l.b16 %v135
  %v216 = vunpack.c.h.b16 %v135
  %v217 = vunpack.c.l.b16 %v136
  %v218 = vunpack.c.h.b16 %v136
  %v219 = vunpack.c.l.b16 %v137
  %v220 = vunpack.c.h.b16 %v137
  %v221 = vunpack.c.l.b16 %v138
  %v222 = vunpack.c.h.b16 %v138
  %v223 = vunpack.c.l.b16 %v139
  %v224 = vunpack.c.h.b16 %v139
  %v225 = vunpack.c.l.b16 %v140
  %v226 = vunpack.c.h.b16 %v140
  %v227 = vunpack.c.l.b16 %v141
  %v228 = vunpack.c.h.b16 %v141
  %v229 = vunpack.c.l.b16 %v142
  %v230 = vunpack.c.h.b16 %v142
  %v231 = vunpack.c.l.b16 %v143
  %v232 = vunpack.c.h.b16 %v143
  %v233 = vunpack.c.l.b16 %v144
  %v234 = vunpack.c.h.b16 %v144
  %v235 = vunpack.c.l.b16 %v145
  %v236 = vunpack.c.h.b16 %v145
  %v237 = vunpack.c.l.b16 %v146
  %v238 = vunpack.c.h.b16 %v146
  %v239 = vunpack.c.l.b16 %v147
  %v240 = vunpack.c.h.b16 %v147
  %v241 = vunpack.c.l.b16 %v148
  %v242 = vunpack.c.h.b16 %v148
  %v243 = vunpack.c.l.b16 %v149
  %v244 = vunpack.c.h.b16 %v149
  %v245 = vunpack.c.l.b16 %v150
  %v246 = vunpack.c.h.b16 %v150
  %v247 = vpack.c.b16 %v185, %v183
  %v248 = vpack.c.b16 %v186, %v184
  %v249 = vpack.c.b16 %v189, %v187
  %v250 = vpack.c.b16 %v190, %v188
  %v251 = vpack.c.b16 %v193, %v191
  %v252 = vpack.c.b16 %v194, %v192
  %v253 = vpack.c.b16 %v197, %v195
  %v254 = vpack.c.b16 %v198, %v196
  %v255 = vpack.c.b16 %v201, %v199
  %v256 = vpack.c.b16 %v202, %v200
  %v257 = vpack.c.b16 %v205, %v203
  %v258 = vpack.c.b16 %v206, %v204
  %v259 = vpack.c.b16 %v209, %v207
  %v260 = vpack.c.b16 %v210, %v208
  %v261 = vpack.c.b16 %v213, %v211
  %v262 = vpack.c.b16 %v214, %v212
  %v263 = vpack.c.b16 %v217, %v215
  %v264 = vpack.c.b16 %v218, %v216
  %v265 = vpack.c.b16 %v221, %v219
  %v266 = vpack.c.b16 %v222, %v220
  %v267 = vpack.c.b16 %v225, %v223
  %v268 = vpack.c.b16 %v226, %v224
  %v269 = vpack.c.b16 %v229, %v227
  %v270 = vpack.c.b16 %v230, %v228
  %v271 = vpack.c.b16 %v233, %v231
  %v272 = vpack.c.b16 %v234, %v232
  %v273 = vpack.c.b16 %v237, %v235
  %v274 = vpack.c.b16 %v238, %v236
  %v275 = vpack.c.b16 %v241, %v239
  %v276 = vpack.c.b16 %v242, %v240
  %v277 = vpack.c.b16 %v245, %v243
  %v278 = vpack.c.b16 %v246, %v244
  %v343 = vunpack.c.l.b16 %v55
  %v344 = vunpack.c.l.b16 %v56
  %v345 = vunpack.c.l.b16 %v57
  %v346 = vunpack.c.l.b16 %v58
  %v347 = vunpack.c.l.b16 %v59
  %v348 = vunpack.c.l.b16 %v60
  %v349 = vunpack.c.l.b16 %v61
  %v350 = vunpack.c.l.b16 %v62
  %v351 = vunpack.c.l.b16 %v63
  %v352 = vunpack.c.l.b16 %v64
  %v353 = vunpack.c.l.b16 %v65
  %v354 = vunpack.c.l.b16 %v66
  %v355 = vunpack.c.l.b16 %v67
  %v356 = vunpack.c.l.b16 %v68
  %v357 = vunpack.c.l.b16 %v69
  %v358 = vunpack.c.l.b16 %v70
  %v359 = vunpack.c.l.b16 %v71
  %v360 = vunpack.c.l.b16 %v72
  %v361 = vunpack.c.l.b16 %v73
  %v362 = vunpack.c.l.b16 %v74
  %v363 = vunpack.c.l.b16 %v75
  %v364 = vunpack.c.l.b16 %v76
  %v365 = vunpack.c.l.b16 %v77
  %v366 = vunpack.c.l.b16 %v78
  %v367 = vunpack.c.l.b16 %v79
  %v368 = vunpack.c.l.b16 %v80
  %v369 = vunpack.c.l.b16 %v81
  %v370 = vunpack.c.l.b16 %v82
  %v371 = vunpack.c.l.b16 %v83
  %v372 = vunpack.c.l.b16 %v84
  %v373 = vunpack.c.l.b16 %v85
  %v374 = vunpack.c.l.b16 %v86
  %v375 = vpack.c.b16 %v344, %v343
  %v376 = vpack.c.b16 %v346, %v345
  %v377 = vpack.c.b16 %v348, %v347
  %v378 = vpack.c.b16 %v350, %v349
  %v379 = vpack.c.b16 %v352, %v351
  %v380 = vpack.c.b16 %v354, %v353
  %v381 = vpack.c.b16 %v356, %v355
  %v382 = vpack.c.b16 %v358, %v357
  %v383 = vpack.c.b16 %v360, %v359
  %v384 = vpack.c.b16 %v362, %v361
  %v385 = vpack.c.b16 %v364, %v363
  %v386 = vpack.c.b16 %v366, %v365
  %v387 = vpack.c.b16 %v368, %v367
  %v388 = vpack.c.b16 %v370, %v369
  %v389 = vpack.c.b16 %v372, %v371
  %v390 = vpack.c.b16 %v374, %v373
  %407 = vmatpush.bf16.msra.mxu0 %v382
  %408 = vmatpush.bf16.msra.mxu0 %v381
  %409 = vmatpush.bf16.msra.mxu0 %v380
  %410 = vmatpush.bf16.msra.mxu0 %v379
  %411 = vmatpush.bf16.msra.mxu0 %v378
  %412 = vmatpush.bf16.msra.mxu0 %v377
  %413 = vmatpush.bf16.msra.mxu0 %v376
  %414 = vmatpush.bf16.msra.mxu0 %v375
  %415 = vmatmul.bf16.gmra.mxu0 %v247
  %v416 = vpop.f32.mrf.mxu0
  %v417 = vadd.f32 0.0, %v416
  %v418 = vpop.f32.mrf.mxu0
  %v419 = vadd.f32 0.0, %v418
  %420 = vmatmul.bf16.gmra.mxu0 %v249
  %v421 = vpop.f32.mrf.mxu0
  %v422 = vadd.f32 0.0, %v421
  %v423 = vpop.f32.mrf.mxu0
  %v424 = vadd.f32 0.0, %v423
  %425 = vmatmul.bf16.gmra.mxu0 %v251
  %v426 = vpop.f32.mrf.mxu0
  %v427 = vadd.f32 0.0, %v426
  %v428 = vpop.f32.mrf.mxu0
  %v429 = vadd.f32 0.0, %v428
  %430 = vmatmul.bf16.gmra.mxu0 %v253
  %v431 = vpop.f32.mrf.mxu0
  %v432 = vadd.f32 0.0, %v431
  %v433 = vpop.f32.mrf.mxu0
  %v434 = vadd.f32 0.0, %v433
  %435 = vmatmul.bf16.gmra.mxu0 %v255
  %v436 = vpop.f32.mrf.mxu0
  %v437 = vadd.f32 0.0, %v436
  %v438 = vpop.f32.mrf.mxu0
  %v439 = vadd.f32 0.0, %v438
  %440 = vmatmul.bf16.gmra.mxu0 %v257
  %v441 = vpop.f32.mrf.mxu0
  %v442 = vadd.f32 0.0, %v441
  %v443 = vpop.f32.mrf.mxu0
  %v444 = vadd.f32 0.0, %v443
  %445 = vmatmul.bf16.gmra.mxu0 %v259
  %v446 = vpop.f32.mrf.mxu0
  %v447 = vadd.f32 0.0, %v446
  %v448 = vpop.f32.mrf.mxu0
  %v449 = vadd.f32 0.0, %v448
  %450 = vmatmul.bf16.gmra.mxu0 %v261
  %v451 = vpop.f32.mrf.mxu0
  %v452 = vadd.f32 0.0, %v451
  %v453 = vpop.f32.mrf.mxu0
  %v454 = vadd.f32 0.0, %v453
  %455 = vmatmul.bf16.gmra.mxu0 %v263
  %v456 = vpop.f32.mrf.mxu0
  %v457 = vadd.f32 0.0, %v456
  %v458 = vpop.f32.mrf.mxu0
  %v459 = vadd.f32 0.0, %v458
  %460 = vmatmul.bf16.gmra.mxu0 %v265
  %v461 = vpop.f32.mrf.mxu0
  %v462 = vadd.f32 0.0, %v461
  %v463 = vpop.f32.mrf.mxu0
  %v464 = vadd.f32 0.0, %v463
  %465 = vmatmul.bf16.gmra.mxu0 %v267
  %v466 = vpop.f32.mrf.mxu0
  %v467 = vadd.f32 0.0, %v466
  %v468 = vpop.f32.mrf.mxu0
  %v469 = vadd.f32 0.0, %v468
  %470 = vmatmul.bf16.gmra.mxu0 %v269
  %v471 = vpop.f32.mrf.mxu0
  %v472 = vadd.f32 0.0, %v471
  %v473 = vpop.f32.mrf.mxu0
  %v474 = vadd.f32 0.0, %v473
  %475 = vmatmul.bf16.gmra.mxu0 %v271
  %v476 = vpop.f32.mrf.mxu0
  %v477 = vadd.f32 0.0, %v476
  %v478 = vpop.f32.mrf.mxu0
  %v479 = vadd.f32 0.0, %v478
  %480 = vmatmul.bf16.gmra.mxu0 %v273
  %v481 = vpop.f32.mrf.mxu0
  %v482 = vadd.f32 0.0, %v481
  %v483 = vpop.f32.mrf.mxu0
  %v484 = vadd.f32 0.0, %v483
  %485 = vmatmul.bf16.gmra.mxu0 %v275
  %v486 = vpop.f32.mrf.mxu0
  %v487 = vadd.f32 0.0, %v486
  %v488 = vpop.f32.mrf.mxu0
  %v489 = vadd.f32 0.0, %v488
  %490 = vmatmul.bf16.gmra.mxu0 %v277
  %v491 = vpop.f32.mrf.mxu0
  %v492 = vadd.f32 0.0, %v491
  %v493 = vpop.f32.mrf.mxu0
  %v494 = vadd.f32 0.0, %v493
  %495 = vdwg.mxu0
  %496 = vmatpush.bf16.msra.mxu0 %v390
  %497 = vmatpush.bf16.msra.mxu0 %v389
  %498 = vmatpush.bf16.msra.mxu0 %v388
  %499 = vmatpush.bf16.msra.mxu0 %v387
  %500 = vmatpush.bf16.msra.mxu0 %v386
  %501 = vmatpush.bf16.msra.mxu0 %v385
  %502 = vmatpush.bf16.msra.mxu0 %v384
  %503 = vmatpush.bf16.msra.mxu0 %v383
  %504 = vmatmul.bf16.gmra.mxu0 %v248
  %v505 = vpop.f32.mrf.mxu0
  %v506 = vadd.f32 %v417, %v505
  %v507 = vpop.f32.mrf.mxu0
  %v508 = vadd.f32 %v419, %v507
  %509 = vmatmul.bf16.gmra.mxu0 %v250
  %v510 = vpop.f32.mrf.mxu0
  %v511 = vadd.f32 %v422, %v510
  %v512 = vpop.f32.mrf.mxu0
  %v513 = vadd.f32 %v424, %v512
  %514 = vmatmul.bf16.gmra.mxu0 %v252
  %v515 = vpop.f32.mrf.mxu0
  %v516 = vadd.f32 %v427, %v515
  %v517 = vpop.f32.mrf.mxu0
  %v518 = vadd.f32 %v429, %v517
  %519 = vmatmul.bf16.gmra.mxu0 %v254
  %v520 = vpop.f32.mrf.mxu0
  %v521 = vadd.f32 %v432, %v520
  %v522 = vpop.f32.mrf.mxu0
  %v523 = vadd.f32 %v434, %v522
  %524 = vmatmul.bf16.gmra.mxu0 %v256
  %v525 = vpop.f32.mrf.mxu0
  %v526 = vadd.f32 %v437, %v525
  %v527 = vpop.f32.mrf.mxu0
  %v528 = vadd.f32 %v439, %v527
  %529 = vmatmul.bf16.gmra.mxu0 %v258
  %v530 = vpop.f32.mrf.mxu0
  %v531 = vadd.f32 %v442, %v530
  %v532 = vpop.f32.mrf.mxu0
  %v533 = vadd.f32 %v444, %v532
  %534 = vmatmul.bf16.gmra.mxu0 %v260
  %v535 = vpop.f32.mrf.mxu0
  %v536 = vadd.f32 %v447, %v535
  %v537 = vpop.f32.mrf.mxu0
  %v538 = vadd.f32 %v449, %v537
  %539 = vmatmul.bf16.gmra.mxu0 %v262
  %v540 = vpop.f32.mrf.mxu0
  %v541 = vadd.f32 %v452, %v540
  %v542 = vpop.f32.mrf.mxu0
  %v543 = vadd.f32 %v454, %v542
  %544 = vmatmul.bf16.gmra.mxu0 %v264
  %v545 = vpop.f32.mrf.mxu0
  %v546 = vadd.f32 %v457, %v545
  %v547 = vpop.f32.mrf.mxu0
  %v548 = vadd.f32 %v459, %v547
  %549 = vmatmul.bf16.gmra.mxu0 %v266
  %v550 = vpop.f32.mrf.mxu0
  %v551 = vadd.f32 %v462, %v550
  %v552 = vpop.f32.mrf.mxu0
  %v553 = vadd.f32 %v464, %v552
  %554 = vmatmul.bf16.gmra.mxu0 %v268
  %v555 = vpop.f32.mrf.mxu0
  %v556 = vadd.f32 %v467, %v555
  %v557 = vpop.f32.mrf.mxu0
  %v558 = vadd.f32 %v469, %v557
  %559 = vmatmul.bf16.gmra.mxu0 %v270
  %v560 = vpop.f32.mrf.mxu0
  %v561 = vadd.f32 %v472, %v560
  %v562 = vpop.f32.mrf.mxu0
  %v563 = vadd.f32 %v474, %v562
  %564 = vmatmul.bf16.gmra.mxu0 %v272
  %v565 = vpop.f32.mrf.mxu0
  %v566 = vadd.f32 %v477, %v565
  %v567 = vpop.f32.mrf.mxu0
  %v568 = vadd.f32 %v479, %v567
  %569 = vmatmul.bf16.gmra.mxu0 %v274
  %v570 = vpop.f32.mrf.mxu0
  %v571 = vadd.f32 %v482, %v570
  %v572 = vpop.f32.mrf.mxu0
  %v573 = vadd.f32 %v484, %v572
  %574 = vmatmul.bf16.gmra.mxu0 %v276
  %v575 = vpop.f32.mrf.mxu0
  %v576 = vadd.f32 %v487, %v575
  %v577 = vpop.f32.mrf.mxu0
  %v578 = vadd.f32 %v489, %v577
  %579 = vmatmul.bf16.gmra.mxu0 %v278
  %v580 = vpop.f32.mrf.mxu0
  %v581 = vadd.f32 %v492, %v580
  %v582 = vpop.f32.mrf.mxu0
  %v583 = vadd.f32 %v494, %v582
  %584 = vdwg.mxu0
  %v585 = vadd.f32 %v87, %v506
  %v586 = vadd.f32 %v88, %v508
  %v587 = vadd.f32 %v89, %v511
  %v588 = vadd.f32 %v90, %v513
  %v589 = vadd.f32 %v91, %v516
  %v590 = vadd.f32 %v92, %v518
  %v591 = vadd.f32 %v93, %v521
  %v592 = vadd.f32 %v94, %v523
  %v593 = vadd.f32 %v95, %v526
  %v594 = vadd.f32 %v96, %v528
  %v595 = vadd.f32 %v97, %v531
  %v596 = vadd.f32 %v98, %v533
  %v597 = vadd.f32 %v99, %v536
  %v598 = vadd.f32 %v100, %v538
  %v599 = vadd.f32 %v101, %v541
  %v600 = vadd.f32 %v102, %v543
  %v601 = vadd.f32 %v103, %v546
  %v602 = vadd.f32 %v104, %v548
  %v603 = vadd.f32 %v105, %v551
  %v604 = vadd.f32 %v106, %v553
  %v605 = vadd.f32 %v107, %v556
  %v606 = vadd.f32 %v108, %v558
  %v607 = vadd.f32 %v109, %v561
  %v608 = vadd.f32 %v110, %v563
  %v609 = vadd.f32 %v111, %v566
  %v610 = vadd.f32 %v112, %v568
  %v611 = vadd.f32 %v113, %v571
  %v612 = vadd.f32 %v114, %v573
  %v613 = vadd.f32 %v115, %v576
  %v614 = vadd.f32 %v116, %v578
  %v615 = vadd.f32 %v117, %v581
  %v616 = vadd.f32 %v118, %v583
  %617 = vst [vmem:[#allocation2] sm:$0xff] %v585
  %618 = vst [vmem:[#allocation2 + $0x8] sm:$0xff] %v586
  %619 = vst [vmem:[#allocation2 + $0x10] sm:$0xff] %v587
  %620 = vst [vmem:[#allocation2 + $0x18] sm:$0xff] %v588
  %621 = vst [vmem:[#allocation2 + $0x20] sm:$0xff] %v589
  %622 = vst [vmem:[#allocation2 + $0x28] sm:$0xff] %v590
  %623 = vst [vmem:[#allocation2 + $0x30] sm:$0xff] %v591
  %624 = vst [vmem:[#allocation2 + $0x38] sm:$0xff] %v592
  %625 = vst [vmem:[#allocation2 + $0x40] sm:$0xff] %v593
  %626 = vst [vmem:[#allocation2 + $0x48] sm:$0xff] %v594
  %627 = vst [vmem:[#allocation2 + $0x50] sm:$0xff] %v595
  %628 = vst [vmem:[#allocation2 + $0x58] sm:$0xff] %v596
  %629 = vst [vmem:[#allocation2 + $0x60] sm:$0xff] %v597
  %630 = vst [vmem:[#allocation2 + $0x68] sm:$0xff] %v598
  %631 = vst [vmem:[#allocation2 + $0x70] sm:$0xff] %v599
  %632 = vst [vmem:[#allocation2 + $0x78] sm:$0xff] %v600
  %633 = vst [vmem:[#allocation2 + $0x80] sm:$0xff] %v601
  %634 = vst [vmem:[#allocation2 + $0x88] sm:$0xff] %v602
  %635 = vst [vmem:[#allocation2 + $0x90] sm:$0xff] %v603
  %636 = vst [vmem:[#allocation2 + $0x98] sm:$0xff] %v604
  %637 = vst [vmem:[#allocation2 + $0xa0] sm:$0xff] %v605
  %638 = vst [vmem:[#allocation2 + $0xa8] sm:$0xff] %v606
  %639 = vst [vmem:[#allocation2 + $0xb0] sm:$0xff] %v607
  %640 = vst [vmem:[#allocation2 + $0xb8] sm:$0xff] %v608
  %641 = vst [vmem:[#allocation2 + $0xc0] sm:$0xff] %v609
  %642 = vst [vmem:[#allocation2 + $0xc8] sm:$0xff] %v610
  %643 = vst [vmem:[#allocation2 + $0xd0] sm:$0xff] %v611
  %644 = vst [vmem:[#allocation2 + $0xd8] sm:$0xff] %v612
  %645 = vst [vmem:[#allocation2 + $0xe0] sm:$0xff] %v613
  %646 = vst [vmem:[#allocation2 + $0xe8] sm:$0xff] %v614
  %647 = vst [vmem:[#allocation2 + $0xf0] sm:$0xff] %v615
  %648 = vst [vmem:[#allocation2 + $0xf8] sm:$0xff] %v616
  // Predicated region
  $region18: #{linear_snowball_forward.11} parent=0 // pred_check
    %p649 = pneg %p14
  $region19: #{linear_snowball_forward.11} parent=0 // pred_check_branch
    %651 = sbr.rel (%p649) target = $region21
  $region20: #{linear_snowball_forward.11} parent=0 // pred_region
    %v652 = vld [vmem:[#allocation2] sm:$0xff]
    %v653 = vld [vmem:[#allocation2 + $0x8] sm:$0xff]
    %v654 = vld [vmem:[#allocation2 + $0x10] sm:$0xff]
    %v655 = vld [vmem:[#allocation2 + $0x18] sm:$0xff]
    %v656 = vld [vmem:[#allocation2 + $0x20] sm:$0xff]
    %v657 = vld [vmem:[#allocation2 + $0x28] sm:$0xff]
    %v658 = vld [vmem:[#allocation2 + $0x30] sm:$0xff]
    %v659 = vld [vmem:[#allocation2 + $0x38] sm:$0xff]
    %v660 = vld [vmem:[#allocation2 + $0x40] sm:$0xff]
    %v661 = vld [vmem:[#allocation2 + $0x48] sm:$0xff]
    %v662 = vld [vmem:[#allocation2 + $0x50] sm:$0xff]
    %v663 = vld [vmem:[#allocation2 + $0x58] sm:$0xff]
    %v664 = vld [vmem:[#allocation2 + $0x60] sm:$0xff]
    %v665 = vld [vmem:[#allocation2 + $0x68] sm:$0xff]
    %v666 = vld [vmem:[#allocation2 + $0x70] sm:$0xff]
    %v667 = vld [vmem:[#allocation2 + $0x78] sm:$0xff]
    %v668 = vld [vmem:[#allocation2 + $0x80] sm:$0xff]
    %v669 = vld [vmem:[#allocation2 + $0x88] sm:$0xff]
    %v670 = vld [vmem:[#allocation2 + $0x90] sm:$0xff]
    %v671 = vld [vmem:[#allocation2 + $0x98] sm:$0xff]
    %v672 = vld [vmem:[#allocation2 + $0xa0] sm:$0xff]
    %v673 = vld [vmem:[#allocation2 + $0xa8] sm:$0xff]
    %v674 = vld [vmem:[#allocation2 + $0xb0] sm:$0xff]
    %v675 = vld [vmem:[#allocation2 + $0xb8] sm:$0xff]
    %v676 = vld [vmem:[#allocation2 + $0xc0] sm:$0xff]
    %v677 = vld [vmem:[#allocation2 + $0xc8] sm:$0xff]
    %v678 = vld [vmem:[#allocation2 + $0xd0] sm:$0xff]
    %v679 = vld [vmem:[#allocation2 + $0xd8] sm:$0xff]
    %v680 = vld [vmem:[#allocation2 + $0xe0] sm:$0xff]
    %v681 = vld [vmem:[#allocation2 + $0xe8] sm:$0xff]
    %v682 = vld [vmem:[#allocation2 + $0xf0] sm:$0xff]
    %v683 = vld [vmem:[#allocation2 + $0xf8] sm:$0xff]
    %v684 = vld [vmem:[%s2] sm:$0x1]
    %v686 = vperm.slane %v684, 0
    %v688 = vadd.f32 %v652, %v686
    %v689 = vadd.f32 %v653, %v686
    %v690 = vadd.f32 %v654, %v686
    %v691 = vadd.f32 %v655, %v686
    %v692 = vadd.f32 %v656, %v686
    %v693 = vadd.f32 %v657, %v686
    %v694 = vadd.f32 %v658, %v686
    %v695 = vadd.f32 %v659, %v686
    %v696 = vadd.f32 %v660, %v686
    %v697 = vadd.f32 %v661, %v686
    %v698 = vadd.f32 %v662, %v686
    %v699 = vadd.f32 %v663, %v686
    %v700 = vadd.f32 %v664, %v686
    %v701 = vadd.f32 %v665, %v686
    %v702 = vadd.f32 %v666, %v686
    %v703 = vadd.f32 %v667, %v686
    %v704 = vadd.f32 %v668, %v686
    %v705 = vadd.f32 %v669, %v686
    %v706 = vadd.f32 %v670, %v686
    %v707 = vadd.f32 %v671, %v686
    %v708 = vadd.f32 %v672, %v686
    %v709 = vadd.f32 %v673, %v686
    %v710 = vadd.f32 %v674, %v686
    %v711 = vadd.f32 %v675, %v686
    %v712 = vadd.f32 %v676, %v686
    %v713 = vadd.f32 %v677, %v686
    %v714 = vadd.f32 %v678, %v686
    %v715 = vadd.f32 %v679, %v686
    %v716 = vadd.f32 %v680, %v686
    %v717 = vadd.f32 %v681, %v686
    %v718 = vadd.f32 %v682, %v686
    %v719 = vadd.f32 %v683, %v686
    %v720 = vlaneseq
    %v721 = vand.u32 %v720, 127
    %vm722 = vcmp.lt.s32.totalorder %v721, 4
    %v723 = vsel %vm722, %v688, -inf
    %v724 = vsel %vm722, %v689, -inf
    %v725 = vsel %vm722, %v690, -inf
    %v726 = vsel %vm722, %v691, -inf
    %v727 = vsel %vm722, %v692, -inf
    %v728 = vsel %vm722, %v693, -inf
    %v729 = vsel %vm722, %v694, -inf
    %v730 = vsel %vm722, %v695, -inf
    %v731 = vsel %vm722, %v696, -inf
    %v732 = vsel %vm722, %v697, -inf
    %v733 = vsel %vm722, %v698, -inf
    %v734 = vsel %vm722, %v699, -inf
    %v735 = vsel %vm722, %v700, -inf
    %v736 = vsel %vm722, %v701, -inf
    %v737 = vsel %vm722, %v702, -inf
    %v738 = vsel %vm722, %v703, -inf
    %v739 = vsel %vm722, %v704, -inf
    %v740 = vsel %vm722, %v705, -inf
    %v741 = vsel %vm722, %v706, -inf
    %v742 = vsel %vm722, %v707, -inf
    %v743 = vsel %vm722, %v708, -inf
    %v744 = vsel %vm722, %v709, -inf
    %v745 = vsel %vm722, %v710, -inf
    %v746 = vsel %vm722, %v711, -inf
    %v747 = vsel %vm722, %v712, -inf
    %v748 = vsel %vm722, %v713, -inf
    %v749 = vsel %vm722, %v714, -inf
    %v750 = vsel %vm722, %v715, -inf
    %v751 = vsel %vm722, %v716, -inf
    %v752 = vsel %vm722, %v717, -inf
    %v753 = vsel %vm722, %v718, -inf
    %v754 = vsel %vm722, %v719, -inf
    %755 = vmax.xlane.f32.xlu0 %v723
    %v756 = vpop.xlane.xlu0 %755
    %757 = vmax.xlane.f32.xlu0 %v724
    %v758 = vpop.xlane.xlu0 %757
    %759 = vmax.xlane.f32.xlu0 %v725
    %v760 = vpop.xlane.xlu0 %759
    %761 = vmax.xlane.f32.xlu0 %v726
    %v762 = vpop.xlane.xlu0 %761
    %763 = vmax.xlane.f32.xlu0 %v727
    %v764 = vpop.xlane.xlu0 %763
    %765 = vmax.xlane.f32.xlu0 %v728
    %v766 = vpop.xlane.xlu0 %765
    %767 = vmax.xlane.f32.xlu0 %v729
    %v768 = vpop.xlane.xlu0 %767
    %769 = vmax.xlane.f32.xlu0 %v730
    %v770 = vpop.xlane.xlu0 %769
    %771 = vmax.xlane.f32.xlu0 %v731
    %v772 = vpop.xlane.xlu0 %771
    %773 = vmax.xlane.f32.xlu0 %v732
    %v774 = vpop.xlane.xlu0 %773
    %775 = vmax.xlane.f32.xlu0 %v733
    %v776 = vpop.xlane.xlu0 %775
    %777 = vmax.xlane.f32.xlu0 %v734
    %v778 = vpop.xlane.xlu0 %777
    %779 = vmax.xlane.f32.xlu0 %v735
    %v780 = vpop.xlane.xlu0 %779
    %781 = vmax.xlane.f32.xlu0 %v736
    %v782 = vpop.xlane.xlu0 %781
    %783 = vmax.xlane.f32.xlu0 %v737
    %v784 = vpop.xlane.xlu0 %783
    %785 = vmax.xlane.f32.xlu0 %v738
    %v786 = vpop.xlane.xlu0 %785
    %787 = vmax.xlane.f32.xlu0 %v739
    %v788 = vpop.xlane.xlu0 %787
    %789 = vmax.xlane.f32.xlu0 %v740
    %v790 = vpop.xlane.xlu0 %789
    %791 = vmax.xlane.f32.xlu0 %v741
    %v792 = vpop.xlane.xlu0 %791
    %793 = vmax.xlane.f32.xlu0 %v742
    %v794 = vpop.xlane.xlu0 %793
    %795 = vmax.xlane.f32.xlu0 %v743
    %v796 = vpop.xlane.xlu0 %795
    %797 = vmax.xlane.f32.xlu0 %v744
    %v798 = vpop.xlane.xlu0 %797
    %799 = vmax.xlane.f32.xlu0 %v745
    %v800 = vpop.xlane.xlu0 %799
    %801 = vmax.xlane.f32.xlu0 %v746
    %v802 = vpop.xlane.xlu0 %801
    %803 = vmax.xlane.f32.xlu0 %v747
    %v804 = vpop.xlane.xlu0 %803
    %805 = vmax.xlane.f32.xlu0 %v748
    %v806 = vpop.xlane.xlu0 %805
    %807 = vmax.xlane.f32.xlu0 %v749
    %v808 = vpop.xlane.xlu0 %807
    %809 = vmax.xlane.f32.xlu0 %v750
    %v810 = vpop.xlane.xlu0 %809
    %811 = vmax.xlane.f32.xlu0 %v751
    %v812 = vpop.xlane.xlu0 %811
    %813 = vmax.xlane.f32.xlu0 %v752
    %v814 = vpop.xlane.xlu0 %813
    %815 = vmax.xlane.f32.xlu0 %v753
    %v816 = vpop.xlane.xlu0 %815
    %817 = vmax.xlane.f32.xlu0 %v754
    %v818 = vpop.xlane.xlu0 %817
    %v819 = vsub.f32 %v723, %v756
    %v820 = vsub.f32 %v724, %v758
    %v821 = vsub.f32 %v725, %v760
    %v822 = vsub.f32 %v726, %v762
    %v823 = vsub.f32 %v727, %v764
    %v824 = vsub.f32 %v728, %v766
    %v825 = vsub.f32 %v729, %v768
    %v826 = vsub.f32 %v730, %v770
    %v827 = vsub.f32 %v731, %v772
    %v828 = vsub.f32 %v732, %v774
    %v829 = vsub.f32 %v733, %v776
    %v830 = vsub.f32 %v734, %v778
    %v831 = vsub.f32 %v735, %v780
    %v832 = vsub.f32 %v736, %v782
    %v833 = vsub.f32 %v737, %v784
    %v834 = vsub.f32 %v738, %v786
    %v835 = vsub.f32 %v739, %v788
    %v836 = vsub.f32 %v740, %v790
    %v837 = vsub.f32 %v741, %v792
    %v838 = vsub.f32 %v742, %v794
    %v839 = vsub.f32 %v743, %v796
    %v840 = vsub.f32 %v744, %v798
    %v841 = vsub.f32 %v745, %v800
    %v842 = vsub.f32 %v746, %v802
    %v843 = vsub.f32 %v747, %v804
    %v844 = vsub.f32 %v748, %v806
    %v845 = vsub.f32 %v749, %v808
    %v846 = vsub.f32 %v750, %v810
    %v847 = vsub.f32 %v751, %v812
    %v848 = vsub.f32 %v752, %v814
    %v849 = vsub.f32 %v753, %v816
    %v850 = vsub.f32 %v754, %v818
    %v851 = vmul.f32 %v819, 1.442695
    %v852 = vpow.pop %v851
    %v853 = vmul.f32 %v820, 1.442695
    %v854 = vpow.pop %v853
    %v855 = vmul.f32 %v821, 1.442695
    %v856 = vpow.pop %v855
    %v857 = vmul.f32 %v822, 1.442695
    %v858 = vpow.pop %v857
    %v859 = vmul.f32 %v823, 1.442695
    %v860 = vpow.pop %v859
    %v861 = vmul.f32 %v824, 1.442695
    %v862 = vpow.pop %v861
    %v863 = vmul.f32 %v825, 1.442695
    %v864 = vpow.pop %v863
    %v865 = vmul.f32 %v826, 1.442695
    %v866 = vpow.pop %v865
    %v867 = vmul.f32 %v827, 1.442695
    %v868 = vpow.pop %v867
    %v869 = vmul.f32 %v828, 1.442695
    %v870 = vpow.pop %v869
    %v871 = vmul.f32 %v829, 1.442695
    %v872 = vpow.pop %v871
    %v873 = vmul.f32 %v830, 1.442695
    %v874 = vpow.pop %v873
    %v875 = vmul.f32 %v831, 1.442695
    %v876 = vpow.pop %v875
    %v877 = vmul.f32 %v832, 1.442695
    %v878 = vpow.pop %v877
    %v879 = vmul.f32 %v833, 1.442695
    %v880 = vpow.pop %v879
    %v881 = vmul.f32 %v834, 1.442695
    %v882 = vpow.pop %v881
    %v883 = vmul.f32 %v835, 1.442695
    %v884 = vpow.pop %v883
    %v885 = vmul.f32 %v836, 1.442695
    %v886 = vpow.pop %v885
    %v887 = vmul.f32 %v837, 1.442695
    %v888 = vpow.pop %v887
    %v889 = vmul.f32 %v838, 1.442695
    %v890 = vpow.pop %v889
    %v891 = vmul.f32 %v839, 1.442695
    %v892 = vpow.pop %v891
    %v893 = vmul.f32 %v840, 1.442695
    %v894 = vpow.pop %v893
    %v895 = vmul.f32 %v841, 1.442695
    %v896 = vpow.pop %v895
    %v897 = vmul.f32 %v842, 1.442695
    %v898 = vpow.pop %v897
    %v899 = vmul.f32 %v843, 1.442695
    %v900 = vpow.pop %v899
    %v901 = vmul.f32 %v844, 1.442695
    %v902 = vpow.pop %v901
    %v903 = vmul.f32 %v845, 1.442695
    %v904 = vpow.pop %v903
    %v905 = vmul.f32 %v846, 1.442695
    %v906 = vpow.pop %v905
    %v907 = vmul.f32 %v847, 1.442695
    %v908 = vpow.pop %v907
    %v909 = vmul.f32 %v848, 1.442695
    %v910 = vpow.pop %v909
    %v911 = vmul.f32 %v849, 1.442695
    %v912 = vpow.pop %v911
    %v913 = vmul.f32 %v850, 1.442695
    %v914 = vpow.pop %v913
    %915 = vadd.xlane.f32.xlu0 %v852
    %v916 = vpop.xlane.xlu0 %915
    %917 = vadd.xlane.f32.xlu0 %v854
    %v918 = vpop.xlane.xlu0 %917
    %919 = vadd.xlane.f32.xlu0 %v856
    %v920 = vpop.xlane.xlu0 %919
    %921 = vadd.xlane.f32.xlu0 %v858
    %v922 = vpop.xlane.xlu0 %921
    %923 = vadd.xlane.f32.xlu0 %v860
    %v924 = vpop.xlane.xlu0 %923
    %925 = vadd.xlane.f32.xlu0 %v862
    %v926 = vpop.xlane.xlu0 %925
    %927 = vadd.xlane.f32.xlu0 %v864
    %v928 = vpop.xlane.xlu0 %927
    %929 = vadd.xlane.f32.xlu0 %v866
    %v930 = vpop.xlane.xlu0 %929
    %931 = vadd.xlane.f32.xlu0 %v868
    %v932 = vpop.xlane.xlu0 %931
    %933 = vadd.xlane.f32.xlu0 %v870
    %v934 = vpop.xlane.xlu0 %933
    %935 = vadd.xlane.f32.xlu0 %v872
    %v936 = vpop.xlane.xlu0 %935
    %937 = vadd.xlane.f32.xlu0 %v874
    %v938 = vpop.xlane.xlu0 %937
    %939 = vadd.xlane.f32.xlu0 %v876
    %v940 = vpop.xlane.xlu0 %939
    %941 = vadd.xlane.f32.xlu0 %v878
    %v942 = vpop.xlane.xlu0 %941
    %943 = vadd.xlane.f32.xlu0 %v880
    %v944 = vpop.xlane.xlu0 %943
    %945 = vadd.xlane.f32.xlu0 %v882
    %v946 = vpop.xlane.xlu0 %945
    %947 = vadd.xlane.f32.xlu0 %v884
    %v948 = vpop.xlane.xlu0 %947
    %949 = vadd.xlane.f32.xlu0 %v886
    %v950 = vpop.xlane.xlu0 %949
    %951 = vadd.xlane.f32.xlu0 %v888
    %v952 = vpop.xlane.xlu0 %951
    %953 = vadd.xlane.f32.xlu0 %v890
    %v954 = vpop.xlane.xlu0 %953
    %955 = vadd.xlane.f32.xlu0 %v892
    %v956 = vpop.xlane.xlu0 %955
    %957 = vadd.xlane.f32.xlu0 %v894
    %v958 = vpop.xlane.xlu0 %957
    %959 = vadd.xlane.f32.xlu0 %v896
    %v960 = vpop.xlane.xlu0 %959
    %961 = vadd.xlane.f32.xlu0 %v898
    %v962 = vpop.xlane.xlu0 %961
    %963 = vadd.xlane.f32.xlu0 %v900
    %v964 = vpop.xlane.xlu0 %963
    %965 = vadd.xlane.f32.xlu0 %v902
    %v966 = vpop.xlane.xlu0 %965
    %967 = vadd.xlane.f32.xlu0 %v904
    %v968 = vpop.xlane.xlu0 %967
    %969 = vadd.xlane.f32.xlu0 %v906
    %v970 = vpop.xlane.xlu0 %969
    %971 = vadd.xlane.f32.xlu0 %v908
    %v972 = vpop.xlane.xlu0 %971
    %973 = vadd.xlane.f32.xlu0 %v910
    %v974 = vpop.xlane.xlu0 %973
    %975 = vadd.xlane.f32.xlu0 %v912
    %v976 = vpop.xlane.xlu0 %975
    %977 = vadd.xlane.f32.xlu0 %v914
    %v978 = vpop.xlane.xlu0 %977
    %v979 = vlog2.pop %v916
    %v980 = vmul.f32 %v979, 0.6931472
    %v981 = vlog2.pop %v918
    %v982 = vmul.f32 %v981, 0.6931472
    %v983 = vlog2.pop %v920
    %v984 = vmul.f32 %v983, 0.6931472
    %v985 = vlog2.pop %v922
    %v986 = vmul.f32 %v985, 0.6931472
    %v987 = vlog2.pop %v924
    %v988 = vmul.f32 %v987, 0.6931472
    %v989 = vlog2.pop %v926
    %v990 = vmul.f32 %v989, 0.6931472
    %v991 = vlog2.pop %v928
    %v992 = vmul.f32 %v991, 0.6931472
    %v993 = vlog2.pop %v930
    %v994 = vmul.f32 %v993, 0.6931472
    %v995 = vlog2.pop %v932
    %v996 = vmul.f32 %v995, 0.6931472
    %v997 = vlog2.pop %v934
    %v998 = vmul.f32 %v997, 0.6931472
    %v999 = vlog2.pop %v936
    %v1000 = vmul.f32 %v999, 0.6931472
    %v1001 = vlog2.pop %v938
    %v1002 = vmul.f32 %v1001, 0.6931472
    %v1003 = vlog2.pop %v940
    %v1004 = vmul.f32 %v1003, 0.6931472
    %v1005 = vlog2.pop %v942
    %v1006 = vmul.f32 %v1005, 0.6931472
    %v1007 = vlog2.pop %v944
    %v1008 = vmul.f32 %v1007, 0.6931472
    %v1009 = vlog2.pop %v946
    %v1010 = vmul.f32 %v1009, 0.6931472
    %v1011 = vlog2.pop %v948
    %v1012 = vmul.f32 %v1011, 0.6931472
    %v1013 = vlog2.pop %v950
    %v1014 = vmul.f32 %v1013, 0.6931472
    %v1015 = vlog2.pop %v952
    %v1016 = vmul.f32 %v1015, 0.6931472
    %v1017 = vlog2.pop %v954
    %v1018 = vmul.f32 %v1017, 0.6931472
    %v1019 = vlog2.pop %v956
    %v1020 = vmul.f32 %v1019, 0.6931472
    %v1021 = vlog2.pop %v958
    %v1022 = vmul.f32 %v1021, 0.6931472
    %v1023 = vlog2.pop %v960
    %v1024 = vmul.f32 %v1023, 0.6931472
    %v1025 = vlog2.pop %v962
    %v1026 = vmul.f32 %v1025, 0.6931472
    %v1027 = vlog2.pop %v964
    %v1028 = vmul.f32 %v1027, 0.6931472
    %v1029 = vlog2.pop %v966
    %v1030 = vmul.f32 %v1029, 0.6931472
    %v1031 = vlog2.pop %v968
    %v1032 = vmul.f32 %v1031, 0.6931472
    %v1033 = vlog2.pop %v970
    %v1034 = vmul.f32 %v1033, 0.6931472
    %v1035 = vlog2.pop %v972
    %v1036 = vmul.f32 %v1035, 0.6931472
    %v1037 = vlog2.pop %v974
    %v1038 = vmul.f32 %v1037, 0.6931472
    %v1039 = vlog2.pop %v976
    %v1040 = vmul.f32 %v1039, 0.6931472
    %v1041 = vlog2.pop %v978
    %v1042 = vmul.f32 %v1041, 0.6931472
    %v1043 = vsub.f32 %v819, %v980
    %v1044 = vsub.f32 %v820, %v982
    %v1045 = vsub.f32 %v821, %v984
    %v1046 = vsub.f32 %v822, %v986
    %v1047 = vsub.f32 %v823, %v988
    %v1048 = vsub.f32 %v824, %v990
    %v1049 = vsub.f32 %v825, %v992
    %v1050 = vsub.f32 %v826, %v994
    %v1051 = vsub.f32 %v827, %v996
    %v1052 = vsub.f32 %v828, %v998
    %v1053 = vsub.f32 %v829, %v1000
    %v1054 = vsub.f32 %v830, %v1002
    %v1055 = vsub.f32 %v831, %v1004
    %v1056 = vsub.f32 %v832, %v1006
    %v1057 = vsub.f32 %v833, %v1008
    %v1058 = vsub.f32 %v834, %v1010
    %v1059 = vsub.f32 %v835, %v1012
    %v1060 = vsub.f32 %v836, %v1014
    %v1061 = vsub.f32 %v837, %v1016
    %v1062 = vsub.f32 %v838, %v1018
    %v1063 = vsub.f32 %v839, %v1020
    %v1064 = vsub.f32 %v840, %v1022
    %v1065 = vsub.f32 %v841, %v1024
    %v1066 = vsub.f32 %v842, %v1026
    %v1067 = vsub.f32 %v843, %v1028
    %v1068 = vsub.f32 %v844, %v1030
    %v1069 = vsub.f32 %v845, %v1032
    %v1070 = vsub.f32 %v846, %v1034
    %v1071 = vsub.f32 %v847, %v1036
    %v1072 = vsub.f32 %v848, %v1038
    %v1073 = vsub.f32 %v849, %v1040
    %v1074 = vsub.f32 %v850, %v1042
    %v1075 = vsel %vm722, %v1043, 0.0
    %v1076 = vsel %vm722, %v1044, 0.0
    %v1077 = vsel %vm722, %v1045, 0.0
    %v1078 = vsel %vm722, %v1046, 0.0
    %v1079 = vsel %vm722, %v1047, 0.0
    %v1080 = vsel %vm722, %v1048, 0.0
    %v1081 = vsel %vm722, %v1049, 0.0
    %v1082 = vsel %vm722, %v1050, 0.0
    %v1083 = vsel %vm722, %v1051, 0.0
    %v1084 = vsel %vm722, %v1052, 0.0
    %v1085 = vsel %vm722, %v1053, 0.0
    %v1086 = vsel %vm722, %v1054, 0.0
    %v1087 = vsel %vm722, %v1055, 0.0
    %v1088 = vsel %vm722, %v1056, 0.0
    %v1089 = vsel %vm722, %v1057, 0.0
    %v1090 = vsel %vm722, %v1058, 0.0
    %v1091 = vsel %vm722, %v1059, 0.0
    %v1092 = vsel %vm722, %v1060, 0.0
    %v1093 = vsel %vm722, %v1061, 0.0
    %v1094 = vsel %vm722, %v1062, 0.0
    %v1095 = vsel %vm722, %v1063, 0.0
    %v1096 = vsel %vm722, %v1064, 0.0
    %v1097 = vsel %vm722, %v1065, 0.0
    %v1098 = vsel %vm722, %v1066, 0.0
    %v1099 = vsel %vm722, %v1067, 0.0
    %v1100 = vsel %vm722, %v1068, 0.0
    %v1101 = vsel %vm722, %v1069, 0.0
    %v1102 = vsel %vm722, %v1070, 0.0
    %v1103 = vsel %vm722, %v1071, 0.0
    %v1104 = vsel %vm722, %v1072, 0.0
    %v1105 = vsel %vm722, %v1073, 0.0
    %v1106 = vsel %vm722, %v1074, 0.0
    %1107 = vst [vmem:[%s3] sm:$0xff] %v1075
    %1108 = vst [vmem:[%s3 + $0x8] sm:$0xff] %v1076
    %1109 = vst [vmem:[%s3 + $0x10] sm:$0xff] %v1077
    %1110 = vst [vmem:[%s3 + $0x18] sm:$0xff] %v1078
    %1111 = vst [vmem:[%s3 + $0x20] sm:$0xff] %v1079
    %1112 = vst [vmem:[%s3 + $0x28] sm:$0xff] %v1080
    %1113 = vst [vmem:[%s3 + $0x30] sm:$0xff] %v1081
    %1114 = vst [vmem:[%s3 + $0x38] sm:$0xff] %v1082
    %1115 = vst [vmem:[%s3 + $0x40] sm:$0xff] %v1083
    %1116 = vst [vmem:[%s3 + $0x48] sm:$0xff] %v1084
    %1117 = vst [vmem:[%s3 + $0x50] sm:$0xff] %v1085
    %1118 = vst [vmem:[%s3 + $0x58] sm:$0xff] %v1086
    %1119 = vst [vmem:[%s3 + $0x60] sm:$0xff] %v1087
    %1120 = vst [vmem:[%s3 + $0x68] sm:$0xff] %v1088
    %1121 = vst [vmem:[%s3 + $0x70] sm:$0xff] %v1089
    %1122 = vst [vmem:[%s3 + $0x78] sm:$0xff] %v1090
    %1123 = vst [vmem:[%s3 + $0x80] sm:$0xff] %v1091
    %1124 = vst [vmem:[%s3 + $0x88] sm:$0xff] %v1092
    %1125 = vst [vmem:[%s3 + $0x90] sm:$0xff] %v1093
    %1126 = vst [vmem:[%s3 + $0x98] sm:$0xff] %v1094
    %1127 = vst [vmem:[%s3 + $0xa0] sm:$0xff] %v1095
    %1128 = vst [vmem:[%s3 + $0xa8] sm:$0xff] %v1096
    %1129 = vst [vmem:[%s3 + $0xb0] sm:$0xff] %v1097
    %1130 = vst [vmem:[%s3 + $0xb8] sm:$0xff] %v1098
    %1131 = vst [vmem:[%s3 + $0xc0] sm:$0xff] %v1099
    %1132 = vst [vmem:[%s3 + $0xc8] sm:$0xff] %v1100
    %1133 = vst [vmem:[%s3 + $0xd0] sm:$0xff] %v1101
    %1134 = vst [vmem:[%s3 + $0xd8] sm:$0xff] %v1102
    %1135 = vst [vmem:[%s3 + $0xe0] sm:$0xff] %v1103
    %1136 = vst [vmem:[%s3 + $0xe8] sm:$0xff] %v1104
    %1137 = vst [vmem:[%s3 + $0xf0] sm:$0xff] %v1105
    %1138 = vst [vmem:[%s3 + $0xf8] sm:$0xff] %v1106
  $region21: #{linear_snowball_forward.11} parent=0 // pred_fallthru
    _
  // Predicated region
  $region22: #{linear_snowball_forward.11} parent=0 // pred_check
    _
  $region23: #{linear_snowball_forward.11} parent=0 // pred_check_branch
    %1140 = sbr.rel (0) target = $region25
  $region24: #{linear_snowball_forward.11} parent=0 // pred_region
    _
  $region25: #{linear_snowball_forward.11} parent=0 // pred_fallthru
    _
  // Predicated region
  $region26: #{linear_snowball_forward.11} parent=0 // pred_check
    _
  $region27: #{linear_snowball_forward.11} parent=0 // pred_check_branch
    %1142 = sbr.rel (0) target = $region29
  $region28: #{linear_snowball_forward.11} parent=0 // pred_region
    _
  $region29: #{linear_snowball_forward.11} parent=0 // pred_fallthru
    _

</llo_original>
